<compile_context>
chip_gen: v7x
topology: tpu7x:2x2x1
jax: 0.10.0
libtpu: 0.0.40
codegen_flags: <defaults>
</compile_context>

<pallas_src>
import math
import functools

import jax
import jax.numpy as jnp
from jax.experimental import pallas as pl
from jax.experimental.pallas import tpu as pltpu

# Preferred tile sizes for large shapes (full-extent / divisor blocks are used for small dims).
TM, TN, TK = 512, 1024, 1024
_GELU_C = math.sqrt(2.0 / math.pi)
_LN_EPS = 1e-5
RESIDUAL_DTYPE = jnp.bfloat16   # bf16 residual stream (adds/LN stay f32 inside kernels)


# ----------------------------------------------------------------------------- helpers

def _vmem_limit_bytes():
    """~75% of this generation's physical VMEM (48 MiB on v7x, 96 MiB on v5e/v6e)."""
    cap = None
    try:
        cap = getattr(pltpu.get_tpu_info(), "vmem_capacity_bytes", None)
    except Exception:
        cap = None
    if not cap:
        cap = 64 * 1024 * 1024
    return min(int(cap * 3 // 4), 112 * 1024 * 1024)


_VMEM_LIMIT = _vmem_limit_bytes()


def _cparams(dimension_semantics):
    return pltpu.CompilerParams(
        dimension_semantics=dimension_semantics,
        vmem_limit_bytes=_VMEM_LIMIT,
    )


def _round_up(x, m):
    return ((x + m - 1) // m) * m


def _pick_tile(dim, pref, align):
    """Largest divisor of `dim` that is <= pref and a multiple of `align`; full extent otherwise.

    Never requires padding the array (so activations are never padded/sliced per call).
    """
    if dim <= pref:
        return dim
    t = (pref // align) * align
    while t >= align:
        if dim % t == 0:
            return t
        t -= align
    # TODO(synk): for pathological dims, pad weights/activations once outside instead.
    return dim


def _gelu_new(y):
    # GPT-2 "gelu_new" (tanh approximation), computed in f32.
    return 0.5 * y * (1.0 + jnp.tanh(_GELU_C * (y + 0.044715 * (y * y * y))))


def _as_dtype(a, dt):
    return a if a.dtype == dt else a.astype(dt)


# ----------------------------------------------------------------------------- kernels

def _ln_matmul_kernel(x_ref, g_ref, b_ref, w_ref, bias_ref, o_ref, xn_ref, *, activation):
    """Fused LayerNorm(x) @ W + bias (+ optional gelu_new).

    Grid = (M/tm, N/tn).  LayerNorm (and the bf16 cast) is computed only at j == 0 into a VMEM
    scratch and reused for every N tile of the same row tile (j is the inner, "arbitrary" axis).
    """
    j = pl.program_id(1)

    @pl.when(j == 0)
    def _():
        x = x_ref[...].astype(jnp.float32)                            # (tm, K)
        mu = jnp.mean(x, axis=-1, keepdims=True)
        xc = x - mu
        var = jnp.mean(xc * xc, axis=-1, keepdims=True)
        xn = xc * jax.lax.rsqrt(var + _LN_EPS)
        xn = xn * g_ref[...] + b_ref[...]                             # f32 LN
        xn_ref[...] = xn.astype(jnp.bfloat16)

    y = jnp.dot(xn_ref[...], w_ref[...], preferred_element_type=jnp.float32)  # bf16 MXU, f32 acc
    y = y + bias_ref[...]
    if activation == "gelu_new":
        y = _gelu_new(y)
    o_ref[...] = y.astype(o_ref.dtype)


def _matmul_kernel(x_ref, w_ref, bias_ref, *refs, has_residual):
    """Tiled x @ W accumulated in f32 scratch; bias (+ residual) added only at k == last."""
    if has_residual:
        r_ref, o_ref, acc_ref = refs
    else:
        o_ref, acc_ref = refs
    k = pl.program_id(2)

    @pl.when(k == 0)
    def _():
        acc_ref[...] = jnp.zeros_like(acc_ref)

    acc_ref[...] += jnp.dot(x_ref[...], w_ref[...], preferred_element_type=jnp.float32)

    @pl.when(k == pl.num_programs(2) - 1)
    def _():
        y = acc_ref[...] + bias_ref[...]
        if has_residual:
            y = y + r_ref[...].astype(jnp.float32)
        o_ref[...] = y.astype(o_ref.dtype)


def _causal_attn_kernel(qkv_ref, o_ref, *, n_heads, d_head, scale):
    """One batch element of multi-head causal attention.

    The head split of the fused QKV projection and the head merge of the output are done with
    static lane slices inside the kernel, so no XLA reshape/transpose copies are needed.
    Padded sequence positions sit at the end and are excluded from every real row by the causal
    mask (they are never read afterwards either).
    """
    qkv = qkv_ref[0]                                                  # (S, 3D) bf16
    S = qkv.shape[0]
    D = n_heads * d_head

    row = jax.lax.broadcasted_iota(jnp.int32, (S, S), 0)
    col = jax.lax.broadcasted_iota(jnp.int32, (S, S), 1)
    causal = col <= row

    outs = []
    for h in range(n_heads):                                          # static unroll over heads
        # Fold 1/sqrt(Dh) into q: O(S*Dh) multiplies instead of O(S^2).
        q = (qkv[:, h * d_head:(h + 1) * d_head].astype(jnp.float32) * scale).astype(jnp.bfloat16)
        k = qkv[:, D + h * d_head: D + (h + 1) * d_head]
        v = qkv[:, 2 * D + h * d_head: 2 * D + (h + 1) * d_head]
        s = jax.lax.dot_general(q, k, (((1,), (1,)), ((), ())),
                                preferred_element_type=jnp.float32)   # (S, S) f32
        s = jnp.where(causal, s, -1e30)                               # mask in f32 only
        m = jnp.max(s, axis=-1, keepdims=True)
        p = jnp.exp(s - m)
        denom = jnp.sum(p, axis=-1, keepdims=True)
        p = p * pl.reciprocal(denom, approx=True)                     # EUP reciprocal
        o = jnp.dot(p.astype(jnp.bfloat16), v, preferred_element_type=jnp.float32)
        outs.append(o)
    o_ref[0] = jnp.concatenate(outs, axis=-1).astype(o_ref.dtype)     # lane-dense single store
    # TODO(synk): for long sequences convert to flash-style online softmax over KV tiles.


def _tok_conv_kernel(xp_ref, w_ref, o_ref):
    """Conv1d(C -> D, kernel=3) as a single (T, 3C) @ (3C, D) matmul on an in-VMEM im2col tile."""
    T = o_ref.shape[1]
    xp = xp_ref[0]                                                    # (T+2, C) bf16
    xi = jnp.concatenate([xp[0:T, :], xp[1:T + 1, :], xp[2:T + 2, :]], axis=-1)  # (T, 3C)
    o_ref[0] = jnp.dot(xi, w_ref[...], preferred_element_type=jnp.float32).astype(o_ref.dtype)


# ----------------------------------------------------------------------------- wrappers

def ln_matmul(x, gamma, beta, w, bias, *, activation=None, out_dtype=jnp.float32):
    """LayerNorm(x) @ w + bias (+ gelu_new). x: (M, K), w: (K, N) bf16. No activation padding."""
    M, K = x.shape
    N = w.shape[1]
    tm = _pick_tile(M, TM, 8)
    tn = _pick_tile(N, TN, 128)

    g2 = _as_dtype(gamma, jnp.float32).reshape(1, K)
    b2 = _as_dtype(beta, jnp.float32).reshape(1, K)
    bias2 = _as_dtype(bias, jnp.float32).reshape(1, N)

    kern = functools.partial(_ln_matmul_kernel, activation=activation)
    return pl.pallas_call(
        kern,
        grid=(M // tm, N // tn),
        in_specs=[
            pl.BlockSpec((tm, K), lambda i, j: (i, 0)),
            pl.BlockSpec((1, K), lambda i, j: (0, 0)),
            pl.BlockSpec((1, K), lambda i, j: (0, 0)),
            pl.BlockSpec((K, tn), lambda i, j: (0, j)),
            pl.BlockSpec((1, tn), lambda i, j: (0, j)),
        ],
        out_specs=pl.BlockSpec((tm, tn), lambda i, j: (i, j)),
        out_shape=jax.ShapeDtypeStruct((M, N), out_dtype),
        scratch_shapes=[pltpu.VMEM((tm, K), jnp.bfloat16)],
        # N axis is "arbitrary" so the hoisted-LN scratch reuse is safe under megacore sharding.
        compiler_params=_cparams(("parallel", "arbitrary")),
    )(_as_dtype(x, RESIDUAL_DTYPE) if x.dtype != jnp.bfloat16 else x, g2, b2,
      _as_dtype(w, jnp.bfloat16), bias2)


def matmul_bias(x, w, bias, residual=None, *, out_dtype=RESIDUAL_DTYPE):
    """Tiled x @ w + bias (+ residual). bf16 MXU operands, f32 accumulation. No activation padding."""
    M, K = x.shape
    N = w.shape[1]
    tm = _pick_tile(M, TM, 8)
    tn = _pick_tile(N, TN, 128)
    tk = _pick_tile(K, TK, 128)

    bias2 = _as_dtype(bias, jnp.float32).reshape(1, N)
    has_residual = residual is not None
    kern = functools.partial(_matmul_kernel, has_residual=has_residual)

    in_specs = [
        pl.BlockSpec((tm, tk), lambda i, j, k: (i, k)),
        pl.BlockSpec((tk, tn), lambda i, j, k: (k, j)),
        pl.BlockSpec((1, tn), lambda i, j, k: (0, j)),
    ]
    args = [_as_dtype(x, jnp.bfloat16), _as_dtype(w, jnp.bfloat16), bias2]
    if has_residual:
        in_specs.append(pl.BlockSpec((tm, tn), lambda i, j, k: (i, j)))
        args.append(residual)

    return pl.pallas_call(
        kern,
        grid=(M // tm, N // tn, K // tk),
        in_specs=in_specs,
        out_specs=pl.BlockSpec((tm, tn), lambda i, j, k: (i, j)),
        out_shape=jax.ShapeDtypeStruct((M, N), out_dtype),
        scratch_shapes=[pltpu.VMEM((tm, tn), jnp.float32)],
        compiler_params=_cparams(("parallel", "parallel", "arbitrary")),
    )(*args)


def causal_attention(qkv, *, n_heads, d_head, scale):
    """qkv: (B, S, 3*D) bf16 (fused QKV projection output). Returns (B, S, D) bf16."""
    B, S, threeD = qkv.shape
    D = n_heads * d_head
    kern = functools.partial(_causal_attn_kernel, n_heads=n_heads, d_head=d_head, scale=scale)
    return pl.pallas_call(
        kern,
        grid=(B,),
        in_specs=[pl.BlockSpec((1, S, threeD), lambda b: (b, 0, 0))],
        out_specs=pl.BlockSpec((1, S, D), lambda b: (b, 0, 0)),
        out_shape=jax.ShapeDtypeStruct((B, S, D), jnp.bfloat16),
        compiler_params=_cparams(("parallel",)),
    )(qkv)


def token_embedding(x, tok_w):
    """Conv1d(C -> D, kernel=3, padding=1, circular, bias=False), as in the standard TokenEmbedding.

    TODO(synk): verify padding_mode='circular' against the (not provided) TokenEmbedding class; the
    canonical time-series TokenEmbedding uses circular padding and no bias.
    """
    B, T, C = x.shape
    D = tok_w.shape[0]
    # circular pad of 1 on each side along time
    xp = jnp.concatenate([x[:, -1:, :], x, x[:, :1, :]], axis=1)      # (B, T+2, C)
    # Conv1d weight (out=D, in=C, k=3) -> im2col weight (3C, D): w[k*C + c, d] = tok_w[d, c, k]
    w = jnp.transpose(tok_w, (2, 1, 0)).reshape(3 * C, D).astype(jnp.bfloat16)
    return pl.pallas_call(
        _tok_conv_kernel,
        grid=(B,),
        in_specs=[pl.BlockSpec((1, T + 2, C), lambda b: (b, 0, 0)),
                  pl.BlockSpec((3 * C, D), lambda b: (0, 0))],
        out_specs=pl.BlockSpec((1, T, D), lambda b: (b, 0, 0)),
        out_shape=jax.ShapeDtypeStruct((B, T, D), jnp.float32),
        compiler_params=_cparams(("parallel",)),
    )(xp.astype(jnp.bfloat16), w)


# ----------------------------------------------------------------------------- forward

def _prepare_params(params):
    """Cast weights once (bf16 MXU operands, f32 biases/LN params) outside the per-call wrappers."""
    p = dict(params)
    layers = []
    for lp in params["layers"]:
        layers.append(dict(
            ln1_g=lp["ln1_g"].astype(jnp.float32), ln1_b=lp["ln1_b"].astype(jnp.float32),
            w_attn=lp["w_attn"].astype(jnp.bfloat16), b_attn=lp["b_attn"].astype(jnp.float32),
            w_proj=lp["w_proj"].astype(jnp.bfloat16), b_proj=lp["b_proj"].astype(jnp.float32),
            ln2_g=lp["ln2_g"].astype(jnp.float32), ln2_b=lp["ln2_b"].astype(jnp.float32),
            w_fc=lp["w_fc"].astype(jnp.bfloat16), b_fc=lp["b_fc"].astype(jnp.float32),
            w_mproj=lp["w_mproj"].astype(jnp.bfloat16), b_mproj=lp["b_mproj"].astype(jnp.float32),
        ))
    p["layers"] = layers
    return p


def gpt2fcls_forward_ts(x, params, *, n_heads):
    """TS-mode forward of GPT2FCLS (reduce_ratio=1, eval mode -> all dropout is identity)."""
    # TODO(synk): conv_reduce branch (reduce_ratio != 1) not exercised with default reduce_ratio=1.
    params = _prepare_params(params)
    B, T, C = x.shape
    D = params["wpe"].shape[-1]
    H = n_heads
    Dh = D // H
    scale = 1.0 / math.sqrt(Dh)
    S = T + 2                                    # start token + sequence + stop token
    S_pad = _round_up(S, 8)                      # pad the sequence axis ONCE (sublane alignment)

    # --- TokenEmbedding (Conv1d) ---
    tok = token_embedding(x, params["tok_w"])                         # (B, T, D) f32

    # --- start / stop tokens + positional embeddings ---
    h = jnp.concatenate([jnp.broadcast_to(params["start_token"], (B, 1, D)),
                         tok,
                         jnp.broadcast_to(params["stop_token"], (B, 1, D))], axis=1)
    h = h + params["wpe"][:S][None, :, :]
    # Pad sequence to a sublane multiple once; padded rows stay zero and are causally masked out.
    h = jnp.pad(h, ((0, 0), (0, S_pad - S), (0, 0)))
    h2 = h.reshape(B * S_pad, D).astype(RESIDUAL_DTYPE)               # bf16 residual stream

    for lp in params["layers"]:
        # ln_1 fused with the QKV projection; head split happens inside the attention kernel.
        qkv = ln_matmul(h2, lp["ln1_g"], lp["ln1_b"], lp["w_attn"], lp["b_attn"],
                        out_dtype=jnp.bfloat16)                       # (B*S_pad, 3D)
        o = causal_attention(qkv.reshape(B, S_pad, 3 * D),
                             n_heads=H, d_head=Dh, scale=scale)       # (B, S_pad, D) bf16
        # attn out-projection + residual add fused
        h2 = matmul_bias(o.reshape(B * S_pad, D), lp["w_proj"], lp["b_proj"],
                         residual=h2, out_dtype=RESIDUAL_DTYPE)
        # ln_2 fused with MLP fc + gelu_new
        m = ln_matmul(h2, lp["ln2_g"], lp["ln2_b"], lp["w_fc"], lp["b_fc"],
                      activation="gelu_new", out_dtype=jnp.bfloat16)
        # MLP out-projection + residual add fused
        h2 = matmul_bias(m, lp["w_mproj"], lp["b_mproj"],
                         residual=h2, out_dtype=RESIDUAL_DTYPE)

    # Final LayerNorm + classification head fused; only the last REAL token (index S-1) is needed.
    last = h2.reshape(B, S_pad, D)[:, S - 1]                          # (B, D)
    Bp = max(8, _round_up(B, 8))                                      # full sublane tile for head
    last = jnp.pad(last, ((0, Bp - B), (0, 0)))
    NC = params["head_w"].shape[1]
    NPAD = _round_up(max(NC, 1), 128)                                 # lane-dense output store
    head_w = jnp.pad(params["head_w"], ((0, 0), (0, NPAD - NC)))
    head_b = jnp.pad(params["head_b"], (0, NPAD - NC))
    logits = ln_matmul(last, params["lnf_g"], params["lnf_b"], head_w, head_b,
                       out_dtype=jnp.float32)
    return logits[:B, :NC]                                            # head_for_class_TS (dropout=id)

# TODO(synk): 'ST' mode not implemented — PatchEmbedding definition is not provided in the source.


# ----------------------------------------------------------------------------- params

def init_params(key, *, input_dim, d_model, n_layers, num_classes, max_pos):
    keys = iter(jax.random.split(key, 4 * n_layers + 8))

    def n(shape, std=0.02):
        return (std * jax.random.normal(next(keys), shape)).astype(jnp.float32)

    D = d_model
    layers = []
    for _ in range(n_layers):
        layers.append(dict(
            ln1_g=jnp.ones((D,), jnp.float32), ln1_b=jnp.zeros((D,), jnp.float32),
            w_attn=n((D, 3 * D)), b_attn=jnp.zeros((3 * D,), jnp.float32),
            w_proj=n((D, D)), b_proj=jnp.zeros((D,), jnp.float32),
            ln2_g=jnp.ones((D,), jnp.float32), ln2_b=jnp.zeros((D,), jnp.float32),
            w_fc=n((D, 4 * D)), b_fc=jnp.zeros((4 * D,), jnp.float32),
            w_mproj=n((4 * D, D)), b_mproj=jnp.zeros((D,), jnp.float32),
        ))
    return dict(
        tok_w=n((D, input_dim, 3)),                       # Conv1d weight (out, in, k)
        start_token=jnp.zeros((1, 1, D), jnp.float32),    # nn.Parameter(torch.zeros)
        stop_token=jnp.zeros((1, 1, D), jnp.float32),
        wpe=n((max_pos, D)),
        layers=layers,
        lnf_g=jnp.ones((D,), jnp.float32), lnf_b=jnp.zeros((D,), jnp.float32),
        head_w=n((D, num_classes)), head_b=jnp.zeros((num_classes,), jnp.float32),
    )


# ----------------------------------------------------------------------------- main

if __name__ == "__main__":
    # Small shapes consistent with the module: B=2, T=8 (seq), C=16 (input_dim),
    # d_model=64, 4 heads, 2 GPT-2 layers, 5 classes.
    B, T, C = 2, 8, 16
    D, H, L, NC = 64, 4, 2, 5

    key = jax.random.PRNGKey(0)
    kx, kp = jax.random.split(key)
    x = jax.random.normal(kx, (B, T, C), dtype=jnp.float32)
    params = init_params(kp, input_dim=C, d_model=D, n_layers=L,
                         num_classes=NC, max_pos=T + 2)

    fwd = jax.jit(lambda xx, pp: gpt2fcls_forward_ts(xx, pp, n_heads=H))
    logits = fwd(x, params)
    jax.block_until_ready(logits)

    assert logits.shape == (B, NC)
    pred_labels = jnp.argmax(logits, axis=1)   # mirrors .predict()
    jax.block_until_ready(pred_labels)
    print("KERNEL_OK")
</pallas_src>

<mosaic_0001>
module attributes {stable_mosaic.version = 11 : i64} {
  func.func @_tok_conv_kernel(%arg0: i32, %arg1: memref<1x10x16xbf16, #tpu.memory_space<vmem>>, %arg2: memref<48x64xbf16, #tpu.memory_space<vmem>>, %arg3: memref<1x8x64xf32, #tpu.memory_space<vmem>>) attributes {dimension_semantics = [#tpu.dimension_semantics<parallel>], iteration_bounds = array<i64: 2>, scalar_prefetch = 0 : i64, scratch_operands = 0 : i64, tpu.core_type = #tpu.core_type<tc>, window_params = [{transform_indices = @transform_0, window_bounds = array<i64: 1, 10, 16>}, {pipeline_mode = #tpu.pipeline_mode<synchronous>, transform_indices = @transform_1, window_bounds = array<i64: 48, 64>}, {transform_indices = @transform_2, window_bounds = array<i64: 1, 8, 64>}]} {
    %c0 = arith.constant 0 : index
    %c0_0 = arith.constant 0 : index
    %c0_1 = arith.constant 0 : index
    %0 = vector.load %arg1[%c0, %c0_0, %c0_1] : memref<1x10x16xbf16, #tpu.memory_space<vmem>>, vector<1x10x16xbf16>
    %1 = vector.shape_cast %0 : vector<1x10x16xbf16> to vector<10x16xbf16>
    %2 = vector.extract_strided_slice %1 {offsets = [0, 0], sizes = [8, 16], strides = [1, 1]} : vector<10x16xbf16> to vector<8x16xbf16>
    %3 = vector.extract_strided_slice %1 {offsets = [1, 0], sizes = [8, 16], strides = [1, 1]} : vector<10x16xbf16> to vector<8x16xbf16>
    %4 = vector.extract_strided_slice %1 {offsets = [2, 0], sizes = [8, 16], strides = [1, 1]} : vector<10x16xbf16> to vector<8x16xbf16>
    %5 = tpu.concatenate %2, %3, %4 in 1 : vector<8x16xbf16>, vector<8x16xbf16>, vector<8x16xbf16> -> vector<8x48xbf16>
    %c0_2 = arith.constant 0 : index
    %c0_3 = arith.constant 0 : index
    %6 = vector.load %arg2[%c0_2, %c0_3] : memref<48x64xbf16, #tpu.memory_space<vmem>>, vector<48x64xbf16>
    %cst = arith.constant dense<0.000000e+00> : vector<8x64xf32>
    %7 = tpu.matmul %5, %6, %cst {dimension_numbers = #tpu.dot_dimension_numbers<[1], [0], [0], [1], [0, 0, 1, 1], [], []>} : vector<8x48xbf16>, vector<48x64xbf16>, vector<8x64xf32> -> vector<8x64xf32>
    %c0_4 = arith.constant 0 : index
    %c0_5 = arith.constant 0 : index
    %c0_6 = arith.constant 0 : index
    %8 = vector.load %arg3[%c0_4, %c0_5, %c0_6] : memref<1x8x64xf32, #tpu.memory_space<vmem>>, vector<1x8x64xf32>
    %9 = vector.shape_cast %8 : vector<1x8x64xf32> to vector<8x64xf32>
    %10 = vector.shape_cast %7 : vector<8x64xf32> to vector<1x8x64xf32>
    tpu.vector_store %arg3[%c0_4, %c0_5, %c0_6], %10 {strides = array<i32>} : memref<1x8x64xf32, #tpu.memory_space<vmem>>, vector<1x8x64xf32>,
    return
  }
  func.func @transform_0(%arg0: i32) -> (i32, i32, i32) {
    %c0_i32 = arith.constant 0 : i32
    %c0_i32_0 = arith.constant 0 : i32
    %c0_i32_1 = arith.constant 0 : i32
    return %arg0, %c0_i32, %c0_i32_0 : i32, i32, i32
  }
  func.func @transform_1(%arg0: i32) -> (i32, i32) {
    %c0_i32 = arith.constant 0 : i32
    %c0_i32_0 = arith.constant 0 : i32
    %c0_i32_1 = arith.constant 0 : i32
    return %c0_i32, %c0_i32_0 : i32, i32
  }
  func.func @transform_2(%arg0: i32) -> (i32, i32, i32) {
    %c0_i32 = arith.constant 0 : i32
    %c0_i32_0 = arith.constant 0 : i32
    %c0_i32_1 = arith.constant 0 : i32
    return %arg0, %c0_i32, %c0_i32_0 : i32, i32, i32
  }
}

module attributes {stable_mosaic.version = 11 : i64} {
  func.func @_ln_matmul_kernel(%arg0: i32, %arg1: i32, %arg2: memref<32x64xbf16, #tpu.memory_space<vmem>>, %arg3: memref<1x64xf32, #tpu.memory_space<vmem>>, %arg4: memref<1x64xf32, #tpu.memory_space<vmem>>, %arg5: memref<64x192xbf16, #tpu.memory_space<vmem>>, %arg6: memref<1x192xf32, #tpu.memory_space<vmem>>, %arg7: memref<32x192xbf16, #tpu.memory_space<vmem>>, %arg8: memref<32x64xbf16, #tpu.memory_space<vmem>>) attributes {dimension_semantics = [#tpu.dimension_semantics<parallel>, #tpu.dimension_semantics<arbitrary>], iteration_bounds = array<i64: 1, 1>, scalar_prefetch = 0 : i64, scratch_operands = 1 : i64, tpu.core_type = #tpu.core_type<tc>, window_params = [{transform_indices = @transform_0, window_bounds = array<i64: 32, 64>}, {pipeline_mode = #tpu.pipeline_mode<synchronous>, transform_indices = @transform_1, window_bounds = array<i64: 1, 64>}, {pipeline_mode = #tpu.pipeline_mode<synchronous>, transform_indices = @transform_2, window_bounds = array<i64: 1, 64>}, {transform_indices = @transform_3, window_bounds = array<i64: 64, 192>}, {transform_indices = @transform_4, window_bounds = array<i64: 1, 192>}, {transform_indices = @transform_5, window_bounds = array<i64: 32, 192>}]} {
    %c0_i32 = arith.constant 0 : i32
    %0 = arith.cmpi eq, %arg1, %c0_i32 : i32
    %1 = arith.extui %0 : i1 to i32
    %c0_i32_0 = arith.constant 0 : i32
    %2 = arith.cmpi ne, %1, %c0_i32_0 : i32
    scf.if %2 {
      %c0_8 = arith.constant 0 : index
      %c0_9 = arith.constant 0 : index
      %11 = vector.load %arg2[%c0_8, %c0_9] : memref<32x64xbf16, #tpu.memory_space<vmem>>, vector<32x64xbf16>
      %12 = arith.extf %11 : vector<32x64xbf16> to vector<32x64xf32>
      %cst_10 = arith.constant dense<0.000000e+00> : vector<32xf32>
      %13 = vector.multi_reduction <add>, %12, %cst_10 [1] : vector<32x64xf32> to vector<32xf32>
      %14 = vector.shape_cast %13 : vector<32xf32> to vector<32x1xf32>
      %cst_11 = arith.constant 6.400000e+01 : f32
      %15 = vector.broadcast %cst_11 : f32 to vector<32x1xf32>
      %16 = arith.divf %14, %15 : vector<32x1xf32>
      %17 = vector.broadcast %16 : vector<32x1xf32> to vector<32x64xf32>
      %18 = arith.subf %12, %17 : vector<32x64xf32>
      %19 = arith.mulf %18, %18 : vector<32x64xf32>
      %cst_12 = arith.constant dense<0.000000e+00> : vector<32xf32>
      %20 = vector.multi_reduction <add>, %19, %cst_12 [1] : vector<32x64xf32> to vector<32xf32>
      %21 = vector.shape_cast %20 : vector<32xf32> to vector<32x1xf32>
      %cst_13 = arith.constant 6.400000e+01 : f32
      %22 = vector.broadcast %cst_13 : f32 to vector<32x1xf32>
      %23 = arith.divf %21, %22 : vector<32x1xf32>
      %cst_14 = arith.constant 9.99999974E-6 : f32
      %24 = vector.broadcast %cst_14 : f32 to vector<32x1xf32>
      %25 = arith.addf %23, %24 : vector<32x1xf32>
      %26 = math.rsqrt %25 : vector<32x1xf32>
      %27 = vector.broadcast %26 : vector<32x1xf32> to vector<32x64xf32>
      %28 = arith.mulf %18, %27 : vector<32x64xf32>
      %c0_15 = arith.constant 0 : index
      %c0_16 = arith.constant 0 : index
      %29 = vector.load %arg3[%c0_15, %c0_16] : memref<1x64xf32, #tpu.memory_space<vmem>>, vector<1x64xf32>
      %30 = vector.broadcast %29 : vector<1x64xf32> to vector<32x64xf32>
      %31 = arith.mulf %28, %30 : vector<32x64xf32>
      %c0_17 = arith.constant 0 : index
      %c0_18 = arith.constant 0 : index
      %32 = vector.load %arg4[%c0_17, %c0_18] : memref<1x64xf32, #tpu.memory_space<vmem>>, vector<1x64xf32>
      %33 = vector.broadcast %32 : vector<1x64xf32> to vector<32x64xf32>
      %34 = arith.addf %31, %33 : vector<32x64xf32>
      %35 = arith.truncf %34 : vector<32x64xf32> to vector<32x64xbf16>
      %c0_19 = arith.constant 0 : index
      %c0_20 = arith.constant 0 : index
      %36 = vector.load %arg8[%c0_19, %c0_20] : memref<32x64xbf16, #tpu.memory_space<vmem>>, vector<32x64xbf16>
      tpu.vector_store %arg8[%c0_19, %c0_20], %35 {strides = array<i32>} : memref<32x64xbf16, #tpu.memory_space<vmem>>, vector<32x64xbf16>,
    } else {
    }
    %c0 = arith.constant 0 : index
    %c0_1 = arith.constant 0 : index
    %3 = vector.load %arg8[%c0, %c0_1] : memref<32x64xbf16, #tpu.memory_space<vmem>>, vector<32x64xbf16>
    %c0_2 = arith.constant 0 : index
    %c0_3 = arith.constant 0 : index
    %4 = vector.load %arg5[%c0_2, %c0_3] : memref<64x192xbf16, #tpu.memory_space<vmem>>, vector<64x192xbf16>
    %cst = arith.constant dense<0.000000e+00> : vector<32x192xf32>
    %5 = tpu.matmul %3, %4, %cst {dimension_numbers = #tpu.dot_dimension_numbers<[1], [0], [0], [1], [0, 0, 1, 1], [], []>} : vector<32x64xbf16>, vector<64x192xbf16>, vector<32x192xf32> -> vector<32x192xf32>
    %c0_4 = arith.constant 0 : index
    %c0_5 = arith.constant 0 : index
    %6 = vector.load %arg6[%c0_4, %c0_5] : memref<1x192xf32, #tpu.memory_space<vmem>>, vector<1x192xf32>
    %7 = vector.broadcast %6 : vector<1x192xf32> to vector<32x192xf32>
    %8 = arith.addf %5, %7 : vector<32x192xf32>
    %9 = arith.truncf %8 : vector<32x192xf32> to vector<32x192xbf16>
    %c0_6 = arith.constant 0 : index
    %c0_7 = arith.constant 0 : index
    %10 = vector.load %arg7[%c0_6, %c0_7] : memref<32x192xbf16, #tpu.memory_space<vmem>>, vector<32x192xbf16>
    tpu.vector_store %arg7[%c0_6, %c0_7], %9 {strides = array<i32>} : memref<32x192xbf16, #tpu.memory_space<vmem>>, vector<32x192xbf16>,
    return
  }
  func.func @transform_0(%arg0: i32, %arg1: i32) -> (i32, i32) {
    %c0_i32 = arith.constant 0 : i32
    %c0_i32_0 = arith.constant 0 : i32
    return %arg0, %c0_i32 : i32, i32
  }
  func.func @transform_1(%arg0: i32, %arg1: i32) -> (i32, i32) {
    %c0_i32 = arith.constant 0 : i32
    %c0_i32_0 = arith.constant 0 : i32
    %c0_i32_1 = arith.constant 0 : i32
    return %c0_i32, %c0_i32_0 : i32, i32
  }
  func.func @transform_2(%arg0: i32, %arg1: i32) -> (i32, i32) {
    %c0_i32 = arith.constant 0 : i32
    %c0_i32_0 = arith.constant 0 : i32
    %c0_i32_1 = arith.constant 0 : i32
    return %c0_i32, %c0_i32_0 : i32, i32
  }
  func.func @transform_3(%arg0: i32, %arg1: i32) -> (i32, i32) {
    %c0_i32 = arith.constant 0 : i32
    %c0_i32_0 = arith.constant 0 : i32
    return %c0_i32, %arg1 : i32, i32
  }
  func.func @transform_4(%arg0: i32, %arg1: i32) -> (i32, i32) {
    %c0_i32 = arith.constant 0 : i32
    %c0_i32_0 = arith.constant 0 : i32
    return %c0_i32, %arg1 : i32, i32
  }
  func.func @transform_5(%arg0: i32, %arg1: i32) -> (i32, i32) {
    %c0_i32 = arith.constant 0 : i32
    return %arg0, %arg1 : i32, i32
  }
}

module attributes {stable_mosaic.version = 11 : i64} {
  func.func @_causal_attn_kernel(%arg0: i32, %arg1: memref<1x16x192xbf16, #tpu.memory_space<vmem>>, %arg2: memref<1x16x64xbf16, #tpu.memory_space<vmem>>) attributes {dimension_semantics = [#tpu.dimension_semantics<parallel>], iteration_bounds = array<i64: 2>, scalar_prefetch = 0 : i64, scratch_operands = 0 : i64, tpu.core_type = #tpu.core_type<tc>, window_params = [{transform_indices = @transform_0, window_bounds = array<i64: 1, 16, 192>}, {transform_indices = @transform_1, window_bounds = array<i64: 1, 16, 64>}]} {
    %c0 = arith.constant 0 : index
    %c0_0 = arith.constant 0 : index
    %c0_1 = arith.constant 0 : index
    %0 = vector.load %arg1[%c0, %c0_0, %c0_1] : memref<1x16x192xbf16, #tpu.memory_space<vmem>>, vector<1x16x192xbf16>
    %1 = vector.shape_cast %0 : vector<1x16x192xbf16> to vector<16x192xbf16>
    %2 = tpu.iota {dimensions = array<i32: 0>} : vector<16x16xi32>
    %3 = tpu.iota {dimensions = array<i32: 1>} : vector<16x16xi32>
    %4 = arith.cmpi sle, %3, %2 : vector<16x16xi32>
    %5 = vector.extract_strided_slice %1 {offsets = [0, 0], sizes = [16, 16], strides = [1, 1]} : vector<16x192xbf16> to vector<16x16xbf16>
    %6 = arith.extf %5 : vector<16x16xbf16> to vector<16x16xf32>
    %cst = arith.constant 2.500000e-01 : f32
    %7 = vector.broadcast %cst : f32 to vector<16x16xf32>
    %8 = arith.mulf %6, %7 : vector<16x16xf32>
    %9 = arith.truncf %8 : vector<16x16xf32> to vector<16x16xbf16>
    %10 = vector.extract_strided_slice %1 {offsets = [0, 64], sizes = [16, 16], strides = [1, 1]} : vector<16x192xbf16> to vector<16x16xbf16>
    %11 = vector.extract_strided_slice %1 {offsets = [0, 128], sizes = [16, 16], strides = [1, 1]} : vector<16x192xbf16> to vector<16x16xbf16>
    %cst_2 = arith.constant dense<0.000000e+00> : vector<16x16xf32>
    %12 = tpu.matmul %9, %10, %cst_2 {dimension_numbers = #tpu.dot_dimension_numbers<[1], [1], [0], [0], [0, 0, 1, 0], [], []>} : vector<16x16xbf16>, vector<16x16xbf16>, vector<16x16xf32> -> vector<16x16xf32>
    %cst_3 = arith.constant -1.000000e+30 : f32
    %13 = vector.broadcast %cst_3 : f32 to vector<16x16xf32>
    %14 = arith.select %4, %12, %13 : vector<16x16xi1>, vector<16x16xf32>
    %cst_4 = arith.constant dense<0xFF800000> : vector<16xf32>
    %15 = vector.multi_reduction <maximumf>, %14, %cst_4 [1] : vector<16x16xf32> to vector<16xf32>
    %16 = vector.shape_cast %15 : vector<16xf32> to vector<16x1xf32>
    %17 = vector.broadcast %16 : vector<16x1xf32> to vector<16x16xf32>
    %18 = arith.subf %14, %17 : vector<16x16xf32>
    %19 = math.exp %18 : vector<16x16xf32>
    %cst_5 = arith.constant dense<0.000000e+00> : vector<16xf32>
    %20 = vector.multi_reduction <add>, %19, %cst_5 [1] : vector<16x16xf32> to vector<16xf32>
    %21 = vector.shape_cast %20 : vector<16xf32> to vector<16x1xf32>
    %22 = tpu.reciprocal %21 {approx = true} : vector<16x1xf32> -> vector<16x1xf32>
    %23 = vector.broadcast %22 : vector<16x1xf32> to vector<16x16xf32>
    %24 = arith.mulf %19, %23 : vector<16x16xf32>
    %25 = arith.truncf %24 : vector<16x16xf32> to vector<16x16xbf16>
    %cst_6 = arith.constant dense<0.000000e+00> : vector<16x16xf32>
    %26 = tpu.matmul %25, %11, %cst_6 {dimension_numbers = #tpu.dot_dimension_numbers<[1], [0], [0], [1], [0, 0, 1, 1], [], []>} : vector<16x16xbf16>, vector<16x16xbf16>, vector<16x16xf32> -> vector<16x16xf32>
    %27 = vector.extract_strided_slice %1 {offsets = [0, 16], sizes = [16, 16], strides = [1, 1]} : vector<16x192xbf16> to vector<16x16xbf16>
    %28 = arith.extf %27 : vector<16x16xbf16> to vector<16x16xf32>
    %cst_7 = arith.constant 2.500000e-01 : f32
    %29 = vector.broadcast %cst_7 : f32 to vector<16x16xf32>
    %30 = arith.mulf %28, %29 : vector<16x16xf32>
    %31 = arith.truncf %30 : vector<16x16xf32> to vector<16x16xbf16>
    %32 = vector.extract_strided_slice %1 {offsets = [0, 80], sizes = [16, 16], strides = [1, 1]} : vector<16x192xbf16> to vector<16x16xbf16>
    %33 = vector.extract_strided_slice %1 {offsets = [0, 144], sizes = [16, 16], strides = [1, 1]} : vector<16x192xbf16> to vector<16x16xbf16>
    %cst_8 = arith.constant dense<0.000000e+00> : vector<16x16xf32>
    %34 = tpu.matmul %31, %32, %cst_8 {dimension_numbers = #tpu.dot_dimension_numbers<[1], [1], [0], [0], [0, 0, 1, 0], [], []>} : vector<16x16xbf16>, vector<16x16xbf16>, vector<16x16xf32> -> vector<16x16xf32>
    %cst_9 = arith.constant -1.000000e+30 : f32
    %35 = vector.broadcast %cst_9 : f32 to vector<16x16xf32>
    %36 = arith.select %4, %34, %35 : vector<16x16xi1>, vector<16x16xf32>
    %cst_10 = arith.constant dense<0xFF800000> : vector<16xf32>
    %37 = vector.multi_reduction <maximumf>, %36, %cst_10 [1] : vector<16x16xf32> to vector<16xf32>
    %38 = vector.shape_cast %37 : vector<16xf32> to vector<16x1xf32>
    %39 = vector.broadcast %38 : vector<16x1xf32> to vector<16x16xf32>
    %40 = arith.subf %36, %39 : vector<16x16xf32>
    %41 = math.exp %40 : vector<16x16xf32>
    %cst_11 = arith.constant dense<0.000000e+00> : vector<16xf32>
    %42 = vector.multi_reduction <add>, %41, %cst_11 [1] : vector<16x16xf32> to vector<16xf32>
    %43 = vector.shape_cast %42 : vector<16xf32> to vector<16x1xf32>
    %44 = tpu.reciprocal %43 {approx = true} : vector<16x1xf32> -> vector<16x1xf32>
    %45 = vector.broadcast %44 : vector<16x1xf32> to vector<16x16xf32>
    %46 = arith.mulf %41, %45 : vector<16x16xf32>
    %47 = arith.truncf %46 : vector<16x16xf32> to vector<16x16xbf16>
    %cst_12 = arith.constant dense<0.000000e+00> : vector<16x16xf32>
    %48 = tpu.matmul %47, %33, %cst_12 {dimension_numbers = #tpu.dot_dimension_numbers<[1], [0], [0], [1], [0, 0, 1, 1], [], []>} : vector<16x16xbf16>, vector<16x16xbf16>, vector<16x16xf32> -> vector<16x16xf32>
    %49 = vector.extract_strided_slice %1 {offsets = [0, 32], sizes = [16, 16], strides = [1, 1]} : vector<16x192xbf16> to vector<16x16xbf16>
    %50 = arith.extf %49 : vector<16x16xbf16> to vector<16x16xf32>
    %cst_13 = arith.constant 2.500000e-01 : f32
    %51 = vector.broadcast %cst_13 : f32 to vector<16x16xf32>
    %52 = arith.mulf %50, %51 : vector<16x16xf32>
    %53 = arith.truncf %52 : vector<16x16xf32> to vector<16x16xbf16>
    %54 = vector.extract_strided_slice %1 {offsets = [0, 96], sizes = [16, 16], strides = [1, 1]} : vector<16x192xbf16> to vector<16x16xbf16>
    %55 = vector.extract_strided_slice %1 {offsets = [0, 160], sizes = [16, 16], strides = [1, 1]} : vector<16x192xbf16> to vector<16x16xbf16>
    %cst_14 = arith.constant dense<0.000000e+00> : vector<16x16xf32>
    %56 = tpu.matmul %53, %54, %cst_14 {dimension_numbers = #tpu.dot_dimension_numbers<[1], [1], [0], [0], [0, 0, 1, 0], [], []>} : vector<16x16xbf16>, vector<16x16xbf16>, vector<16x16xf32> -> vector<16x16xf32>
    %cst_15 = arith.constant -1.000000e+30 : f32
    %57 = vector.broadcast %cst_15 : f32 to vector<16x16xf32>
    %58 = arith.select %4, %56, %57 : vector<16x16xi1>, vector<16x16xf32>
    %cst_16 = arith.constant dense<0xFF800000> : vector<16xf32>
    %59 = vector.multi_reduction <maximumf>, %58, %cst_16 [1] : vector<16x16xf32> to vector<16xf32>
    %60 = vector.shape_cast %59 : vector<16xf32> to vector<16x1xf32>
    %61 = vector.broadcast %60 : vector<16x1xf32> to vector<16x16xf32>
    %62 = arith.subf %58, %61 : vector<16x16xf32>
    %63 = math.exp %62 : vector<16x16xf32>
    %cst_17 = arith.constant dense<0.000000e+00> : vector<16xf32>
    %64 = vector.multi_reduction <add>, %63, %cst_17 [1] : vector<16x16xf32> to vector<16xf32>
    %65 = vector.shape_cast %64 : vector<16xf32> to vector<16x1xf32>
    %66 = tpu.reciprocal %65 {approx = true} : vector<16x1xf32> -> vector<16x1xf32>
    %67 = vector.broadcast %66 : vector<16x1xf32> to vector<16x16xf32>
    %68 = arith.mulf %63, %67 : vector<16x16xf32>
    %69 = arith.truncf %68 : vector<16x16xf32> to vector<16x16xbf16>
    %cst_18 = arith.constant dense<0.000000e+00> : vector<16x16xf32>
    %70 = tpu.matmul %69, %55, %cst_18 {dimension_numbers = #tpu.dot_dimension_numbers<[1], [0], [0], [1], [0, 0, 1, 1], [], []>} : vector<16x16xbf16>, vector<16x16xbf16>, vector<16x16xf32> -> vector<16x16xf32>
    %71 = vector.extract_strided_slice %1 {offsets = [0, 48], sizes = [16, 16], strides = [1, 1]} : vector<16x192xbf16> to vector<16x16xbf16>
    %72 = arith.extf %71 : vector<16x16xbf16> to vector<16x16xf32>
    %cst_19 = arith.constant 2.500000e-01 : f32
    %73 = vector.broadcast %cst_19 : f32 to vector<16x16xf32>
    %74 = arith.mulf %72, %73 : vector<16x16xf32>
    %75 = arith.truncf %74 : vector<16x16xf32> to vector<16x16xbf16>
    %76 = vector.extract_strided_slice %1 {offsets = [0, 112], sizes = [16, 16], strides = [1, 1]} : vector<16x192xbf16> to vector<16x16xbf16>
    %77 = vector.extract_strided_slice %1 {offsets = [0, 176], sizes = [16, 16], strides = [1, 1]} : vector<16x192xbf16> to vector<16x16xbf16>
    %cst_20 = arith.constant dense<0.000000e+00> : vector<16x16xf32>
    %78 = tpu.matmul %75, %76, %cst_20 {dimension_numbers = #tpu.dot_dimension_numbers<[1], [1], [0], [0], [0, 0, 1, 0], [], []>} : vector<16x16xbf16>, vector<16x16xbf16>, vector<16x16xf32> -> vector<16x16xf32>
    %cst_21 = arith.constant -1.000000e+30 : f32
    %79 = vector.broadcast %cst_21 : f32 to vector<16x16xf32>
    %80 = arith.select %4, %78, %79 : vector<16x16xi1>, vector<16x16xf32>
    %cst_22 = arith.constant dense<0xFF800000> : vector<16xf32>
    %81 = vector.multi_reduction <maximumf>, %80, %cst_22 [1] : vector<16x16xf32> to vector<16xf32>
    %82 = vector.shape_cast %81 : vector<16xf32> to vector<16x1xf32>
    %83 = vector.broadcast %82 : vector<16x1xf32> to vector<16x16xf32>
    %84 = arith.subf %80, %83 : vector<16x16xf32>
    %85 = math.exp %84 : vector<16x16xf32>
    %cst_23 = arith.constant dense<0.000000e+00> : vector<16xf32>
    %86 = vector.multi_reduction <add>, %85, %cst_23 [1] : vector<16x16xf32> to vector<16xf32>
    %87 = vector.shape_cast %86 : vector<16xf32> to vector<16x1xf32>
    %88 = tpu.reciprocal %87 {approx = true} : vector<16x1xf32> -> vector<16x1xf32>
    %89 = vector.broadcast %88 : vector<16x1xf32> to vector<16x16xf32>
    %90 = arith.mulf %85, %89 : vector<16x16xf32>
    %91 = arith.truncf %90 : vector<16x16xf32> to vector<16x16xbf16>
    %cst_24 = arith.constant dense<0.000000e+00> : vector<16x16xf32>
    %92 = tpu.matmul %91, %77, %cst_24 {dimension_numbers = #tpu.dot_dimension_numbers<[1], [0], [0], [1], [0, 0, 1, 1], [], []>} : vector<16x16xbf16>, vector<16x16xbf16>, vector<16x16xf32> -> vector<16x16xf32>
    %93 = tpu.concatenate %26, %48, %70, %92 in 1 : vector<16x16xf32>, vector<16x16xf32>, vector<16x16xf32>, vector<16x16xf32> -> vector<16x64xf32>
    %94 = arith.truncf %93 : vector<16x64xf32> to vector<16x64xbf16>
    %c0_25 = arith.constant 0 : index
    %c0_26 = arith.constant 0 : index
    %c0_27 = arith.constant 0 : index
    %95 = vector.load %arg2[%c0_25, %c0_26, %c0_27] : memref<1x16x64xbf16, #tpu.memory_space<vmem>>, vector<1x16x64xbf16>
    %96 = vector.shape_cast %95 : vector<1x16x64xbf16> to vector<16x64xbf16>
    %97 = vector.shape_cast %94 : vector<16x64xbf16> to vector<1x16x64xbf16>
    tpu.vector_store %arg2[%c0_25, %c0_26, %c0_27], %97 {strides = array<i32>} : memref<1x16x64xbf16, #tpu.memory_space<vmem>>, vector<1x16x64xbf16>,
    return
  }
  func.func @transform_0(%arg0: i32) -> (i32, i32, i32) {
    %c0_i32 = arith.constant 0 : i32
    %c0_i32_0 = arith.constant 0 : i32
    %c0_i32_1 = arith.constant 0 : i32
    return %arg0, %c0_i32, %c0_i32_0 : i32, i32, i32
  }
  func.func @transform_1(%arg0: i32) -> (i32, i32, i32) {
    %c0_i32 = arith.constant 0 : i32
    %c0_i32_0 = arith.constant 0 : i32
    %c0_i32_1 = arith.constant 0 : i32
    return %arg0, %c0_i32, %c0_i32_0 : i32, i32, i32
  }
}

module attributes {stable_mosaic.version = 11 : i64} {
  func.func @_matmul_kernel(%arg0: i32, %arg1: i32, %arg2: i32, %arg3: memref<32x64xbf16, #tpu.memory_space<vmem>>, %arg4: memref<64x64xbf16, #tpu.memory_space<vmem>>, %arg5: memref<1x64xf32, #tpu.memory_space<vmem>>, %arg6: memref<32x64xbf16, #tpu.memory_space<vmem>>, %arg7: memref<32x64xbf16, #tpu.memory_space<vmem>>, %arg8: memref<32x64xf32, #tpu.memory_space<vmem>>) attributes {dimension_semantics = [#tpu.dimension_semantics<parallel>, #tpu.dimension_semantics<parallel>, #tpu.dimension_semantics<arbitrary>], iteration_bounds = array<i64: 1, 1, 1>, scalar_prefetch = 0 : i64, scratch_operands = 1 : i64, tpu.core_type = #tpu.core_type<tc>, window_params = [{transform_indices = @transform_0, window_bounds = array<i64: 32, 64>}, {transform_indices = @transform_1, window_bounds = array<i64: 64, 64>}, {transform_indices = @transform_2, window_bounds = array<i64: 1, 64>}, {transform_indices = @transform_3, window_bounds = array<i64: 32, 64>}, {transform_indices = @transform_4, window_bounds = array<i64: 32, 64>}]} {
    %c0_i32 = arith.constant 0 : i32
    %0 = arith.cmpi eq, %arg2, %c0_i32 : i32
    %1 = arith.extui %0 : i1 to i32
    %c0_i32_0 = arith.constant 0 : i32
    %2 = arith.cmpi ne, %1, %c0_i32_0 : i32
    scf.if %2 {
      %cst_10 = arith.constant 0.000000e+00 : f32
      %12 = vector.broadcast %cst_10 : f32 to vector<32x64xf32>
      %c0_11 = arith.constant 0 : index
      %c0_12 = arith.constant 0 : index
      %13 = vector.load %arg8[%c0_11, %c0_12] : memref<32x64xf32, #tpu.memory_space<vmem>>, vector<32x64xf32>
      tpu.vector_store %arg8[%c0_11, %c0_12], %12 {strides = array<i32>} : memref<32x64xf32, #tpu.memory_space<vmem>>, vector<32x64xf32>,
    } else {
    }
    %c0 = arith.constant 0 : index
    %c0_1 = arith.constant 0 : index
    %3 = vector.load %arg8[%c0, %c0_1] : memref<32x64xf32, #tpu.memory_space<vmem>>, vector<32x64xf32>
    %c0_2 = arith.constant 0 : index
    %c0_3 = arith.constant 0 : index
    %4 = vector.load %arg3[%c0_2, %c0_3] : memref<32x64xbf16, #tpu.memory_space<vmem>>, vector<32x64xbf16>
    %c0_4 = arith.constant 0 : index
    %c0_5 = arith.constant 0 : index
    %5 = vector.load %arg4[%c0_4, %c0_5] : memref<64x64xbf16, #tpu.memory_space<vmem>>, vector<64x64xbf16>
    %cst = arith.constant dense<0.000000e+00> : vector<32x64xf32>
    %6 = tpu.matmul %4, %5, %cst {dimension_numbers = #tpu.dot_dimension_numbers<[1], [0], [0], [1], [0, 0, 1, 1], [], []>} : vector<32x64xbf16>, vector<64x64xbf16>, vector<32x64xf32> -> vector<32x64xf32>
    %7 = arith.addf %3, %6 : vector<32x64xf32>
    %c0_6 = arith.constant 0 : index
    %c0_7 = arith.constant 0 : index
    %8 = vector.load %arg8[%c0_6, %c0_7] : memref<32x64xf32, #tpu.memory_space<vmem>>, vector<32x64xf32>
    tpu.vector_store %arg8[%c0_6, %c0_7], %7 {strides = array<i32>} : memref<32x64xf32, #tpu.memory_space<vmem>>, vector<32x64xf32>,
    %c0_i32_8 = arith.constant 0 : i32
    %9 = arith.cmpi eq, %arg2, %c0_i32_8 : i32
    %10 = arith.extui %9 : i1 to i32
    %c0_i32_9 = arith.constant 0 : i32
    %11 = arith.cmpi ne, %10, %c0_i32_9 : i32
    scf.if %11 {
      %c0_10 = arith.constant 0 : index
      %c0_11 = arith.constant 0 : index
      %12 = vector.load %arg8[%c0_10, %c0_11] : memref<32x64xf32, #tpu.memory_space<vmem>>, vector<32x64xf32>
      %c0_12 = arith.constant 0 : index
      %c0_13 = arith.constant 0 : index
      %13 = vector.load %arg5[%c0_12, %c0_13] : memref<1x64xf32, #tpu.memory_space<vmem>>, vector<1x64xf32>
      %14 = vector.broadcast %13 : vector<1x64xf32> to vector<32x64xf32>
      %15 = arith.addf %12, %14 : vector<32x64xf32>
      %c0_14 = arith.constant 0 : index
      %c0_15 = arith.constant 0 : index
      %16 = vector.load %arg6[%c0_14, %c0_15] : memref<32x64xbf16, #tpu.memory_space<vmem>>, vector<32x64xbf16>
      %17 = arith.extf %16 : vector<32x64xbf16> to vector<32x64xf32>
      %18 = arith.addf %15, %17 : vector<32x64xf32>
      %19 = arith.truncf %18 : vector<32x64xf32> to vector<32x64xbf16>
      %c0_16 = arith.constant 0 : index
      %c0_17 = arith.constant 0 : index
      %20 = vector.load %arg7[%c0_16, %c0_17] : memref<32x64xbf16, #tpu.memory_space<vmem>>, vector<32x64xbf16>
      tpu.vector_store %arg7[%c0_16, %c0_17], %19 {strides = array<i32>} : memref<32x64xbf16, #tpu.memory_space<vmem>>, vector<32x64xbf16>,
    } else {
    }
    return
  }
  func.func @transform_0(%arg0: i32, %arg1: i32, %arg2: i32) -> (i32, i32) {
    %c0_i32 = arith.constant 0 : i32
    return %arg0, %arg2 : i32, i32
  }
  func.func @transform_1(%arg0: i32, %arg1: i32, %arg2: i32) -> (i32, i32) {
    %c0_i32 = arith.constant 0 : i32
    return %arg2, %arg1 : i32, i32
  }
  func.func @transform_2(%arg0: i32, %arg1: i32, %arg2: i32) -> (i32, i32) {
    %c0_i32 = arith.constant 0 : i32
    %c0_i32_0 = arith.constant 0 : i32
    return %c0_i32, %arg1 : i32, i32
  }
  func.func @transform_3(%arg0: i32, %arg1: i32, %arg2: i32) -> (i32, i32) {
    %c0_i32 = arith.constant 0 : i32
    return %arg0, %arg1 : i32, i32
  }
  func.func @transform_4(%arg0: i32, %arg1: i32, %arg2: i32) -> (i32, i32) {
    %c0_i32 = arith.constant 0 : i32
    return %arg0, %arg1 : i32, i32
  }
}

module attributes {stable_mosaic.version = 11 : i64} {
  func.func @_matmul_kernel(%arg0: i32, %arg1: i32, %arg2: i32, %arg3: memref<32x256xbf16, #tpu.memory_space<vmem>>, %arg4: memref<256x64xbf16, #tpu.memory_space<vmem>>, %arg5: memref<1x64xf32, #tpu.memory_space<vmem>>, %arg6: memref<32x64xbf16, #tpu.memory_space<vmem>>, %arg7: memref<32x64xbf16, #tpu.memory_space<vmem>>, %arg8: memref<32x64xf32, #tpu.memory_space<vmem>>) attributes {dimension_semantics = [#tpu.dimension_semantics<parallel>, #tpu.dimension_semantics<parallel>, #tpu.dimension_semantics<arbitrary>], iteration_bounds = array<i64: 1, 1, 1>, scalar_prefetch = 0 : i64, scratch_operands = 1 : i64, tpu.core_type = #tpu.core_type<tc>, window_params = [{transform_indices = @transform_0, window_bounds = array<i64: 32, 256>}, {transform_indices = @transform_1, window_bounds = array<i64: 256, 64>}, {transform_indices = @transform_2, window_bounds = array<i64: 1, 64>}, {transform_indices = @transform_3, window_bounds = array<i64: 32, 64>}, {transform_indices = @transform_4, window_bounds = array<i64: 32, 64>}]} {
    %c0_i32 = arith.constant 0 : i32
    %0 = arith.cmpi eq, %arg2, %c0_i32 : i32
    %1 = arith.extui %0 : i1 to i32
    %c0_i32_0 = arith.constant 0 : i32
    %2 = arith.cmpi ne, %1, %c0_i32_0 : i32
    scf.if %2 {
      %cst_10 = arith.constant 0.000000e+00 : f32
      %12 = vector.broadcast %cst_10 : f32 to vector<32x64xf32>
      %c0_11 = arith.constant 0 : index
      %c0_12 = arith.constant 0 : index
      %13 = vector.load %arg8[%c0_11, %c0_12] : memref<32x64xf32, #tpu.memory_space<vmem>>, vector<32x64xf32>
      tpu.vector_store %arg8[%c0_11, %c0_12], %12 {strides = array<i32>} : memref<32x64xf32, #tpu.memory_space<vmem>>, vector<32x64xf32>,
    } else {
    }
    %c0 = arith.constant 0 : index
    %c0_1 = arith.constant 0 : index
    %3 = vector.load %arg8[%c0, %c0_1] : memref<32x64xf32, #tpu.memory_space<vmem>>, vector<32x64xf32>
    %c0_2 = arith.constant 0 : index
    %c0_3 = arith.constant 0 : index
    %4 = vector.load %arg3[%c0_2, %c0_3] : memref<32x256xbf16, #tpu.memory_space<vmem>>, vector<32x256xbf16>
    %c0_4 = arith.constant 0 : index
    %c0_5 = arith.constant 0 : index
    %5 = vector.load %arg4[%c0_4, %c0_5] : memref<256x64xbf16, #tpu.memory_space<vmem>>, vector<256x64xbf16>
    %cst = arith.constant dense<0.000000e+00> : vector<32x64xf32>
    %6 = tpu.matmul %4, %5, %cst {dimension_numbers = #tpu.dot_dimension_numbers<[1], [0], [0], [1], [0, 0, 1, 1], [], []>} : vector<32x256xbf16>, vector<256x64xbf16>, vector<32x64xf32> -> vector<32x64xf32>
    %7 = arith.addf %3, %6 : vector<32x64xf32>
    %c0_6 = arith.constant 0 : index
    %c0_7 = arith.constant 0 : index
    %8 = vector.load %arg8[%c0_6, %c0_7] : memref<32x64xf32, #tpu.memory_space<vmem>>, vector<32x64xf32>
    tpu.vector_store %arg8[%c0_6, %c0_7], %7 {strides = array<i32>} : memref<32x64xf32, #tpu.memory_space<vmem>>, vector<32x64xf32>,
    %c0_i32_8 = arith.constant 0 : i32
    %9 = arith.cmpi eq, %arg2, %c0_i32_8 : i32
    %10 = arith.extui %9 : i1 to i32
    %c0_i32_9 = arith.constant 0 : i32
    %11 = arith.cmpi ne, %10, %c0_i32_9 : i32
    scf.if %11 {
      %c0_10 = arith.constant 0 : index
      %c0_11 = arith.constant 0 : index
      %12 = vector.load %arg8[%c0_10, %c0_11] : memref<32x64xf32, #tpu.memory_space<vmem>>, vector<32x64xf32>
      %c0_12 = arith.constant 0 : index
      %c0_13 = arith.constant 0 : index
      %13 = vector.load %arg5[%c0_12, %c0_13] : memref<1x64xf32, #tpu.memory_space<vmem>>, vector<1x64xf32>
      %14 = vector.broadcast %13 : vector<1x64xf32> to vector<32x64xf32>
      %15 = arith.addf %12, %14 : vector<32x64xf32>
      %c0_14 = arith.constant 0 : index
      %c0_15 = arith.constant 0 : index
      %16 = vector.load %arg6[%c0_14, %c0_15] : memref<32x64xbf16, #tpu.memory_space<vmem>>, vector<32x64xbf16>
      %17 = arith.extf %16 : vector<32x64xbf16> to vector<32x64xf32>
      %18 = arith.addf %15, %17 : vector<32x64xf32>
      %19 = arith.truncf %18 : vector<32x64xf32> to vector<32x64xbf16>
      %c0_16 = arith.constant 0 : index
      %c0_17 = arith.constant 0 : index
      %20 = vector.load %arg7[%c0_16, %c0_17] : memref<32x64xbf16, #tpu.memory_space<vmem>>, vector<32x64xbf16>
      tpu.vector_store %arg7[%c0_16, %c0_17], %19 {strides = array<i32>} : memref<32x64xbf16, #tpu.memory_space<vmem>>, vector<32x64xbf16>,
    } else {
    }
    return
  }
  func.func @transform_0(%arg0: i32, %arg1: i32, %arg2: i32) -> (i32, i32) {
    %c0_i32 = arith.constant 0 : i32
    return %arg0, %arg2 : i32, i32
  }
  func.func @transform_1(%arg0: i32, %arg1: i32, %arg2: i32) -> (i32, i32) {
    %c0_i32 = arith.constant 0 : i32
    return %arg2, %arg1 : i32, i32
  }
  func.func @transform_2(%arg0: i32, %arg1: i32, %arg2: i32) -> (i32, i32) {
    %c0_i32 = arith.constant 0 : i32
    %c0_i32_0 = arith.constant 0 : i32
    return %c0_i32, %arg1 : i32, i32
  }
  func.func @transform_3(%arg0: i32, %arg1: i32, %arg2: i32) -> (i32, i32) {
    %c0_i32 = arith.constant 0 : i32
    return %arg0, %arg1 : i32, i32
  }
  func.func @transform_4(%arg0: i32, %arg1: i32, %arg2: i32) -> (i32, i32) {
    %c0_i32 = arith.constant 0 : i32
    return %arg0, %arg1 : i32, i32
  }
}

module attributes {stable_mosaic.version = 11 : i64} {
  func.func @_ln_matmul_kernel(%arg0: i32, %arg1: i32, %arg2: memref<32x64xbf16, #tpu.memory_space<vmem>>, %arg3: memref<1x64xf32, #tpu.memory_space<vmem>>, %arg4: memref<1x64xf32, #tpu.memory_space<vmem>>, %arg5: memref<64x256xbf16, #tpu.memory_space<vmem>>, %arg6: memref<1x256xf32, #tpu.memory_space<vmem>>, %arg7: memref<32x256xbf16, #tpu.memory_space<vmem>>, %arg8: memref<32x64xbf16, #tpu.memory_space<vmem>>) attributes {dimension_semantics = [#tpu.dimension_semantics<parallel>, #tpu.dimension_semantics<arbitrary>], iteration_bounds = array<i64: 1, 1>, scalar_prefetch = 0 : i64, scratch_operands = 1 : i64, tpu.core_type = #tpu.core_type<tc>, window_params = [{transform_indices = @transform_0, window_bounds = array<i64: 32, 64>}, {pipeline_mode = #tpu.pipeline_mode<synchronous>, transform_indices = @transform_1, window_bounds = array<i64: 1, 64>}, {pipeline_mode = #tpu.pipeline_mode<synchronous>, transform_indices = @transform_2, window_bounds = array<i64: 1, 64>}, {transform_indices = @transform_3, window_bounds = array<i64: 64, 256>}, {transform_indices = @transform_4, window_bounds = array<i64: 1, 256>}, {transform_indices = @transform_5, window_bounds = array<i64: 32, 256>}]} {
    %c0_i32 = arith.constant 0 : i32
    %0 = arith.cmpi eq, %arg1, %c0_i32 : i32
    %1 = arith.extui %0 : i1 to i32
    %c0_i32_0 = arith.constant 0 : i32
    %2 = arith.cmpi ne, %1, %c0_i32_0 : i32
    scf.if %2 {
      %c0_12 = arith.constant 0 : index
      %c0_13 = arith.constant 0 : index
      %24 = vector.load %arg2[%c0_12, %c0_13] : memref<32x64xbf16, #tpu.memory_space<vmem>>, vector<32x64xbf16>
      %25 = arith.extf %24 : vector<32x64xbf16> to vector<32x64xf32>
      %cst_14 = arith.constant dense<0.000000e+00> : vector<32xf32>
      %26 = vector.multi_reduction <add>, %25, %cst_14 [1] : vector<32x64xf32> to vector<32xf32>
      %27 = vector.shape_cast %26 : vector<32xf32> to vector<32x1xf32>
      %cst_15 = arith.constant 6.400000e+01 : f32
      %28 = vector.broadcast %cst_15 : f32 to vector<32x1xf32>
      %29 = arith.divf %27, %28 : vector<32x1xf32>
      %30 = vector.broadcast %29 : vector<32x1xf32> to vector<32x64xf32>
      %31 = arith.subf %25, %30 : vector<32x64xf32>
      %32 = arith.mulf %31, %31 : vector<32x64xf32>
      %cst_16 = arith.constant dense<0.000000e+00> : vector<32xf32>
      %33 = vector.multi_reduction <add>, %32, %cst_16 [1] : vector<32x64xf32> to vector<32xf32>
      %34 = vector.shape_cast %33 : vector<32xf32> to vector<32x1xf32>
      %cst_17 = arith.constant 6.400000e+01 : f32
      %35 = vector.broadcast %cst_17 : f32 to vector<32x1xf32>
      %36 = arith.divf %34, %35 : vector<32x1xf32>
      %cst_18 = arith.constant 9.99999974E-6 : f32
      %37 = vector.broadcast %cst_18 : f32 to vector<32x1xf32>
      %38 = arith.addf %36, %37 : vector<32x1xf32>
      %39 = math.rsqrt %38 : vector<32x1xf32>
      %40 = vector.broadcast %39 : vector<32x1xf32> to vector<32x64xf32>
      %41 = arith.mulf %31, %40 : vector<32x64xf32>
      %c0_19 = arith.constant 0 : index
      %c0_20 = arith.constant 0 : index
      %42 = vector.load %arg3[%c0_19, %c0_20] : memref<1x64xf32, #tpu.memory_space<vmem>>, vector<1x64xf32>
      %43 = vector.broadcast %42 : vector<1x64xf32> to vector<32x64xf32>
      %44 = arith.mulf %41, %43 : vector<32x64xf32>
      %c0_21 = arith.constant 0 : index
      %c0_22 = arith.constant 0 : index
      %45 = vector.load %arg4[%c0_21, %c0_22] : memref<1x64xf32, #tpu.memory_space<vmem>>, vector<1x64xf32>
      %46 = vector.broadcast %45 : vector<1x64xf32> to vector<32x64xf32>
      %47 = arith.addf %44, %46 : vector<32x64xf32>
      %48 = arith.truncf %47 : vector<32x64xf32> to vector<32x64xbf16>
      %c0_23 = arith.constant 0 : index
      %c0_24 = arith.constant 0 : index
      %49 = vector.load %arg8[%c0_23, %c0_24] : memref<32x64xbf16, #tpu.memory_space<vmem>>, vector<32x64xbf16>
      tpu.vector_store %arg8[%c0_23, %c0_24], %48 {strides = array<i32>} : memref<32x64xbf16, #tpu.memory_space<vmem>>, vector<32x64xbf16>,
    } else {
    }
    %c0 = arith.constant 0 : index
    %c0_1 = arith.constant 0 : index
    %3 = vector.load %arg8[%c0, %c0_1] : memref<32x64xbf16, #tpu.memory_space<vmem>>, vector<32x64xbf16>
    %c0_2 = arith.constant 0 : index
    %c0_3 = arith.constant 0 : index
    %4 = vector.load %arg5[%c0_2, %c0_3] : memref<64x256xbf16, #tpu.memory_space<vmem>>, vector<64x256xbf16>
    %cst = arith.constant dense<0.000000e+00> : vector<32x256xf32>
    %5 = tpu.matmul %3, %4, %cst {dimension_numbers = #tpu.dot_dimension_numbers<[1], [0], [0], [1], [0, 0, 1, 1], [], []>} : vector<32x64xbf16>, vector<64x256xbf16>, vector<32x256xf32> -> vector<32x256xf32>
    %c0_4 = arith.constant 0 : index
    %c0_5 = arith.constant 0 : index
    %6 = vector.load %arg6[%c0_4, %c0_5] : memref<1x256xf32, #tpu.memory_space<vmem>>, vector<1x256xf32>
    %7 = vector.broadcast %6 : vector<1x256xf32> to vector<32x256xf32>
    %8 = arith.addf %5, %7 : vector<32x256xf32>
    %cst_6 = arith.constant 5.000000e-01 : f32
    %9 = vector.broadcast %cst_6 : f32 to vector<32x256xf32>
    %10 = arith.mulf %9, %8 : vector<32x256xf32>
    %11 = arith.mulf %8, %8 : vector<32x256xf32>
    %12 = arith.mulf %11, %8 : vector<32x256xf32>
    %cst_7 = arith.constant 4.471500e-02 : f32
    %13 = vector.broadcast %cst_7 : f32 to vector<32x256xf32>
    %14 = arith.mulf %13, %12 : vector<32x256xf32>
    %15 = arith.addf %8, %14 : vector<32x256xf32>
    %cst_8 = arith.constant 0.797884583 : f32
    %16 = vector.broadcast %cst_8 : f32 to vector<32x256xf32>
    %17 = arith.mulf %16, %15 : vector<32x256xf32>
    %18 = math.tanh %17 : vector<32x256xf32>
    %cst_9 = arith.constant 1.000000e+00 : f32
    %19 = vector.broadcast %cst_9 : f32 to vector<32x256xf32>
    %20 = arith.addf %19, %18 : vector<32x256xf32>
    %21 = arith.mulf %10, %20 : vector<32x256xf32>
    %22 = arith.truncf %21 : vector<32x256xf32> to vector<32x256xbf16>
    %c0_10 = arith.constant 0 : index
    %c0_11 = arith.constant 0 : index
    %23 = vector.load %arg7[%c0_10, %c0_11] : memref<32x256xbf16, #tpu.memory_space<vmem>>, vector<32x256xbf16>
    tpu.vector_store %arg7[%c0_10, %c0_11], %22 {strides = array<i32>} : memref<32x256xbf16, #tpu.memory_space<vmem>>, vector<32x256xbf16>,
    return
  }
  func.func @transform_0(%arg0: i32, %arg1: i32) -> (i32, i32) {
    %c0_i32 = arith.constant 0 : i32
    %c0_i32_0 = arith.constant 0 : i32
    return %arg0, %c0_i32 : i32, i32
  }
  func.func @transform_1(%arg0: i32, %arg1: i32) -> (i32, i32) {
    %c0_i32 = arith.constant 0 : i32
    %c0_i32_0 = arith.constant 0 : i32
    %c0_i32_1 = arith.constant 0 : i32
    return %c0_i32, %c0_i32_0 : i32, i32
  }
  func.func @transform_2(%arg0: i32, %arg1: i32) -> (i32, i32) {
    %c0_i32 = arith.constant 0 : i32
    %c0_i32_0 = arith.constant 0 : i32
    %c0_i32_1 = arith.constant 0 : i32
    return %c0_i32, %c0_i32_0 : i32, i32
  }
  func.func @transform_3(%arg0: i32, %arg1: i32) -> (i32, i32) {
    %c0_i32 = arith.constant 0 : i32
    %c0_i32_0 = arith.constant 0 : i32
    return %c0_i32, %arg1 : i32, i32
  }
  func.func @transform_4(%arg0: i32, %arg1: i32) -> (i32, i32) {
    %c0_i32 = arith.constant 0 : i32
    %c0_i32_0 = arith.constant 0 : i32
    return %c0_i32, %arg1 : i32, i32
  }
  func.func @transform_5(%arg0: i32, %arg1: i32) -> (i32, i32) {
    %c0_i32 = arith.constant 0 : i32
    return %arg0, %arg1 : i32, i32
  }
}

module attributes {stable_mosaic.version = 11 : i64} {
  func.func @_ln_matmul_kernel(%arg0: i32, %arg1: i32, %arg2: memref<8x64xbf16, #tpu.memory_space<vmem>>, %arg3: memref<1x64xf32, #tpu.memory_space<vmem>>, %arg4: memref<1x64xf32, #tpu.memory_space<vmem>>, %arg5: memref<64x128xbf16, #tpu.memory_space<vmem>>, %arg6: memref<1x128xf32, #tpu.memory_space<vmem>>, %arg7: memref<8x128xf32, #tpu.memory_space<vmem>>, %arg8: memref<8x64xbf16, #tpu.memory_space<vmem>>) attributes {dimension_semantics = [#tpu.dimension_semantics<parallel>, #tpu.dimension_semantics<arbitrary>], iteration_bounds = array<i64: 1, 1>, scalar_prefetch = 0 : i64, scratch_operands = 1 : i64, tpu.core_type = #tpu.core_type<tc>, window_params = [{transform_indices = @transform_0, window_bounds = array<i64: 8, 64>}, {pipeline_mode = #tpu.pipeline_mode<synchronous>, transform_indices = @transform_1, window_bounds = array<i64: 1, 64>}, {pipeline_mode = #tpu.pipeline_mode<synchronous>, transform_indices = @transform_2, window_bounds = array<i64: 1, 64>}, {transform_indices = @transform_3, window_bounds = array<i64: 64, 128>}, {transform_indices = @transform_4, window_bounds = array<i64: 1, 128>}, {transform_indices = @transform_5, window_bounds = array<i64: 8, 128>}]} {
    %c0_i32 = arith.constant 0 : i32
    %0 = arith.cmpi eq, %arg1, %c0_i32 : i32
    %1 = arith.extui %0 : i1 to i32
    %c0_i32_0 = arith.constant 0 : i32
    %2 = arith.cmpi ne, %1, %c0_i32_0 : i32
    scf.if %2 {
      %c0_8 = arith.constant 0 : index
      %c0_9 = arith.constant 0 : index
      %10 = vector.load %arg2[%c0_8, %c0_9] : memref<8x64xbf16, #tpu.memory_space<vmem>>, vector<8x64xbf16>
      %11 = arith.extf %10 : vector<8x64xbf16> to vector<8x64xf32>
      %cst_10 = arith.constant dense<0.000000e+00> : vector<8xf32>
      %12 = vector.multi_reduction <add>, %11, %cst_10 [1] : vector<8x64xf32> to vector<8xf32>
      %13 = vector.shape_cast %12 : vector<8xf32> to vector<8x1xf32>
      %cst_11 = arith.constant 6.400000e+01 : f32
      %14 = vector.broadcast %cst_11 : f32 to vector<8x1xf32>
      %15 = arith.divf %13, %14 : vector<8x1xf32>
      %16 = vector.broadcast %15 : vector<8x1xf32> to vector<8x64xf32>
      %17 = arith.subf %11, %16 : vector<8x64xf32>
      %18 = arith.mulf %17, %17 : vector<8x64xf32>
      %cst_12 = arith.constant dense<0.000000e+00> : vector<8xf32>
      %19 = vector.multi_reduction <add>, %18, %cst_12 [1] : vector<8x64xf32> to vector<8xf32>
      %20 = vector.shape_cast %19 : vector<8xf32> to vector<8x1xf32>
      %cst_13 = arith.constant 6.400000e+01 : f32
      %21 = vector.broadcast %cst_13 : f32 to vector<8x1xf32>
      %22 = arith.divf %20, %21 : vector<8x1xf32>
      %cst_14 = arith.constant 9.99999974E-6 : f32
      %23 = vector.broadcast %cst_14 : f32 to vector<8x1xf32>
      %24 = arith.addf %22, %23 : vector<8x1xf32>
      %25 = math.rsqrt %24 : vector<8x1xf32>
      %26 = vector.broadcast %25 : vector<8x1xf32> to vector<8x64xf32>
      %27 = arith.mulf %17, %26 : vector<8x64xf32>
      %c0_15 = arith.constant 0 : index
      %c0_16 = arith.constant 0 : index
      %28 = vector.load %arg3[%c0_15, %c0_16] : memref<1x64xf32, #tpu.memory_space<vmem>>, vector<1x64xf32>
      %29 = vector.broadcast %28 : vector<1x64xf32> to vector<8x64xf32>
      %30 = arith.mulf %27, %29 : vector<8x64xf32>
      %c0_17 = arith.constant 0 : index
      %c0_18 = arith.constant 0 : index
      %31 = vector.load %arg4[%c0_17, %c0_18] : memref<1x64xf32, #tpu.memory_space<vmem>>, vector<1x64xf32>
      %32 = vector.broadcast %31 : vector<1x64xf32> to vector<8x64xf32>
      %33 = arith.addf %30, %32 : vector<8x64xf32>
      %34 = arith.truncf %33 : vector<8x64xf32> to vector<8x64xbf16>
      %c0_19 = arith.constant 0 : index
      %c0_20 = arith.constant 0 : index
      %35 = vector.load %arg8[%c0_19, %c0_20] : memref<8x64xbf16, #tpu.memory_space<vmem>>, vector<8x64xbf16>
      tpu.vector_store %arg8[%c0_19, %c0_20], %34 {strides = array<i32>} : memref<8x64xbf16, #tpu.memory_space<vmem>>, vector<8x64xbf16>,
    } else {
    }
    %c0 = arith.constant 0 : index
    %c0_1 = arith.constant 0 : index
    %3 = vector.load %arg8[%c0, %c0_1] : memref<8x64xbf16, #tpu.memory_space<vmem>>, vector<8x64xbf16>
    %c0_2 = arith.constant 0 : index
    %c0_3 = arith.constant 0 : index
    %4 = vector.load %arg5[%c0_2, %c0_3] : memref<64x128xbf16, #tpu.memory_space<vmem>>, vector<64x128xbf16>
    %cst = arith.constant dense<0.000000e+00> : vector<8x128xf32>
    %5 = tpu.matmul %3, %4, %cst {dimension_numbers = #tpu.dot_dimension_numbers<[1], [0], [0], [1], [0, 0, 1, 1], [], []>} : vector<8x64xbf16>, vector<64x128xbf16>, vector<8x128xf32> -> vector<8x128xf32>
    %c0_4 = arith.constant 0 : index
    %c0_5 = arith.constant 0 : index
    %6 = vector.load %arg6[%c0_4, %c0_5] : memref<1x128xf32, #tpu.memory_space<vmem>>, vector<1x128xf32>
    %7 = vector.broadcast %6 : vector<1x128xf32> to vector<8x128xf32>
    %8 = arith.addf %5, %7 : vector<8x128xf32>
    %c0_6 = arith.constant 0 : index
    %c0_7 = arith.constant 0 : index
    %9 = vector.load %arg7[%c0_6, %c0_7] : memref<8x128xf32, #tpu.memory_space<vmem>>, vector<8x128xf32>
    tpu.vector_store %arg7[%c0_6, %c0_7], %8 {strides = array<i32>} : memref<8x128xf32, #tpu.memory_space<vmem>>, vector<8x128xf32>,
    return
  }
  func.func @transform_0(%arg0: i32, %arg1: i32) -> (i32, i32) {
    %c0_i32 = arith.constant 0 : i32
    %c0_i32_0 = arith.constant 0 : i32
    return %arg0, %c0_i32 : i32, i32
  }
  func.func @transform_1(%arg0: i32, %arg1: i32) -> (i32, i32) {
    %c0_i32 = arith.constant 0 : i32
    %c0_i32_0 = arith.constant 0 : i32
    %c0_i32_1 = arith.constant 0 : i32
    return %c0_i32, %c0_i32_0 : i32, i32
  }
  func.func @transform_2(%arg0: i32, %arg1: i32) -> (i32, i32) {
    %c0_i32 = arith.constant 0 : i32
    %c0_i32_0 = arith.constant 0 : i32
    %c0_i32_1 = arith.constant 0 : i32
    return %c0_i32, %c0_i32_0 : i32, i32
  }
  func.func @transform_3(%arg0: i32, %arg1: i32) -> (i32, i32) {
    %c0_i32 = arith.constant 0 : i32
    %c0_i32_0 = arith.constant 0 : i32
    return %c0_i32, %arg1 : i32, i32
  }
  func.func @transform_4(%arg0: i32, %arg1: i32) -> (i32, i32) {
    %c0_i32 = arith.constant 0 : i32
    %c0_i32_0 = arith.constant 0 : i32
    return %c0_i32, %arg1 : i32, i32
  }
  func.func @transform_5(%arg0: i32, %arg1: i32) -> (i32, i32) {
    %c0_i32 = arith.constant 0 : i32
    return %arg0, %arg1 : i32, i32
  }
}

</mosaic_0001>

<llo_original>
// kernel: _lambda_.13
$region0: #{_lambda_.13}
  #allocation0 [shape = 'u32[]', space=smem, size = 0x4, offset = 0x4, fixed_abs, tag = 'smem constant byte address 0x4 - core index']
  #allocation1 [shape = 'u32[144,128]{1,0:T(1,128)}', space=vmem, size = 0x12000, scoped, tag = 'internal scratch']
  #allocation2 [shape = 'bf16[32,64]{1,0:T(16,128)(2,1)}', space=vmem, size = 0x2000, scoped, tag = 'scratch operand']
  %s0 = inlined_call_operand.vmem [shape: bf16[32,64], index: 0, kind: input, shape index: {}]
  %s1 = inlined_call_operand.vmem [shape: f32[1,64], index: 1, kind: input, shape index: {}]
  %s2 = inlined_call_operand.vmem [shape: f32[1,64], index: 2, kind: input, shape index: {}]
  %s3 = inlined_call_operand.vmem [shape: bf16[64,192], index: 3, kind: input, shape index: {}]
  %s4 = inlined_call_operand.vmem [shape: f32[1,192], index: 4, kind: input, shape index: {}]
  %s5 = inlined_call_operand.vmem [shape: bf16[32,192], index: 5, kind: output, shape index: {}]
  %s6 = sld [smem:[#allocation0]]
  $region34: #{_lambda_.13} parent=0
    _
  %s8 = ssub.s32 1, %s6
  %s9 = scalar_select 0, %s8, %s6
  // Predicated region
  $region2: #{_lambda_.13} parent=0 // pred_check
    _
  $region3: #{_lambda_.13} parent=0 // pred_check_branch
    %11 = sbr.rel (0) target = $region5
  $region4: #{_lambda_.13} parent=0 // pred_region
    _
  $region5: #{_lambda_.13} parent=0 // pred_fallthru
    _
  // Predicated region
  $region6: #{_lambda_.13} parent=0 // pred_check
    _
  $region7: #{_lambda_.13} parent=0 // pred_check_branch
    %13 = sbr.rel (0) target = $region9
  $region8: #{_lambda_.13} parent=0 // pred_region
    _
  $region9: #{_lambda_.13} parent=0 // pred_fallthru
    _
  // Predicated region
  $region10: #{_lambda_.13} parent=0 // pred_check
    _
  $region11: #{_lambda_.13} parent=0 // pred_check_branch
    %15 = sbr.rel (0) target = $region13
  $region12: #{_lambda_.13} parent=0 // pred_region
    _
  $region13: #{_lambda_.13} parent=0 // pred_fallthru
    _
  // Predicated region
  $region14: #{_lambda_.13} parent=0 // pred_check
    _
  $region15: #{_lambda_.13} parent=0 // pred_check_branch
    %17 = sbr.rel (0) target = $region17
  $region16: #{_lambda_.13} parent=0 // pred_region
    _
  $region17: #{_lambda_.13} parent=0 // pred_fallthru
    _
  // Predicated region
  $region18: #{_lambda_.13} parent=0 // pred_check
    _
  $region19: #{_lambda_.13} parent=0 // pred_check_branch
    %19 = sbr.rel (0) target = $region21
  $region20: #{_lambda_.13} parent=0 // pred_region
    _
  $region21: #{_lambda_.13} parent=0 // pred_fallthru
    _
  %p21 = scmp.eq.s32.totalorder 0, 0
  // Predicated region
  $region22: #{_lambda_.13} parent=0 // pred_check
    %p22 = pneg %p21
  $region23: #{_lambda_.13} parent=0 // pred_check_branch
    %24 = sbr.rel (%p22) target = $region25
  $region24: #{_lambda_.13} parent=0 // pred_region
    %v25 = vld [vmem:[%s0] sm:$0xf]
    %v26 = vld [vmem:[%s0 + $0x4] sm:$0xf]
    %v27 = vld [vmem:[%s0 + $0x8] sm:$0xf]
    %v28 = vld [vmem:[%s0 + $0xc] sm:$0xf]
    %v29 = vunpack.c.l.bf16 %v25
    %v30 = vunpack.c.l.bf16 %v26
    %v31 = vunpack.c.l.bf16 %v27
    %v32 = vunpack.c.l.bf16 %v28
    %vm33 = vcmask 523264
    %v34 = vsel %vm33, %v29, 0.0
    %35 = vadd.xlane.f32.xlu0 %v34
    %v36 = vpop.xlane.xlu0 %35
    %v37 = vsel %vm33, %v30, 0.0
    %38 = vadd.xlane.f32.xlu0 %v37
    %v39 = vpop.xlane.xlu0 %38
    %v40 = vsel %vm33, %v31, 0.0
    %41 = vadd.xlane.f32.xlu0 %v40
    %v42 = vpop.xlane.xlu0 %41
    %v43 = vsel %vm33, %v32, 0.0
    %44 = vadd.xlane.f32.xlu0 %v43
    %v45 = vpop.xlane.xlu0 %44
    %v46 = vrcp.pop 64.0
    %v47 = vmul.f32 %v36, %v46
    %v48 = vmul.f32 %v39, %v46
    %v49 = vmul.f32 %v42, %v46
    %v50 = vmul.f32 %v45, %v46
    %v51 = vsub.f32 %v29, %v47
    %v52 = vsub.f32 %v30, %v48
    %v53 = vsub.f32 %v31, %v49
    %v54 = vsub.f32 %v32, %v50
    %v55 = vmul.f32 %v51, %v51
    %v56 = vmul.f32 %v52, %v52
    %v57 = vmul.f32 %v53, %v53
    %v58 = vmul.f32 %v54, %v54
    %v59 = vsel %vm33, %v55, 0.0
    %60 = vadd.xlane.f32.xlu0 %v59
    %v61 = vpop.xlane.xlu0 %60
    %v62 = vsel %vm33, %v56, 0.0
    %63 = vadd.xlane.f32.xlu0 %v62
    %v64 = vpop.xlane.xlu0 %63
    %v65 = vsel %vm33, %v57, 0.0
    %66 = vadd.xlane.f32.xlu0 %v65
    %v67 = vpop.xlane.xlu0 %66
    %v68 = vsel %vm33, %v58, 0.0
    %69 = vadd.xlane.f32.xlu0 %v68
    %v70 = vpop.xlane.xlu0 %69
    %v71 = vmul.f32 %v61, %v46
    %v72 = vmul.f32 %v64, %v46
    %v73 = vmul.f32 %v67, %v46
    %v74 = vmul.f32 %v70, %v46
    %v75 = vadd.f32 %v71, 1e-05
    %v76 = vadd.f32 %v72, 1e-05
    %v77 = vadd.f32 %v73, 1e-05
    %v78 = vadd.f32 %v74, 1e-05
    %v79 = vrsqrt.pop %v75
    %v80 = vrsqrt.pop %v76
    %v81 = vrsqrt.pop %v77
    %v82 = vrsqrt.pop %v78
    %v83 = vmul.f32 %v51, %v79
    %v84 = vmul.f32 %v52, %v80
    %v85 = vmul.f32 %v53, %v81
    %v86 = vmul.f32 %v54, %v82
    %v87 = vld [vmem:[%s1] sm:$0x1]
    %v89 = vlaneseq
    %v90 = vshrl.u32 %v89, 7
    %v91 = vsub.s32 0, %v90
    %v92 = vrot.slane %v87, %v91
    %v94 = vmul.f32 %v83, %v92
    %v95 = vmul.f32 %v84, %v92
    %v96 = vmul.f32 %v85, %v92
    %v97 = vmul.f32 %v86, %v92
    %v98 = vld [vmem:[%s2] sm:$0x1]
    %v100 = vlaneseq
    %v101 = vshrl.u32 %v100, 7
    %v102 = vsub.s32 0, %v101
    %v103 = vrot.slane %v98, %v102
    %v105 = vadd.f32 %v94, %v103
    %v106 = vadd.f32 %v95, %v103
    %v107 = vadd.f32 %v96, %v103
    %v108 = vadd.f32 %v97, %v103
    %v109 = vpack.c.bf16 %v106, %v105
    %v110 = vpack.c.bf16 %v108, %v107
    %111 = vst.msk [vmem:[#allocation2] sm:$0xff] %vm33, %v109
    %112 = vst.msk [vmem:[#allocation2 + $0x8] sm:$0xff] %vm33, %v110
  $region25: #{_lambda_.13} parent=0 // pred_fallthru
    _
  %v113 = vld [vmem:[#allocation2] sm:$0xff]
  %v114 = vld [vmem:[#allocation2 + $0x8] sm:$0xff]
  %v115 = vld [vmem:[%s3] sm:$0xff]
  %v116 = vld [vmem:[%s3 + $0x8] sm:$0xff]
  %v117 = vld [vmem:[%s3 + $0x10] sm:$0xff]
  %v118 = vld [vmem:[%s3 + $0x18] sm:$0xff]
  %v119 = vld [vmem:[%s3 + $0x20] sm:$0xff]
  %v120 = vld [vmem:[%s3 + $0x28] sm:$0xff]
  %v121 = vld [vmem:[%s3 + $0x30] sm:$0xff]
  %v122 = vld [vmem:[%s3 + $0x38] sm:$0xff]
  %v123 = vld [vmem:[%s4] sm:$0x3]
  %v125 = vlaneseq
  %v126 = vshrl.u32 %v125, 7
  %v127 = vsub.s32 0, %v126
  %v128 = vrot.slane %v123, %v127
  %v129 = vlaneseq
  %v130 = vshrl.u32 %v129, 7
  %v131 = vsub.s32 1, %v130
  %v132 = vrot.slane %v123, %v131
  %v143 = vunpack.c.l.b16 %v115
  %v144 = vunpack.c.h.b16 %v115
  %v145 = vunpack.c.l.b16 %v116
  %v146 = vunpack.c.h.b16 %v116
  %v147 = vunpack.c.l.b16 %v117
  %v148 = vunpack.c.h.b16 %v117
  %v149 = vunpack.c.l.b16 %v118
  %v150 = vunpack.c.h.b16 %v118
  %v151 = vunpack.c.l.b16 %v119
  %v152 = vunpack.c.h.b16 %v119
  %v153 = vunpack.c.l.b16 %v120
  %v154 = vunpack.c.h.b16 %v120
  %v155 = vunpack.c.l.b16 %v121
  %v156 = vunpack.c.h.b16 %v121
  %v157 = vunpack.c.l.b16 %v122
  %v158 = vunpack.c.h.b16 %v122
  %v159 = vpack.c.b16 %v145, %v143
  %v160 = vpack.c.b16 %v146, %v144
  %v161 = vpack.c.b16 %v149, %v147
  %v162 = vpack.c.b16 %v150, %v148
  %v163 = vpack.c.b16 %v153, %v151
  %v164 = vpack.c.b16 %v154, %v152
  %v165 = vpack.c.b16 %v157, %v155
  %v166 = vpack.c.b16 %v158, %v156
  %vm175 = vcmask 523264
  %v177 = vsel %vm175, %v113, 0
  %v180 = vsel %vm175, %v114, 0
  %182 = vmatprep.subr.bf16.mxu0 %v160
  %183 = vmatpush1.bf16.msra.mxu0 %v159
  %184 = vmatprep.subr.bf16.mxu0 %v162
  %185 = vmatpush1.bf16.msra.mxu0 %v161
  %186 = vmatprep.subr.bf16.mxu0 %v164
  %187 = vmatpush1.bf16.msra.mxu0 %v163
  %188 = vmatprep.subr.bf16.mxu0 %v166
  %189 = vmatpush1.bf16.msra.mxu0 %v165
  %190 = vmatprep.subr.bf16.mxu0 0
  %191 = vmatpush1.bf16.msra.mxu0 0
  %192 = vmatprep.subr.bf16.mxu0 0
  %193 = vmatpush1.bf16.msra.mxu0 0
  %194 = vmatprep.subr.bf16.mxu0 0
  %195 = vmatpush1.bf16.msra.mxu0 0
  %196 = vmatprep.subr.bf16.mxu0 0
  %197 = vmatpush1.bf16.msra.mxu0 0
  %198 = vmatprep.subr.bf16.mxu0 0
  %199 = vmatpush1.bf16.msra.mxu0 0
  %200 = vmatprep.subr.bf16.mxu0 0
  %201 = vmatpush1.bf16.msra.mxu0 0
  %202 = vmatprep.subr.bf16.mxu0 0
  %203 = vmatpush1.bf16.msra.mxu0 0
  %204 = vmatprep.subr.bf16.mxu0 0
  %205 = vmatpush1.bf16.msra.mxu0 0
  %206 = vmatprep.subr.bf16.mxu0 0
  %207 = vmatpush1.bf16.msra.mxu0 0
  %208 = vmatprep.subr.bf16.mxu0 0
  %209 = vmatpush1.bf16.msra.mxu0 0
  %210 = vmatprep.subr.bf16.mxu0 0
  %211 = vmatpush1.bf16.msra.mxu0 0
  %212 = vmatprep.subr.bf16.mxu0 0
  %213 = vmatpush1.bf16.msra.mxu0 0
  %214 = vmatprep.mubr.bf16.mxu0 0
  %215 = vmatmul.mubr.bf16.gmra.mrb[0].mxu0 %v177
  %v216 = vpop.f32.mrb[0].mxu0
  %v217 = vadd.f32 %v128, %v216
  %v218 = vpop.f32.mrb[0].mxu0
  %v219 = vadd.f32 %v132, %v218
  %v220 = vpop.f32.mrb[0].mxu0
  %v221 = vadd.f32 %v128, %v220
  %v222 = vpop.f32.mrb[0].mxu0
  %v223 = vadd.f32 %v132, %v222
  %224 = vmatprep.mubr.bf16.mxu0 0
  %225 = vmatmul.mubr.bf16.gmra.mrb[0].mxu0 %v180
  %v226 = vpop.f32.mrb[0].mxu0
  %v227 = vadd.f32 %v128, %v226
  %v228 = vpop.f32.mrb[0].mxu0
  %v229 = vadd.f32 %v132, %v228
  %v230 = vpop.f32.mrb[0].mxu0
  %v231 = vadd.f32 %v128, %v230
  %v232 = vpop.f32.mrb[0].mxu0
  %v233 = vadd.f32 %v132, %v232
  %234 = vdwg.mxu0
  %v235 = vpack.c.bf16 %v221, %v217
  %v236 = vpack.c.bf16 %v223, %v219
  %v237 = vpack.c.bf16 %v231, %v227
  %v238 = vpack.c.bf16 %v233, %v229
  %v243 = vunpack.c.l.b16 %v235
  %v244 = vunpack.c.l.b16 %v236
  %v245 = vunpack.c.h.b16 %v235
  %v246 = vunpack.c.h.b16 %v236
  %v247 = vunpack.c.l.b16 %v237
  %v248 = vunpack.c.l.b16 %v238
  %v249 = vunpack.c.h.b16 %v237
  %v250 = vunpack.c.h.b16 %v238
  %v251 = vpack.c.b16 %v244, %v243
  %v252 = vpack.c.b16 %v246, %v245
  %v253 = vpack.c.b16 %v248, %v247
  %v254 = vpack.c.b16 %v250, %v249
  %vm259 = vcmask 1043456
  %vm260 = vcmask 523268
  %vm261 = vmor %vm260, %vm259
  %262 = vst.msk [vmem:[%s5] sm:$0xff] %vm261, %v251
  %263 = vst.msk [vmem:[%s5 + $0x8] sm:$0xff] %vm261, %v252
  %264 = vst.msk [vmem:[%s5 + $0x10] sm:$0xff] %vm261, %v253
  %265 = vst.msk [vmem:[%s5 + $0x18] sm:$0xff] %vm261, %v254
  // Predicated region
  $region26: #{_lambda_.13} parent=0 // pred_check
    _
  $region27: #{_lambda_.13} parent=0 // pred_check_branch
    %267 = sbr.rel (0) target = $region29
  $region28: #{_lambda_.13} parent=0 // pred_region
    _
  $region29: #{_lambda_.13} parent=0 // pred_fallthru
    _
  // Predicated region
  $region30: #{_lambda_.13} parent=0 // pred_check
    _
  $region31: #{_lambda_.13} parent=0 // pred_check_branch
    %269 = sbr.rel (0) target = $region33
  $region32: #{_lambda_.13} parent=0 // pred_region
    _
  $region33: #{_lambda_.13} parent=0 // pred_fallthru
    _

// kernel: _lambda_.12
$region0: #{_lambda_.12}
  #allocation0 [shape = 'u32[]', space=smem, size = 0x4, offset = 0x4, fixed_abs, tag = 'smem constant byte address 0x4 - core index']
  #allocation1 [shape = 'u32[144,128]{1,0:T(1,128)}', space=vmem, size = 0x12000, scoped, tag = 'internal scratch']
  %s0 = inlined_call_operand.vmem [shape: bf16[2,10,16], index: 0, kind: input, shape index: {}]
  %s1 = inlined_call_operand.vmem [shape: bf16[48,64], index: 1, kind: input, shape index: {}]
  %s2 = inlined_call_operand.vmem [shape: f32[2,8,64], index: 2, kind: output, shape index: {}]
  %s3 = sld [smem:[#allocation0]]
  $region41: #{_lambda_.12} parent=0
    _
  %s5 = ssub.s32 1, %s3
  %s6 = scalar_select 0, %s5, %s3
  loop: start=0, step=1, limit=4
  $region2: #{_lambda_.12} parent=0 // loop_pre_header
    _
  $region3: #{_lambda_.12} parent=0 // loop_header
    %s8 = sphi 0, %s12
    %p9 = scmp.ge.s32.totalorder %s8, 4
    %s18 = sphi 0, %s20
    %s21 = sphi 0, %s18
    %s22 = sphi 0, %s21
    %s38 = sphi 0, %s22
    %s42 = sphi 0, %s42
    %s44 = sphi 0, %s42
    %s45 = sphi 0, %s44
    %s59 = sphi 0, %s45
    %s65 = sphi 0, %s67
    %s68 = sphi 0, %s65
    %s69 = sphi 0, %s68
    %s85 = sphi 0, %s69
  $region4: #{_lambda_.12} parent=0 // loop_header_branch
    %11 = sbr.rel (%p9) target = $region8
  $region5: #{_lambda_.12} parent=0 // loop_body
    %s13 = ssub.s32 %s8, 1
    %s14 = ssub.s32 %s8, 2
    %s15 = sadd.s32 %s8, 1
    %s16 = ssub.s32 %s8, %s15
    %p17 = scmp.eq.s32.totalorder %s16, 0
    %s19 = sadd.s32 %s18, 1
    %s20 = scalar_select %p17, %s18, %s19
    %p23 = pneg %p17
    %p24 = scmp.eq.s32.totalorder %s8, 1
    %p25 = por %p23, %p24
    %p26 = scmp.ne.s32.totalorder %s18, %s21
    %p27 = scmp.eq.s32.totalorder %s8, 0
    %p28 = por %p26, %p27
    %p29 = scmp.ne.s32.totalorder %s18, %s21
    %p30 = scmp.eq.s32.totalorder %s13, 1
    %p31 = por %p29, %p30
    %p32 = scmp.ne.s32.totalorder %s21, %s22
    %p33 = scmp.eq.s32.totalorder %s13, 0
    %p34 = por %p32, %p33
    %p35 = scmp.ne.s32.totalorder %s21, %s22
    %p36 = scmp.eq.s32.totalorder %s14, 1
    %p37 = por %p35, %p36
    %p39 = scmp.ne.s32.totalorder %s22, %s38
    %p40 = scmp.eq.s32.totalorder %s14, 0
    %p41 = por %p39, %p40
    %s43 = sadd.s32 %s42, 1
    %p46 = scmp.eq.s32.totalorder %s8, 1
    %p47 = scmp.ne.s32.totalorder %s42, %s44
    %p48 = scmp.eq.s32.totalorder %s8, 0
    %p49 = por %p47, %p48
    %p50 = scmp.ne.s32.totalorder %s42, %s44
    %p51 = scmp.eq.s32.totalorder %s13, 1
    %p52 = por %p50, %p51
    %p53 = scmp.ne.s32.totalorder %s44, %s45
    %p54 = scmp.eq.s32.totalorder %s13, 0
    %p55 = por %p53, %p54
    %p56 = scmp.ne.s32.totalorder %s44, %s45
    %p57 = scmp.eq.s32.totalorder %s14, 1
    %p58 = por %p56, %p57
    %p60 = scmp.ne.s32.totalorder %s45, %s59
    %p61 = scmp.eq.s32.totalorder %s14, 0
    %p62 = por %p60, %p61
    %s63 = ssub.s32 %s8, %s15
    %p64 = scmp.eq.s32.totalorder %s63, 0
    %s66 = sadd.s32 %s65, 1
    %s67 = scalar_select %p64, %s65, %s66
    %p70 = pneg %p64
    %p71 = scmp.eq.s32.totalorder %s8, 1
    %p72 = por %p70, %p71
    %p73 = scmp.ne.s32.totalorder %s65, %s68
    %p74 = scmp.eq.s32.totalorder %s8, 0
    %p75 = por %p73, %p74
    %p76 = scmp.ne.s32.totalorder %s65, %s68
    %p77 = scmp.eq.s32.totalorder %s13, 1
    %p78 = por %p76, %p77
    %p79 = scmp.ne.s32.totalorder %s68, %s69
    %p80 = scmp.eq.s32.totalorder %s13, 0
    %p81 = por %p79, %p80
    %p82 = scmp.ne.s32.totalorder %s68, %s69
    %p83 = scmp.eq.s32.totalorder %s14, 1
    %p84 = por %p82, %p83
    %p86 = scmp.ne.s32.totalorder %s69, %s85
    %p87 = scmp.eq.s32.totalorder %s14, 0
    %p88 = por %p86, %p87
    %p89 = scmp.le.s32.totalorder 1, %s8
    %p90 = scmp.lt.s32.totalorder %s8, 3
    %p91 = pnand %p89, %p90
    %p92 = pneg %p91
    // Predicated region
    $region9: #{_lambda_.12} parent=5 // pred_check
      _
    $region10: #{_lambda_.12} parent=5 // pred_check_branch
      %94 = sbr.rel (%p91) target = $region12
    $region11: #{_lambda_.12} parent=5 // pred_region
      %s95 = ssub.s32 %s8, 1
      // Predicated region
      $region13: #{_lambda_.12} parent=11 // pred_check
        %p96 = pneg %p55
      $region14: #{_lambda_.12} parent=11 // pred_check_branch
        %98 = sbr.rel (%p96) target = $region16
      $region15: #{_lambda_.12} parent=11 // pred_region
        _
      $region16: #{_lambda_.12} parent=11 // pred_fallthru
        _
    $region12: #{_lambda_.12} parent=5 // pred_fallthru
      _
    %p99 = scmp.lt.s32.totalorder %s8, 2
    // Predicated region
    $region17: #{_lambda_.12} parent=5 // pred_check
      %p100 = pneg %p99
    $region18: #{_lambda_.12} parent=5 // pred_check_branch
      %102 = sbr.rel (%p100) target = $region20
    $region19: #{_lambda_.12} parent=5 // pred_region
      // Predicated region
      $region21: #{_lambda_.12} parent=19 // pred_check
        %p103 = pneg %p28
      $region22: #{_lambda_.12} parent=19 // pred_check_branch
        %105 = sbr.rel (%p103) target = $region24
      $region23: #{_lambda_.12} parent=19 // pred_region
        %p106 = scmp.lt.s32.totalorder %s8, 1
        %s107 = scalar_select %p106, %s8, 1
        %s108 = smul.addr %s107, 2
        %s109 = smul.addr %s108, 4
        %s110 = scalar_lea.vmem %s0, %s109
      $region24: #{_lambda_.12} parent=19 // pred_fallthru
        _
    $region20: #{_lambda_.12} parent=5 // pred_fallthru
      _
    %p111 = scmp.le.s32.totalorder 1, %s8
    %p112 = scmp.lt.s32.totalorder %s8, 3
    %p113 = pnand %p111, %p112
    %p114 = pneg %p113
    // Predicated region
    $region25: #{_lambda_.12} parent=5 // pred_check
      _
    $region26: #{_lambda_.12} parent=5 // pred_check_branch
      %116 = sbr.rel (%p113) target = $region28
    $region27: #{_lambda_.12} parent=5 // pred_region
      %s117 = ssub.s32 %s8, 1
      %p118 = scmp.lt.s32.totalorder %s13, 1
      %s119 = scalar_select %p118, %s13, 1
      %s120 = smul.addr %s119, 2
      %s121 = smul.addr %s120, 4
      %s122 = scalar_lea.vmem %s0, %s121
      %p123 = pneg %p34
      %p124 = pneg %p31
      %p125 = pneg %p55
      %p126 = pneg %p52
      %p127 = pneg %p81
      %p128 = pneg %p78
      %p129 = scmp.lt.s32.totalorder %s13, 1
      %s130 = scalar_select %p129, %s13, 1
      %s131 = smul.addr %s130, 8
      %s132 = scalar_lea.vmem %s2, %s131
      %p133 = scmp.lt.s32.totalorder %s13, 1
      %s134 = scalar_select %p133, %s13, 1
      %s135 = smul.addr %s134, 2
      %s136 = smul.addr %s135, 4
      %s137 = scalar_lea.vmem %s0, %s136
      %p138 = scmp.lt.s32.totalorder %s13, 1
      %s139 = scalar_select %p138, %s13, 1
      %s140 = smul.addr %s139, 8
      %s141 = scalar_lea.vmem %s2, %s140
      %v143 = vld [vmem:[%s137] sm:$0xf]
      %v144 = vld [vmem:[%s137 + $0x4] sm:$0x1]
      %v147 = vunpack.c.l.b16 %v143
      %v148 = vunpack.c.l.b16 %v144
      %v149 = vpack.c.b16 %v148, %v147
      %v151 = vshrl.u32 %v149, 16
      %v153 = vshll.u32 %v149, 16
      %v155 = vrot.slane %v153, 1
      %v156 = vor.u32 %v151, %v155
      %157 = vrot.lane.b32.xlu0 %v156, 16
      %v158 = vpop.permute.xlu0 %157
      %v159 = vrot.slane %v149, 1
      %160 = vrot.lane.b32.xlu0 %v159, 32
      %v161 = vpop.permute.xlu0 %160
      %vm162 = vcmask 130048
      %v165 = vsel %vm162, %v143, %v158
      %vm166 = vcmask 261120
      %v168 = vsel %vm166, %v165, %v161
      %v169 = vld [vmem:[%s1] sm:$0xf]
      %v170 = vld [vmem:[%s1 + $0x4] sm:$0xf]
      %v171 = vld [vmem:[%s1 + $0x8] sm:$0xf]
      %v172 = vld [vmem:[%s1 + $0xc] sm:$0xf]
      %v173 = vld [vmem:[%s1 + $0x10] sm:$0xf]
      %v174 = vld [vmem:[%s1 + $0x14] sm:$0xf]
      %v181 = vunpack.c.l.b16 %v169
      %v182 = vunpack.c.l.b16 %v170
      %v183 = vunpack.c.l.b16 %v171
      %v184 = vunpack.c.l.b16 %v172
      %v185 = vunpack.c.l.b16 %v173
      %v186 = vunpack.c.l.b16 %v174
      %v187 = vpack.c.b16 %v182, %v181
      %v188 = vpack.c.b16 %v184, %v183
      %v189 = vpack.c.b16 %v186, %v185
      %vm193 = vcmask 392192
      %v194 = vsel %vm193, %v168, 0
      %196 = vmatprep.subr.bf16.mxu0 0
      %197 = vmatpush1.bf16.msra.mxu0 %v187
      %198 = vmatprep.subr.bf16.mxu0 0
      %199 = vmatpush1.bf16.msra.mxu0 %v188
      %200 = vmatprep.subr.bf16.mxu0 0
      %201 = vmatpush1.bf16.msra.mxu0 %v189
      %202 = vmatprep.subr.bf16.mxu0 0
      %203 = vmatpush1.bf16.msra.mxu0 0
      %204 = vmatprep.subr.bf16.mxu0 0
      %205 = vmatpush1.bf16.msra.mxu0 0
      %206 = vmatprep.subr.bf16.mxu0 0
      %207 = vmatpush1.bf16.msra.mxu0 0
      %208 = vmatprep.subr.bf16.mxu0 0
      %209 = vmatpush1.bf16.msra.mxu0 0
      %210 = vmatprep.subr.bf16.mxu0 0
      %211 = vmatpush1.bf16.msra.mxu0 0
      %212 = vmatprep.subr.bf16.mxu0 0
      %213 = vmatpush1.bf16.msra.mxu0 0
      %214 = vmatprep.subr.bf16.mxu0 0
      %215 = vmatpush1.bf16.msra.mxu0 0
      %216 = vmatprep.subr.bf16.mxu0 0
      %217 = vmatpush1.bf16.msra.mxu0 0
      %218 = vmatprep.subr.bf16.mxu0 0
      %219 = vmatpush1.bf16.msra.mxu0 0
      %220 = vmatprep.subr.bf16.mxu0 0
      %221 = vmatpush1.bf16.msra.mxu0 0
      %222 = vmatprep.subr.bf16.mxu0 0
      %223 = vmatpush1.bf16.msra.mxu0 0
      %224 = vmatprep.subr.bf16.mxu0 0
      %225 = vmatpush1.bf16.msra.mxu0 0
      %226 = vmatprep.subr.bf16.mxu0 0
      %227 = vmatpush1.bf16.msra.mxu0 0
      %228 = vmatprep.mubr.bf16.mxu0 0
      %229 = vmatmul.mubr.bf16.gmra.mrb[0].mxu0 %v194
      %v230 = vpop.f32.mrb[0].mxu0
      %v231 = vadd.f32 0.0, %v230
      %v232 = vpop.f32.mrb[0].mxu0
      %v233 = vpop.f32.mrb[0].mxu0
      %v234 = vpop.f32.mrb[0].mxu0
      %235 = vdwg.mxu0
      %vm236 = vcmask 523264
      %237 = vst.msk [vmem:[%s141] sm:$0xff] %vm236, %v231
      %p238 = scmp.lt.s32.totalorder %s13, 1
      %s239 = scalar_select %p238, %s13, 1
      %s240 = smul.addr %s239, 8
      %s241 = scalar_lea.vmem %s2, %s240
      // Predicated region
      $region29: #{_lambda_.12} parent=27 // pred_check
        %p242 = pneg %p78
      $region30: #{_lambda_.12} parent=27 // pred_check_branch
        %244 = sbr.rel (%p242) target = $region32
      $region31: #{_lambda_.12} parent=27 // pred_region
        _
      $region32: #{_lambda_.12} parent=27 // pred_fallthru
        _
    $region28: #{_lambda_.12} parent=5 // pred_fallthru
      _
    %p245 = scmp.le.s32.totalorder 2, %s8
    // Predicated region
    $region33: #{_lambda_.12} parent=5 // pred_check
      %p246 = pneg %p245
    $region34: #{_lambda_.12} parent=5 // pred_check_branch
      %248 = sbr.rel (%p246) target = $region36
    $region35: #{_lambda_.12} parent=5 // pred_region
      %s249 = ssub.s32 %s8, 2
      // Predicated region
      $region37: #{_lambda_.12} parent=35 // pred_check
        %p250 = pneg %p84
      $region38: #{_lambda_.12} parent=35 // pred_check_branch
        %252 = sbr.rel (%p250) target = $region40
      $region39: #{_lambda_.12} parent=35 // pred_region
        %p253 = scmp.lt.s32.totalorder %s14, 1
        %s254 = scalar_select %p253, %s14, 1
        %s255 = smul.addr %s254, 8
        %s256 = scalar_lea.vmem %s2, %s255
      $region40: #{_lambda_.12} parent=35 // pred_fallthru
        _
    $region36: #{_lambda_.12} parent=5 // pred_fallthru
      _
  $region6: #{_lambda_.12} parent=0 // loop_footer
    %s12 = sadd.s32 1, %s8
  $region7: #{_lambda_.12} parent=0 // loop_footer_branch
    %7 = sbr.rel target = $region3
  $region8: #{_lambda_.12} parent=0 // loop_exit
    _

// kernel: _lambda_.15
$region0: #{_lambda_.15}
  #allocation0 [shape = 'u32[]', space=smem, size = 0x4, offset = 0x4, fixed_abs, tag = 'smem constant byte address 0x4 - core index']
  #allocation1 [shape = 'u32[144,128]{1,0:T(1,128)}', space=vmem, size = 0x12000, scoped, tag = 'internal scratch']
  #allocation2 [shape = 'f32[32,64]{1,0:T(8,128)}', space=vmem, size = 0x4000, scoped, tag = 'scratch operand']
  %s0 = inlined_call_operand.vmem [shape: bf16[32,64], index: 0, kind: input, shape index: {}]
  %s1 = inlined_call_operand.vmem [shape: bf16[64,64], index: 1, kind: input, shape index: {}]
  %s2 = inlined_call_operand.vmem [shape: f32[1,64], index: 2, kind: input, shape index: {}]
  %s3 = inlined_call_operand.vmem [shape: bf16[32,64], index: 3, kind: input, shape index: {}]
  %s4 = inlined_call_operand.vmem [shape: bf16[32,64], index: 4, kind: output, shape index: {}]
  %s5 = sld [smem:[#allocation0]]
  $region34: #{_lambda_.15} parent=0
    _
  %s7 = ssub.s32 1, %s5
  %s8 = scalar_select 0, %s7, %s5
  // Predicated region
  $region2: #{_lambda_.15} parent=0 // pred_check
    _
  $region3: #{_lambda_.15} parent=0 // pred_check_branch
    %10 = sbr.rel (0) target = $region5
  $region4: #{_lambda_.15} parent=0 // pred_region
    _
  $region5: #{_lambda_.15} parent=0 // pred_fallthru
    _
  // Predicated region
  $region6: #{_lambda_.15} parent=0 // pred_check
    _
  $region7: #{_lambda_.15} parent=0 // pred_check_branch
    %12 = sbr.rel (0) target = $region9
  $region8: #{_lambda_.15} parent=0 // pred_region
    _
  $region9: #{_lambda_.15} parent=0 // pred_fallthru
    _
  // Predicated region
  $region10: #{_lambda_.15} parent=0 // pred_check
    _
  $region11: #{_lambda_.15} parent=0 // pred_check_branch
    %14 = sbr.rel (0) target = $region13
  $region12: #{_lambda_.15} parent=0 // pred_region
    _
  $region13: #{_lambda_.15} parent=0 // pred_fallthru
    _
  // Predicated region
  $region14: #{_lambda_.15} parent=0 // pred_check
    _
  $region15: #{_lambda_.15} parent=0 // pred_check_branch
    %16 = sbr.rel (0) target = $region17
  $region16: #{_lambda_.15} parent=0 // pred_region
    _
  $region17: #{_lambda_.15} parent=0 // pred_fallthru
    _
  %p18 = scmp.eq.s32.totalorder 0, 0
  // Predicated region
  $region18: #{_lambda_.15} parent=0 // pred_check
    %p19 = pneg %p18
  $region19: #{_lambda_.15} parent=0 // pred_check_branch
    %21 = sbr.rel (%p19) target = $region21
  $region20: #{_lambda_.15} parent=0 // pred_region
    %vm22 = vcmask 523264
    %23 = vst.msk [vmem:[#allocation2] sm:$0xff] %vm22, 0.0
    %24 = vst.msk [vmem:[#allocation2 + $0x8] sm:$0xff] %vm22, 0.0
    %25 = vst.msk [vmem:[#allocation2 + $0x10] sm:$0xff] %vm22, 0.0
    %26 = vst.msk [vmem:[#allocation2 + $0x18] sm:$0xff] %vm22, 0.0
  $region21: #{_lambda_.15} parent=0 // pred_fallthru
    _
  %v27 = vld [vmem:[#allocation2] sm:$0xff]
  %v28 = vld [vmem:[#allocation2 + $0x8] sm:$0xff]
  %v29 = vld [vmem:[#allocation2 + $0x10] sm:$0xff]
  %v30 = vld [vmem:[#allocation2 + $0x18] sm:$0xff]
  %v31 = vld [vmem:[%s0] sm:$0xf]
  %v32 = vld [vmem:[%s0 + $0x4] sm:$0xf]
  %v33 = vld [vmem:[%s0 + $0x8] sm:$0xf]
  %v34 = vld [vmem:[%s0 + $0xc] sm:$0xf]
  %v35 = vld [vmem:[%s1] sm:$0xf]
  %v36 = vld [vmem:[%s1 + $0x4] sm:$0xf]
  %v37 = vld [vmem:[%s1 + $0x8] sm:$0xf]
  %v38 = vld [vmem:[%s1 + $0xc] sm:$0xf]
  %v39 = vld [vmem:[%s1 + $0x10] sm:$0xf]
  %v40 = vld [vmem:[%s1 + $0x14] sm:$0xf]
  %v41 = vld [vmem:[%s1 + $0x18] sm:$0xf]
  %v42 = vld [vmem:[%s1 + $0x1c] sm:$0xf]
  %v47 = vunpack.c.l.b16 %v31
  %v48 = vunpack.c.l.b16 %v32
  %v49 = vunpack.c.l.b16 %v33
  %v50 = vunpack.c.l.b16 %v34
  %v51 = vpack.c.b16 %v48, %v47
  %v52 = vpack.c.b16 %v50, %v49
  %v61 = vunpack.c.l.b16 %v35
  %v62 = vunpack.c.l.b16 %v36
  %v63 = vunpack.c.l.b16 %v37
  %v64 = vunpack.c.l.b16 %v38
  %v65 = vunpack.c.l.b16 %v39
  %v66 = vunpack.c.l.b16 %v40
  %v67 = vunpack.c.l.b16 %v41
  %v68 = vunpack.c.l.b16 %v42
  %v69 = vpack.c.b16 %v62, %v61
  %v70 = vpack.c.b16 %v64, %v63
  %v71 = vpack.c.b16 %v66, %v65
  %v72 = vpack.c.b16 %v68, %v67
  %vm77 = vcmask 523264
  %v79 = vsel %vm77, %v51, 0
  %v82 = vsel %vm77, %v52, 0
  %84 = vmatprep.subr.bf16.mxu0 0
  %85 = vmatpush1.bf16.msra.mxu0 %v69
  %86 = vmatprep.subr.bf16.mxu0 0
  %87 = vmatpush1.bf16.msra.mxu0 %v70
  %88 = vmatprep.subr.bf16.mxu0 0
  %89 = vmatpush1.bf16.msra.mxu0 %v71
  %90 = vmatprep.subr.bf16.mxu0 0
  %91 = vmatpush1.bf16.msra.mxu0 %v72
  %92 = vmatprep.subr.bf16.mxu0 0
  %93 = vmatpush1.bf16.msra.mxu0 0
  %94 = vmatprep.subr.bf16.mxu0 0
  %95 = vmatpush1.bf16.msra.mxu0 0
  %96 = vmatprep.subr.bf16.mxu0 0
  %97 = vmatpush1.bf16.msra.mxu0 0
  %98 = vmatprep.subr.bf16.mxu0 0
  %99 = vmatpush1.bf16.msra.mxu0 0
  %100 = vmatprep.subr.bf16.mxu0 0
  %101 = vmatpush1.bf16.msra.mxu0 0
  %102 = vmatprep.subr.bf16.mxu0 0
  %103 = vmatpush1.bf16.msra.mxu0 0
  %104 = vmatprep.subr.bf16.mxu0 0
  %105 = vmatpush1.bf16.msra.mxu0 0
  %106 = vmatprep.subr.bf16.mxu0 0
  %107 = vmatpush1.bf16.msra.mxu0 0
  %108 = vmatprep.subr.bf16.mxu0 0
  %109 = vmatpush1.bf16.msra.mxu0 0
  %110 = vmatprep.subr.bf16.mxu0 0
  %111 = vmatpush1.bf16.msra.mxu0 0
  %112 = vmatprep.subr.bf16.mxu0 0
  %113 = vmatpush1.bf16.msra.mxu0 0
  %114 = vmatprep.subr.bf16.mxu0 0
  %115 = vmatpush1.bf16.msra.mxu0 0
  %116 = vmatprep.mubr.bf16.mxu0 0
  %117 = vmatmul.mubr.bf16.gmra.mrb[0].mxu0 %v79
  %v118 = vpop.f32.mrb[0].mxu0
  %v119 = vadd.f32 0.0, %v118
  %v120 = vpop.f32.mrb[0].mxu0
  %v121 = vpop.f32.mrb[0].mxu0
  %v122 = vadd.f32 0.0, %v121
  %v123 = vpop.f32.mrb[0].mxu0
  %124 = vmatprep.mubr.bf16.mxu0 0
  %125 = vmatmul.mubr.bf16.gmra.mrb[0].mxu0 %v82
  %v126 = vpop.f32.mrb[0].mxu0
  %v127 = vadd.f32 0.0, %v126
  %v128 = vpop.f32.mrb[0].mxu0
  %v129 = vpop.f32.mrb[0].mxu0
  %v130 = vadd.f32 0.0, %v129
  %v131 = vpop.f32.mrb[0].mxu0
  %132 = vdwg.mxu0
  %v133 = vadd.f32 %v27, %v119
  %v134 = vadd.f32 %v28, %v122
  %v135 = vadd.f32 %v29, %v127
  %v136 = vadd.f32 %v30, %v130
  %137 = vst.msk [vmem:[#allocation2] sm:$0xff] %vm77, %v133
  %138 = vst.msk [vmem:[#allocation2 + $0x8] sm:$0xff] %vm77, %v134
  %139 = vst.msk [vmem:[#allocation2 + $0x10] sm:$0xff] %vm77, %v135
  %140 = vst.msk [vmem:[#allocation2 + $0x18] sm:$0xff] %vm77, %v136
  // Predicated region
  $region22: #{_lambda_.15} parent=0 // pred_check
    %p141 = pneg %p18
  $region23: #{_lambda_.15} parent=0 // pred_check_branch
    %143 = sbr.rel (%p141) target = $region25
  $region24: #{_lambda_.15} parent=0 // pred_region
    %v144 = vld [vmem:[#allocation2] sm:$0xff]
    %v145 = vld [vmem:[#allocation2 + $0x8] sm:$0xff]
    %v146 = vld [vmem:[#allocation2 + $0x10] sm:$0xff]
    %v147 = vld [vmem:[#allocation2 + $0x18] sm:$0xff]
    %v148 = vld [vmem:[%s2] sm:$0x1]
    %v150 = vlaneseq
    %v151 = vshrl.u32 %v150, 7
    %v152 = vsub.s32 0, %v151
    %v153 = vrot.slane %v148, %v152
    %v155 = vadd.f32 %v144, %v153
    %v156 = vadd.f32 %v145, %v153
    %v157 = vadd.f32 %v146, %v153
    %v158 = vadd.f32 %v147, %v153
    %v159 = vld [vmem:[%s3] sm:$0xf]
    %v160 = vld [vmem:[%s3 + $0x4] sm:$0xf]
    %v161 = vld [vmem:[%s3 + $0x8] sm:$0xf]
    %v162 = vld [vmem:[%s3 + $0xc] sm:$0xf]
    %v163 = vunpack.c.l.bf16 %v159
    %v164 = vunpack.c.l.bf16 %v160
    %v165 = vunpack.c.l.bf16 %v161
    %v166 = vunpack.c.l.bf16 %v162
    %v167 = vadd.f32 %v155, %v163
    %v168 = vadd.f32 %v156, %v164
    %v169 = vadd.f32 %v157, %v165
    %v170 = vadd.f32 %v158, %v166
    %v171 = vpack.c.bf16 %v168, %v167
    %v172 = vpack.c.bf16 %v170, %v169
    %v175 = vunpack.c.l.b16 %v171
    %v176 = vunpack.c.h.b16 %v171
    %v177 = vunpack.c.l.b16 %v172
    %v178 = vunpack.c.h.b16 %v172
    %v179 = vpack.c.b16 %v175, %v175
    %v180 = vpack.c.b16 %v176, %v176
    %v181 = vpack.c.b16 %v177, %v177
    %v182 = vpack.c.b16 %v178, %v178
    %vm187 = vcmask 519168
    %188 = vst.msk [vmem:[%s4] sm:$0xf] %vm187, %v179
    %189 = vst.msk [vmem:[%s4 + $0x4] sm:$0xf] %vm187, %v180
    %190 = vst.msk [vmem:[%s4 + $0x8] sm:$0xf] %vm187, %v181
    %191 = vst.msk [vmem:[%s4 + $0xc] sm:$0xf] %vm187, %v182
  $region25: #{_lambda_.15} parent=0 // pred_fallthru
    _
  // Predicated region
  $region26: #{_lambda_.15} parent=0 // pred_check
    _
  $region27: #{_lambda_.15} parent=0 // pred_check_branch
    %193 = sbr.rel (0) target = $region29
  $region28: #{_lambda_.15} parent=0 // pred_region
    _
  $region29: #{_lambda_.15} parent=0 // pred_fallthru
    _
  // Predicated region
  $region30: #{_lambda_.15} parent=0 // pred_check
    _
  $region31: #{_lambda_.15} parent=0 // pred_check_branch
    %195 = sbr.rel (0) target = $region33
  $region32: #{_lambda_.15} parent=0 // pred_region
    _
  $region33: #{_lambda_.15} parent=0 // pred_fallthru
    _

// kernel: _lambda_.14
$region0: #{_lambda_.14}
  #allocation0 [shape = 'u32[]', space=smem, size = 0x4, offset = 0x4, fixed_abs, tag = 'smem constant byte address 0x4 - core index']
  #allocation1 [shape = 'u32[144,128]{1,0:T(1,128)}', space=vmem, size = 0x12000, scoped, tag = 'internal scratch']
  %s0 = inlined_call_operand.vmem [shape: bf16[2,16,192], index: 0, kind: input, shape index: {}]
  %s1 = inlined_call_operand.vmem [shape: bf16[2,16,64], index: 1, kind: output, shape index: {}]
  %s2 = sld [smem:[#allocation0]]
  $region37: #{_lambda_.14} parent=0
    _
  %s4 = ssub.s32 1, %s2
  %s5 = scalar_select 0, %s4, %s2
  loop: start=0, step=1, limit=4
  $region2: #{_lambda_.14} parent=0 // loop_pre_header
    _
  $region3: #{_lambda_.14} parent=0 // loop_header
    %s7 = sphi 0, %s11
    %p8 = scmp.ge.s32.totalorder %s7, 4
    %s17 = sphi 0, %s19
    %s20 = sphi 0, %s17
    %s21 = sphi 0, %s20
    %s37 = sphi 0, %s21
    %s43 = sphi 0, %s45
    %s46 = sphi 0, %s43
    %s47 = sphi 0, %s46
    %s63 = sphi 0, %s47
  $region4: #{_lambda_.14} parent=0 // loop_header_branch
    %10 = sbr.rel (%p8) target = $region8
  $region5: #{_lambda_.14} parent=0 // loop_body
    %s12 = ssub.s32 %s7, 1
    %s13 = ssub.s32 %s7, 2
    %s14 = sadd.s32 %s7, 1
    %s15 = ssub.s32 %s7, %s14
    %p16 = scmp.eq.s32.totalorder %s15, 0
    %s18 = sadd.s32 %s17, 1
    %s19 = scalar_select %p16, %s17, %s18
    %p22 = pneg %p16
    %p23 = scmp.eq.s32.totalorder %s7, 1
    %p24 = por %p22, %p23
    %p25 = scmp.ne.s32.totalorder %s17, %s20
    %p26 = scmp.eq.s32.totalorder %s7, 0
    %p27 = por %p25, %p26
    %p28 = scmp.ne.s32.totalorder %s17, %s20
    %p29 = scmp.eq.s32.totalorder %s12, 1
    %p30 = por %p28, %p29
    %p31 = scmp.ne.s32.totalorder %s20, %s21
    %p32 = scmp.eq.s32.totalorder %s12, 0
    %p33 = por %p31, %p32
    %p34 = scmp.ne.s32.totalorder %s20, %s21
    %p35 = scmp.eq.s32.totalorder %s13, 1
    %p36 = por %p34, %p35
    %p38 = scmp.ne.s32.totalorder %s21, %s37
    %p39 = scmp.eq.s32.totalorder %s13, 0
    %p40 = por %p38, %p39
    %s41 = ssub.s32 %s7, %s14
    %p42 = scmp.eq.s32.totalorder %s41, 0
    %s44 = sadd.s32 %s43, 1
    %s45 = scalar_select %p42, %s43, %s44
    %p48 = pneg %p42
    %p49 = scmp.eq.s32.totalorder %s7, 1
    %p50 = por %p48, %p49
    %p51 = scmp.ne.s32.totalorder %s43, %s46
    %p52 = scmp.eq.s32.totalorder %s7, 0
    %p53 = por %p51, %p52
    %p54 = scmp.ne.s32.totalorder %s43, %s46
    %p55 = scmp.eq.s32.totalorder %s12, 1
    %p56 = por %p54, %p55
    %p57 = scmp.ne.s32.totalorder %s46, %s47
    %p58 = scmp.eq.s32.totalorder %s12, 0
    %p59 = por %p57, %p58
    %p60 = scmp.ne.s32.totalorder %s46, %s47
    %p61 = scmp.eq.s32.totalorder %s13, 1
    %p62 = por %p60, %p61
    %p64 = scmp.ne.s32.totalorder %s47, %s63
    %p65 = scmp.eq.s32.totalorder %s13, 0
    %p66 = por %p64, %p65
    %p67 = scmp.le.s32.totalorder 1, %s7
    %p68 = scmp.lt.s32.totalorder %s7, 3
    %p69 = pnand %p67, %p68
    %p70 = pneg %p69
    // Predicated region
    $region9: #{_lambda_.14} parent=5 // pred_check
      _
    $region10: #{_lambda_.14} parent=5 // pred_check_branch
      %72 = sbr.rel (%p69) target = $region12
    $region11: #{_lambda_.14} parent=5 // pred_region
      %s73 = ssub.s32 %s7, 1
    $region12: #{_lambda_.14} parent=5 // pred_fallthru
      _
    %p74 = scmp.lt.s32.totalorder %s7, 2
    // Predicated region
    $region13: #{_lambda_.14} parent=5 // pred_check
      %p75 = pneg %p74
    $region14: #{_lambda_.14} parent=5 // pred_check_branch
      %77 = sbr.rel (%p75) target = $region16
    $region15: #{_lambda_.14} parent=5 // pred_region
      // Predicated region
      $region17: #{_lambda_.14} parent=15 // pred_check
        %p78 = pneg %p27
      $region18: #{_lambda_.14} parent=15 // pred_check_branch
        %80 = sbr.rel (%p78) target = $region20
      $region19: #{_lambda_.14} parent=15 // pred_region
        %p81 = scmp.lt.s32.totalorder %s7, 1
        %s82 = scalar_select %p81, %s7, 1
        %s83 = smul.addr %s82, 4
        %s84 = smul.addr %s83, 4
        %s85 = scalar_lea.vmem %s0, %s84
      $region20: #{_lambda_.14} parent=15 // pred_fallthru
        _
    $region16: #{_lambda_.14} parent=5 // pred_fallthru
      _
    %p86 = scmp.le.s32.totalorder 1, %s7
    %p87 = scmp.lt.s32.totalorder %s7, 3
    %p88 = pnand %p86, %p87
    %p89 = pneg %p88
    // Predicated region
    $region21: #{_lambda_.14} parent=5 // pred_check
      _
    $region22: #{_lambda_.14} parent=5 // pred_check_branch
      %91 = sbr.rel (%p88) target = $region24
    $region23: #{_lambda_.14} parent=5 // pred_region
      %s92 = ssub.s32 %s7, 1
      %p93 = scmp.lt.s32.totalorder %s12, 1
      %s94 = scalar_select %p93, %s12, 1
      %s95 = smul.addr %s94, 4
      %s96 = smul.addr %s95, 4
      %s97 = scalar_lea.vmem %s0, %s96
      %p98 = pneg %p33
      %p99 = pneg %p30
      %p100 = pneg %p59
      %p101 = pneg %p56
      %p102 = scmp.lt.s32.totalorder %s12, 1
      %s103 = scalar_select %p102, %s12, 1
      %s104 = smul.addr %s103, 2
      %s105 = smul.addr %s104, 4
      %s106 = scalar_lea.vmem %s1, %s105
      %p107 = scmp.lt.s32.totalorder %s12, 1
      %s108 = scalar_select %p107, %s12, 1
      %s109 = smul.addr %s108, 4
      %s110 = smul.addr %s109, 4
      %s111 = scalar_lea.vmem %s0, %s110
      %p112 = scmp.lt.s32.totalorder %s12, 1
      %s113 = scalar_select %p112, %s12, 1
      %s114 = smul.addr %s113, 2
      %s115 = smul.addr %s114, 4
      %s116 = scalar_lea.vmem %s1, %s115
      %v118 = vld [vmem:[%s111] sm:$0xff]
      %v119 = vld [vmem:[%s111 + $0x8] sm:$0xff]
      %v120 = vlaneseq
      %v121 = vshrl.u32 %v120, 7
      %v122 = vadd.s32 %v121, 8
      %v123 = vlaneseq
      %v124 = vand.u32 %v123, 127
      %vm125 = vcmp.le.s32.totalorder %v124, %v121
      %vm126 = vcmp.le.s32.totalorder %v124, %v122
      %v127 = vunpack.c.l.bf16 %v118
      %v128 = vunpack.c.l.bf16 %v119
      %v129 = vmul.f32 %v127, 0.25
      %v130 = vmul.f32 %v128, 0.25
      %v131 = vpack.c.bf16 %v130, %v129
      %v134 = vunpack.c.l.b16 %v118
      %v135 = vunpack.c.l.b16 %v119
      %v136 = vpack.c.b16 %v135, %v134
      %137 = vrot.lane.b32.xlu0 %v136, 64
      %v138 = vpop.permute.xlu0 %137
      %vm139 = vcmask 130048
      %v141 = vsel %vm139, %v131, 0
      %v144 = vsel %vm139, %v138, 0
      %146 = vmatprep.subr.bf16.mxu0 0
      %147 = vmatpush1.bf16.xpose.msra.mxu0 %v144
      %148 = vmatprep.subr.bf16.mxu0 0
      %149 = vmatpush1.bf16.xpose.msra.mxu0 0
      %150 = vmatprep.subr.bf16.mxu0 0
      %151 = vmatpush1.bf16.xpose.msra.mxu0 0
      %152 = vmatprep.subr.bf16.mxu0 0
      %153 = vmatpush1.bf16.xpose.msra.mxu0 0
      %154 = vmatprep.subr.bf16.mxu0 0
      %155 = vmatpush1.bf16.xpose.msra.mxu0 0
      %156 = vmatprep.subr.bf16.mxu0 0
      %157 = vmatpush1.bf16.xpose.msra.mxu0 0
      %158 = vmatprep.subr.bf16.mxu0 0
      %159 = vmatpush1.bf16.xpose.msra.mxu0 0
      %160 = vmatprep.subr.bf16.mxu0 0
      %161 = vmatpush1.bf16.xpose.msra.mxu0 0
      %162 = vmatprep.subr.bf16.mxu0 0
      %163 = vmatpush1.bf16.xpose.msra.mxu0 0
      %164 = vmatprep.subr.bf16.mxu0 0
      %165 = vmatpush1.bf16.xpose.msra.mxu0 0
      %166 = vmatprep.subr.bf16.mxu0 0
      %167 = vmatpush1.bf16.xpose.msra.mxu0 0
      %168 = vmatprep.subr.bf16.mxu0 0
      %169 = vmatpush1.bf16.xpose.msra.mxu0 0
      %170 = vmatprep.subr.bf16.mxu0 0
      %171 = vmatpush1.bf16.xpose.msra.mxu0 0
      %172 = vmatprep.subr.bf16.mxu0 0
      %173 = vmatpush1.bf16.xpose.msra.mxu0 0
      %174 = vmatprep.subr.bf16.mxu0 0
      %175 = vmatpush1.bf16.xpose.msra.mxu0 0
      %176 = vmatprep.subr.bf16.mxu0 0
      %177 = vmatpush1.bf16.xpose.msra.mxu0 0
      %178 = vmatprep.mubr.bf16.mxu0 0
      %179 = vmatmul.mubr.bf16.gmra.mrb[0].mxu0 %v141
      %v180 = vpop.f32.mrb[0].mxu0
      %v181 = vadd.f32 0.0, %v180
      %v182 = vpop.f32.mrb[0].mxu0
      %v183 = vpop.f32.mrb[0].mxu0
      %v184 = vadd.f32 0.0, %v183
      %v185 = vpop.f32.mrb[0].mxu0
      %186 = vdwg.mxu0
      %v187 = vsel %vm125, %v181, -1e+30
      %v188 = vsel %vm126, %v184, -1e+30
      %v189 = vsel %vm139, %v187, -inf
      %190 = vmax.xlane.f32.xlu0 %v189
      %v191 = vpop.xlane.xlu0 %190
      %v192 = vsel %vm139, %v188, -inf
      %193 = vmax.xlane.f32.xlu0 %v192
      %v194 = vpop.xlane.xlu0 %193
      %v195 = vsub.f32 %v187, %v191
      %v196 = vsub.f32 %v188, %v194
      %v197 = vmul.f32 %v195, 1.442695
      %v198 = vpow.pop %v197
      %v199 = vmul.f32 %v196, 1.442695
      %v200 = vpow.pop %v199
      %v201 = vsel %vm139, %v198, 0.0
      %202 = vadd.xlane.f32.xlu0 %v201
      %v203 = vpop.xlane.xlu0 %202
      %v204 = vsel %vm139, %v200, 0.0
      %205 = vadd.xlane.f32.xlu0 %v204
      %v206 = vpop.xlane.xlu0 %205
      %v207 = vrcp.pop %v203
      %v208 = vrcp.pop %v206
      %v209 = vmul.f32 %v198, %v207
      %v210 = vmul.f32 %v200, %v208
      %v211 = vpack.c.bf16 %v210, %v209
      %v212 = vunpack.c.h.b16 %v118
      %v213 = vunpack.c.h.b16 %v119
      %v214 = vpack.c.b16 %v213, %v212
      %v217 = vsel %vm139, %v211, 0
      %219 = vmatprep.subr.bf16.mxu0 0
      %220 = vmatpush1.bf16.msra.mxu0 %v214
      %221 = vmatprep.subr.bf16.mxu0 0
      %222 = vmatpush1.bf16.msra.mxu0 0
      %223 = vmatprep.subr.bf16.mxu0 0
      %224 = vmatpush1.bf16.msra.mxu0 0
      %225 = vmatprep.subr.bf16.mxu0 0
      %226 = vmatpush1.bf16.msra.mxu0 0
      %227 = vmatprep.subr.bf16.mxu0 0
      %228 = vmatpush1.bf16.msra.mxu0 0
      %229 = vmatprep.subr.bf16.mxu0 0
      %230 = vmatpush1.bf16.msra.mxu0 0
      %231 = vmatprep.subr.bf16.mxu0 0
      %232 = vmatpush1.bf16.msra.mxu0 0
      %233 = vmatprep.subr.bf16.mxu0 0
      %234 = vmatpush1.bf16.msra.mxu0 0
      %235 = vmatprep.subr.bf16.mxu0 0
      %236 = vmatpush1.bf16.msra.mxu0 0
      %237 = vmatprep.subr.bf16.mxu0 0
      %238 = vmatpush1.bf16.msra.mxu0 0
      %239 = vmatprep.subr.bf16.mxu0 0
      %240 = vmatpush1.bf16.msra.mxu0 0
      %241 = vmatprep.subr.bf16.mxu0 0
      %242 = vmatpush1.bf16.msra.mxu0 0
      %243 = vmatprep.subr.bf16.mxu0 0
      %244 = vmatpush1.bf16.msra.mxu0 0
      %245 = vmatprep.subr.bf16.mxu0 0
      %246 = vmatpush1.bf16.msra.mxu0 0
      %247 = vmatprep.subr.bf16.mxu0 0
      %248 = vmatpush1.bf16.msra.mxu0 0
      %249 = vmatprep.subr.bf16.mxu0 0
      %250 = vmatpush1.bf16.msra.mxu0 0
      %251 = vmatprep.mubr.bf16.mxu0 0
      %252 = vmatmul.mubr.bf16.gmra.mrb[0].mxu0 %v217
      %v253 = vpop.f32.mrb[0].mxu0
      %v254 = vadd.f32 0.0, %v253
      %v255 = vpop.f32.mrb[0].mxu0
      %v256 = vpop.f32.mrb[0].mxu0
      %v257 = vadd.f32 0.0, %v256
      %v258 = vpop.f32.mrb[0].mxu0
      %259 = vdwg.mxu0
      %261 = vrot.lane.b32.xlu0 %v131, 112
      %v262 = vpop.permute.xlu0 %261
      %263 = vrot.lane.b32.xlu0 %v136, 48
      %v264 = vpop.permute.xlu0 %263
      %v266 = vsel %vm139, %v262, 0
      %v269 = vsel %vm139, %v264, 0
      %271 = vmatprep.subr.bf16.mxu0 0
      %272 = vmatpush1.bf16.xpose.msra.mxu0 %v269
      %273 = vmatprep.subr.bf16.mxu0 0
      %274 = vmatpush1.bf16.xpose.msra.mxu0 0
      %275 = vmatprep.subr.bf16.mxu0 0
      %276 = vmatpush1.bf16.xpose.msra.mxu0 0
      %277 = vmatprep.subr.bf16.mxu0 0
      %278 = vmatpush1.bf16.xpose.msra.mxu0 0
      %279 = vmatprep.subr.bf16.mxu0 0
      %280 = vmatpush1.bf16.xpose.msra.mxu0 0
      %281 = vmatprep.subr.bf16.mxu0 0
      %282 = vmatpush1.bf16.xpose.msra.mxu0 0
      %283 = vmatprep.subr.bf16.mxu0 0
      %284 = vmatpush1.bf16.xpose.msra.mxu0 0
      %285 = vmatprep.subr.bf16.mxu0 0
      %286 = vmatpush1.bf16.xpose.msra.mxu0 0
      %287 = vmatprep.subr.bf16.mxu0 0
      %288 = vmatpush1.bf16.xpose.msra.mxu0 0
      %289 = vmatprep.subr.bf16.mxu0 0
      %290 = vmatpush1.bf16.xpose.msra.mxu0 0
      %291 = vmatprep.subr.bf16.mxu0 0
      %292 = vmatpush1.bf16.xpose.msra.mxu0 0
      %293 = vmatprep.subr.bf16.mxu0 0
      %294 = vmatpush1.bf16.xpose.msra.mxu0 0
      %295 = vmatprep.subr.bf16.mxu0 0
      %296 = vmatpush1.bf16.xpose.msra.mxu0 0
      %297 = vmatprep.subr.bf16.mxu0 0
      %298 = vmatpush1.bf16.xpose.msra.mxu0 0
      %299 = vmatprep.subr.bf16.mxu0 0
      %300 = vmatpush1.bf16.xpose.msra.mxu0 0
      %301 = vmatprep.subr.bf16.mxu0 0
      %302 = vmatpush1.bf16.xpose.msra.mxu0 0
      %303 = vmatprep.mubr.bf16.mxu0 0
      %304 = vmatmul.mubr.bf16.gmra.mrb[0].mxu0 %v266
      %v305 = vpop.f32.mrb[0].mxu0
      %v306 = vadd.f32 0.0, %v305
      %v307 = vpop.f32.mrb[0].mxu0
      %v308 = vpop.f32.mrb[0].mxu0
      %v309 = vadd.f32 0.0, %v308
      %v310 = vpop.f32.mrb[0].mxu0
      %311 = vdwg.mxu0
      %v312 = vsel %vm125, %v306, -1e+30
      %v313 = vsel %vm126, %v309, -1e+30
      %v314 = vsel %vm139, %v312, -inf
      %315 = vmax.xlane.f32.xlu0 %v314
      %v316 = vpop.xlane.xlu0 %315
      %v317 = vsel %vm139, %v313, -inf
      %318 = vmax.xlane.f32.xlu0 %v317
      %v319 = vpop.xlane.xlu0 %318
      %v320 = vsub.f32 %v312, %v316
      %v321 = vsub.f32 %v313, %v319
      %v322 = vmul.f32 %v320, 1.442695
      %v323 = vpow.pop %v322
      %v324 = vmul.f32 %v321, 1.442695
      %v325 = vpow.pop %v324
      %v326 = vsel %vm139, %v323, 0.0
      %327 = vadd.xlane.f32.xlu0 %v326
      %v328 = vpop.xlane.xlu0 %327
      %v329 = vsel %vm139, %v325, 0.0
      %330 = vadd.xlane.f32.xlu0 %v329
      %v331 = vpop.xlane.xlu0 %330
      %v332 = vrcp.pop %v328
      %v333 = vrcp.pop %v331
      %v334 = vmul.f32 %v323, %v332
      %v335 = vmul.f32 %v325, %v333
      %v336 = vpack.c.bf16 %v335, %v334
      %337 = vrot.lane.b32.xlu0 %v214, 112
      %v338 = vpop.permute.xlu0 %337
      %v341 = vsel %vm139, %v336, 0
      %343 = vmatprep.subr.bf16.mxu0 0
      %344 = vmatpush1.bf16.msra.mxu0 %v338
      %345 = vmatprep.subr.bf16.mxu0 0
      %346 = vmatpush1.bf16.msra.mxu0 0
      %347 = vmatprep.subr.bf16.mxu0 0
      %348 = vmatpush1.bf16.msra.mxu0 0
      %349 = vmatprep.subr.bf16.mxu0 0
      %350 = vmatpush1.bf16.msra.mxu0 0
      %351 = vmatprep.subr.bf16.mxu0 0
      %352 = vmatpush1.bf16.msra.mxu0 0
      %353 = vmatprep.subr.bf16.mxu0 0
      %354 = vmatpush1.bf16.msra.mxu0 0
      %355 = vmatprep.subr.bf16.mxu0 0
      %356 = vmatpush1.bf16.msra.mxu0 0
      %357 = vmatprep.subr.bf16.mxu0 0
      %358 = vmatpush1.bf16.msra.mxu0 0
      %359 = vmatprep.subr.bf16.mxu0 0
      %360 = vmatpush1.bf16.msra.mxu0 0
      %361 = vmatprep.subr.bf16.mxu0 0
      %362 = vmatpush1.bf16.msra.mxu0 0
      %363 = vmatprep.subr.bf16.mxu0 0
      %364 = vmatpush1.bf16.msra.mxu0 0
      %365 = vmatprep.subr.bf16.mxu0 0
      %366 = vmatpush1.bf16.msra.mxu0 0
      %367 = vmatprep.subr.bf16.mxu0 0
      %368 = vmatpush1.bf16.msra.mxu0 0
      %369 = vmatprep.subr.bf16.mxu0 0
      %370 = vmatpush1.bf16.msra.mxu0 0
      %371 = vmatprep.subr.bf16.mxu0 0
      %372 = vmatpush1.bf16.msra.mxu0 0
      %373 = vmatprep.subr.bf16.mxu0 0
      %374 = vmatpush1.bf16.msra.mxu0 0
      %375 = vmatprep.mubr.bf16.mxu0 0
      %376 = vmatmul.mubr.bf16.gmra.mrb[0].mxu0 %v341
      %v377 = vpop.f32.mrb[0].mxu0
      %v378 = vadd.f32 0.0, %v377
      %v379 = vpop.f32.mrb[0].mxu0
      %v380 = vpop.f32.mrb[0].mxu0
      %v381 = vadd.f32 0.0, %v380
      %v382 = vpop.f32.mrb[0].mxu0
      %383 = vdwg.mxu0
      %384 = vrot.lane.b32.xlu0 %v131, 96
      %v385 = vpop.permute.xlu0 %384
      %386 = vrot.lane.b32.xlu0 %v136, 32
      %v387 = vpop.permute.xlu0 %386
      %v389 = vsel %vm139, %v385, 0
      %v392 = vsel %vm139, %v387, 0
      %394 = vmatprep.subr.bf16.mxu0 0
      %395 = vmatpush1.bf16.xpose.msra.mxu0 %v392
      %396 = vmatprep.subr.bf16.mxu0 0
      %397 = vmatpush1.bf16.xpose.msra.mxu0 0
      %398 = vmatprep.subr.bf16.mxu0 0
      %399 = vmatpush1.bf16.xpose.msra.mxu0 0
      %400 = vmatprep.subr.bf16.mxu0 0
      %401 = vmatpush1.bf16.xpose.msra.mxu0 0
      %402 = vmatprep.subr.bf16.mxu0 0
      %403 = vmatpush1.bf16.xpose.msra.mxu0 0
      %404 = vmatprep.subr.bf16.mxu0 0
      %405 = vmatpush1.bf16.xpose.msra.mxu0 0
      %406 = vmatprep.subr.bf16.mxu0 0
      %407 = vmatpush1.bf16.xpose.msra.mxu0 0
      %408 = vmatprep.subr.bf16.mxu0 0
      %409 = vmatpush1.bf16.xpose.msra.mxu0 0
      %410 = vmatprep.subr.bf16.mxu0 0
      %411 = vmatpush1.bf16.xpose.msra.mxu0 0
      %412 = vmatprep.subr.bf16.mxu0 0
      %413 = vmatpush1.bf16.xpose.msra.mxu0 0
      %414 = vmatprep.subr.bf16.mxu0 0
      %415 = vmatpush1.bf16.xpose.msra.mxu0 0
      %416 = vmatprep.subr.bf16.mxu0 0
      %417 = vmatpush1.bf16.xpose.msra.mxu0 0
      %418 = vmatprep.subr.bf16.mxu0 0
      %419 = vmatpush1.bf16.xpose.msra.mxu0 0
      %420 = vmatprep.subr.bf16.mxu0 0
      %421 = vmatpush1.bf16.xpose.msra.mxu0 0
      %422 = vmatprep.subr.bf16.mxu0 0
      %423 = vmatpush1.bf16.xpose.msra.mxu0 0
      %424 = vmatprep.subr.bf16.mxu0 0
      %425 = vmatpush1.bf16.xpose.msra.mxu0 0
      %426 = vmatprep.mubr.bf16.mxu0 0
      %427 = vmatmul.mubr.bf16.gmra.mrb[0].mxu0 %v389
      %v428 = vpop.f32.mrb[0].mxu0
      %v429 = vadd.f32 0.0, %v428
      %v430 = vpop.f32.mrb[0].mxu0
      %v431 = vpop.f32.mrb[0].mxu0
      %v432 = vadd.f32 0.0, %v431
      %v433 = vpop.f32.mrb[0].mxu0
      %434 = vdwg.mxu0
      %v435 = vsel %vm125, %v429, -1e+30
      %v436 = vsel %vm126, %v432, -1e+30
      %v437 = vsel %vm139, %v435, -inf
      %438 = vmax.xlane.f32.xlu0 %v437
      %v439 = vpop.xlane.xlu0 %438
      %v440 = vsel %vm139, %v436, -inf
      %441 = vmax.xlane.f32.xlu0 %v440
      %v442 = vpop.xlane.xlu0 %441
      %v443 = vsub.f32 %v435, %v439
      %v444 = vsub.f32 %v436, %v442
      %v445 = vmul.f32 %v443, 1.442695
      %v446 = vpow.pop %v445
      %v447 = vmul.f32 %v444, 1.442695
      %v448 = vpow.pop %v447
      %v449 = vsel %vm139, %v446, 0.0
      %450 = vadd.xlane.f32.xlu0 %v449
      %v451 = vpop.xlane.xlu0 %450
      %v452 = vsel %vm139, %v448, 0.0
      %453 = vadd.xlane.f32.xlu0 %v452
      %v454 = vpop.xlane.xlu0 %453
      %v455 = vrcp.pop %v451
      %v456 = vrcp.pop %v454
      %v457 = vmul.f32 %v446, %v455
      %v458 = vmul.f32 %v448, %v456
      %v459 = vpack.c.bf16 %v458, %v457
      %460 = vrot.lane.b32.xlu0 %v214, 96
      %v461 = vpop.permute.xlu0 %460
      %v464 = vsel %vm139, %v459, 0
      %466 = vmatprep.subr.bf16.mxu0 0
      %467 = vmatpush1.bf16.msra.mxu0 %v461
      %468 = vmatprep.subr.bf16.mxu0 0
      %469 = vmatpush1.bf16.msra.mxu0 0
      %470 = vmatprep.subr.bf16.mxu0 0
      %471 = vmatpush1.bf16.msra.mxu0 0
      %472 = vmatprep.subr.bf16.mxu0 0
      %473 = vmatpush1.bf16.msra.mxu0 0
      %474 = vmatprep.subr.bf16.mxu0 0
      %475 = vmatpush1.bf16.msra.mxu0 0
      %476 = vmatprep.subr.bf16.mxu0 0
      %477 = vmatpush1.bf16.msra.mxu0 0
      %478 = vmatprep.subr.bf16.mxu0 0
      %479 = vmatpush1.bf16.msra.mxu0 0
      %480 = vmatprep.subr.bf16.mxu0 0
      %481 = vmatpush1.bf16.msra.mxu0 0
      %482 = vmatprep.subr.bf16.mxu0 0
      %483 = vmatpush1.bf16.msra.mxu0 0
      %484 = vmatprep.subr.bf16.mxu0 0
      %485 = vmatpush1.bf16.msra.mxu0 0
      %486 = vmatprep.subr.bf16.mxu0 0
      %487 = vmatpush1.bf16.msra.mxu0 0
      %488 = vmatprep.subr.bf16.mxu0 0
      %489 = vmatpush1.bf16.msra.mxu0 0
      %490 = vmatprep.subr.bf16.mxu0 0
      %491 = vmatpush1.bf16.msra.mxu0 0
      %492 = vmatprep.subr.bf16.mxu0 0
      %493 = vmatpush1.bf16.msra.mxu0 0
      %494 = vmatprep.subr.bf16.mxu0 0
      %495 = vmatpush1.bf16.msra.mxu0 0
      %496 = vmatprep.subr.bf16.mxu0 0
      %497 = vmatpush1.bf16.msra.mxu0 0
      %498 = vmatprep.mubr.bf16.mxu0 0
      %499 = vmatmul.mubr.bf16.gmra.mrb[0].mxu0 %v464
      %v500 = vpop.f32.mrb[0].mxu0
      %v501 = vadd.f32 0.0, %v500
      %v502 = vpop.f32.mrb[0].mxu0
      %v503 = vpop.f32.mrb[0].mxu0
      %v504 = vadd.f32 0.0, %v503
      %v505 = vpop.f32.mrb[0].mxu0
      %506 = vdwg.mxu0
      %507 = vrot.lane.b32.xlu0 %v131, 80
      %v508 = vpop.permute.xlu0 %507
      %509 = vrot.lane.b32.xlu0 %v136, 16
      %v510 = vpop.permute.xlu0 %509
      %v512 = vsel %vm139, %v508, 0
      %v515 = vsel %vm139, %v510, 0
      %517 = vmatprep.subr.bf16.mxu0 0
      %518 = vmatpush1.bf16.xpose.msra.mxu0 %v515
      %519 = vmatprep.subr.bf16.mxu0 0
      %520 = vmatpush1.bf16.xpose.msra.mxu0 0
      %521 = vmatprep.subr.bf16.mxu0 0
      %522 = vmatpush1.bf16.xpose.msra.mxu0 0
      %523 = vmatprep.subr.bf16.mxu0 0
      %524 = vmatpush1.bf16.xpose.msra.mxu0 0
      %525 = vmatprep.subr.bf16.mxu0 0
      %526 = vmatpush1.bf16.xpose.msra.mxu0 0
      %527 = vmatprep.subr.bf16.mxu0 0
      %528 = vmatpush1.bf16.xpose.msra.mxu0 0
      %529 = vmatprep.subr.bf16.mxu0 0
      %530 = vmatpush1.bf16.xpose.msra.mxu0 0
      %531 = vmatprep.subr.bf16.mxu0 0
      %532 = vmatpush1.bf16.xpose.msra.mxu0 0
      %533 = vmatprep.subr.bf16.mxu0 0
      %534 = vmatpush1.bf16.xpose.msra.mxu0 0
      %535 = vmatprep.subr.bf16.mxu0 0
      %536 = vmatpush1.bf16.xpose.msra.mxu0 0
      %537 = vmatprep.subr.bf16.mxu0 0
      %538 = vmatpush1.bf16.xpose.msra.mxu0 0
      %539 = vmatprep.subr.bf16.mxu0 0
      %540 = vmatpush1.bf16.xpose.msra.mxu0 0
      %541 = vmatprep.subr.bf16.mxu0 0
      %542 = vmatpush1.bf16.xpose.msra.mxu0 0
      %543 = vmatprep.subr.bf16.mxu0 0
      %544 = vmatpush1.bf16.xpose.msra.mxu0 0
      %545 = vmatprep.subr.bf16.mxu0 0
      %546 = vmatpush1.bf16.xpose.msra.mxu0 0
      %547 = vmatprep.subr.bf16.mxu0 0
      %548 = vmatpush1.bf16.xpose.msra.mxu0 0
      %549 = vmatprep.mubr.bf16.mxu0 0
      %550 = vmatmul.mubr.bf16.gmra.mrb[0].mxu0 %v512
      %v551 = vpop.f32.mrb[0].mxu0
      %v552 = vadd.f32 0.0, %v551
      %v553 = vpop.f32.mrb[0].mxu0
      %v554 = vpop.f32.mrb[0].mxu0
      %v555 = vadd.f32 0.0, %v554
      %v556 = vpop.f32.mrb[0].mxu0
      %557 = vdwg.mxu0
      %v558 = vsel %vm125, %v552, -1e+30
      %v559 = vsel %vm126, %v555, -1e+30
      %v560 = vsel %vm139, %v558, -inf
      %561 = vmax.xlane.f32.xlu0 %v560
      %v562 = vpop.xlane.xlu0 %561
      %v563 = vsel %vm139, %v559, -inf
      %564 = vmax.xlane.f32.xlu0 %v563
      %v565 = vpop.xlane.xlu0 %564
      %v566 = vsub.f32 %v558, %v562
      %v567 = vsub.f32 %v559, %v565
      %v568 = vmul.f32 %v566, 1.442695
      %v569 = vpow.pop %v568
      %v570 = vmul.f32 %v567, 1.442695
      %v571 = vpow.pop %v570
      %v572 = vsel %vm139, %v569, 0.0
      %573 = vadd.xlane.f32.xlu0 %v572
      %v574 = vpop.xlane.xlu0 %573
      %v575 = vsel %vm139, %v571, 0.0
      %576 = vadd.xlane.f32.xlu0 %v575
      %v577 = vpop.xlane.xlu0 %576
      %v578 = vrcp.pop %v574
      %v579 = vrcp.pop %v577
      %v580 = vmul.f32 %v569, %v578
      %v581 = vmul.f32 %v571, %v579
      %v582 = vpack.c.bf16 %v581, %v580
      %583 = vrot.lane.b32.xlu0 %v214, 80
      %v584 = vpop.permute.xlu0 %583
      %v587 = vsel %vm139, %v582, 0
      %589 = vmatprep.subr.bf16.mxu0 0
      %590 = vmatpush1.bf16.msra.mxu0 %v584
      %591 = vmatprep.subr.bf16.mxu0 0
      %592 = vmatpush1.bf16.msra.mxu0 0
      %593 = vmatprep.subr.bf16.mxu0 0
      %594 = vmatpush1.bf16.msra.mxu0 0
      %595 = vmatprep.subr.bf16.mxu0 0
      %596 = vmatpush1.bf16.msra.mxu0 0
      %597 = vmatprep.subr.bf16.mxu0 0
      %598 = vmatpush1.bf16.msra.mxu0 0
      %599 = vmatprep.subr.bf16.mxu0 0
      %600 = vmatpush1.bf16.msra.mxu0 0
      %601 = vmatprep.subr.bf16.mxu0 0
      %602 = vmatpush1.bf16.msra.mxu0 0
      %603 = vmatprep.subr.bf16.mxu0 0
      %604 = vmatpush1.bf16.msra.mxu0 0
      %605 = vmatprep.subr.bf16.mxu0 0
      %606 = vmatpush1.bf16.msra.mxu0 0
      %607 = vmatprep.subr.bf16.mxu0 0
      %608 = vmatpush1.bf16.msra.mxu0 0
      %609 = vmatprep.subr.bf16.mxu0 0
      %610 = vmatpush1.bf16.msra.mxu0 0
      %611 = vmatprep.subr.bf16.mxu0 0
      %612 = vmatpush1.bf16.msra.mxu0 0
      %613 = vmatprep.subr.bf16.mxu0 0
      %614 = vmatpush1.bf16.msra.mxu0 0
      %615 = vmatprep.subr.bf16.mxu0 0
      %616 = vmatpush1.bf16.msra.mxu0 0
      %617 = vmatprep.subr.bf16.mxu0 0
      %618 = vmatpush1.bf16.msra.mxu0 0
      %619 = vmatprep.subr.bf16.mxu0 0
      %620 = vmatpush1.bf16.msra.mxu0 0
      %621 = vmatprep.mubr.bf16.mxu0 0
      %622 = vmatmul.mubr.bf16.gmra.mrb[0].mxu0 %v587
      %v623 = vpop.f32.mrb[0].mxu0
      %v624 = vadd.f32 0.0, %v623
      %v625 = vpop.f32.mrb[0].mxu0
      %v626 = vpop.f32.mrb[0].mxu0
      %v627 = vadd.f32 0.0, %v626
      %v628 = vpop.f32.mrb[0].mxu0
      %629 = vdwg.mxu0
      %632 = vrot.lane.b32.xlu0 %v378, 16
      %v633 = vpop.permute.xlu0 %632
      %634 = vrot.lane.b32.xlu0 %v381, 16
      %v635 = vpop.permute.xlu0 %634
      %640 = vrot.lane.b32.xlu0 %v501, 32
      %v641 = vpop.permute.xlu0 %640
      %642 = vrot.lane.b32.xlu0 %v504, 32
      %v643 = vpop.permute.xlu0 %642
      %648 = vrot.lane.b32.xlu0 %v624, 48
      %v649 = vpop.permute.xlu0 %648
      %650 = vrot.lane.b32.xlu0 %v627, 48
      %v651 = vpop.permute.xlu0 %650
      %v654 = vsel %vm139, %v254, %v633
      %v655 = vsel %vm139, %v257, %v635
      %vm656 = vcmask 261120
      %v657 = vsel %vm656, %v654, %v641
      %v658 = vsel %vm656, %v655, %v643
      %vm659 = vcmask 392192
      %v660 = vsel %vm659, %v657, %v649
      %v661 = vsel %vm659, %v658, %v651
      %v662 = vpack.c.bf16 %v661, %v660
      %v664 = vunpack.c.l.b16 %v662
      %v665 = vunpack.c.h.b16 %v662
      %v666 = vpack.c.b16 %v664, %v664
      %v667 = vpack.c.b16 %v665, %v665
      %vm670 = vcmask 519168
      %671 = vst.msk [vmem:[%s116] sm:$0xf] %vm670, %v666
      %672 = vst.msk [vmem:[%s116 + $0x4] sm:$0xf] %vm670, %v667
      %p673 = scmp.lt.s32.totalorder %s12, 1
      %s674 = scalar_select %p673, %s12, 1
      %s675 = smul.addr %s674, 2
      %s676 = smul.addr %s675, 4
      %s677 = scalar_lea.vmem %s1, %s676
      // Predicated region
      $region25: #{_lambda_.14} parent=23 // pred_check
        %p678 = pneg %p56
      $region26: #{_lambda_.14} parent=23 // pred_check_branch
        %680 = sbr.rel (%p678) target = $region28
      $region27: #{_lambda_.14} parent=23 // pred_region
        _
      $region28: #{_lambda_.14} parent=23 // pred_fallthru
        _
    $region24: #{_lambda_.14} parent=5 // pred_fallthru
      _
    %p681 = scmp.le.s32.totalorder 2, %s7
    // Predicated region
    $region29: #{_lambda_.14} parent=5 // pred_check
      %p682 = pneg %p681
    $region30: #{_lambda_.14} parent=5 // pred_check_branch
      %684 = sbr.rel (%p682) target = $region32
    $region31: #{_lambda_.14} parent=5 // pred_region
      %s685 = ssub.s32 %s7, 2
      // Predicated region
      $region33: #{_lambda_.14} parent=31 // pred_check
        %p686 = pneg %p62
      $region34: #{_lambda_.14} parent=31 // pred_check_branch
        %688 = sbr.rel (%p686) target = $region36
      $region35: #{_lambda_.14} parent=31 // pred_region
        %p689 = scmp.lt.s32.totalorder %s13, 1
        %s690 = scalar_select %p689, %s13, 1
        %s691 = smul.addr %s690, 2
        %s692 = smul.addr %s691, 4
        %s693 = scalar_lea.vmem %s1, %s692
      $region36: #{_lambda_.14} parent=31 // pred_fallthru
        _
    $region32: #{_lambda_.14} parent=5 // pred_fallthru
      _
  $region6: #{_lambda_.14} parent=0 // loop_footer
    %s11 = sadd.s32 1, %s7
  $region7: #{_lambda_.14} parent=0 // loop_footer_branch
    %6 = sbr.rel target = $region3
  $region8: #{_lambda_.14} parent=0 // loop_exit
    _

// kernel: _lambda_.17
$region0: #{_lambda_.17}
  #allocation0 [shape = 'u32[]', space=smem, size = 0x4, offset = 0x4, fixed_abs, tag = 'smem constant byte address 0x4 - core index']
  #allocation1 [shape = 'u32[144,128]{1,0:T(1,128)}', space=vmem, size = 0x12000, scoped, tag = 'internal scratch']
  #allocation2 [shape = 'f32[32,64]{1,0:T(8,128)}', space=vmem, size = 0x4000, scoped, tag = 'scratch operand']
  %s0 = inlined_call_operand.vmem [shape: bf16[32,256], index: 0, kind: input, shape index: {}]
  %s1 = inlined_call_operand.vmem [shape: bf16[256,64], index: 1, kind: input, shape index: {}]
  %s2 = inlined_call_operand.vmem [shape: f32[1,64], index: 2, kind: input, shape index: {}]
  %s3 = inlined_call_operand.vmem [shape: bf16[32,64], index: 3, kind: input, shape index: {}]
  %s4 = inlined_call_operand.vmem [shape: bf16[32,64], index: 4, kind: output, shape index: {}]
  %s5 = sld [smem:[#allocation0]]
  $region34: #{_lambda_.17} parent=0
    _
  %s7 = ssub.s32 1, %s5
  %s8 = scalar_select 0, %s7, %s5
  // Predicated region
  $region2: #{_lambda_.17} parent=0 // pred_check
    _
  $region3: #{_lambda_.17} parent=0 // pred_check_branch
    %10 = sbr.rel (0) target = $region5
  $region4: #{_lambda_.17} parent=0 // pred_region
    _
  $region5: #{_lambda_.17} parent=0 // pred_fallthru
    _
  // Predicated region
  $region6: #{_lambda_.17} parent=0 // pred_check
    _
  $region7: #{_lambda_.17} parent=0 // pred_check_branch
    %12 = sbr.rel (0) target = $region9
  $region8: #{_lambda_.17} parent=0 // pred_region
    _
  $region9: #{_lambda_.17} parent=0 // pred_fallthru
    _
  // Predicated region
  $region10: #{_lambda_.17} parent=0 // pred_check
    _
  $region11: #{_lambda_.17} parent=0 // pred_check_branch
    %14 = sbr.rel (0) target = $region13
  $region12: #{_lambda_.17} parent=0 // pred_region
    _
  $region13: #{_lambda_.17} parent=0 // pred_fallthru
    _
  // Predicated region
  $region14: #{_lambda_.17} parent=0 // pred_check
    _
  $region15: #{_lambda_.17} parent=0 // pred_check_branch
    %16 = sbr.rel (0) target = $region17
  $region16: #{_lambda_.17} parent=0 // pred_region
    _
  $region17: #{_lambda_.17} parent=0 // pred_fallthru
    _
  %p18 = scmp.eq.s32.totalorder 0, 0
  // Predicated region
  $region18: #{_lambda_.17} parent=0 // pred_check
    %p19 = pneg %p18
  $region19: #{_lambda_.17} parent=0 // pred_check_branch
    %21 = sbr.rel (%p19) target = $region21
  $region20: #{_lambda_.17} parent=0 // pred_region
    %vm22 = vcmask 523264
    %23 = vst.msk [vmem:[#allocation2] sm:$0xff] %vm22, 0.0
    %24 = vst.msk [vmem:[#allocation2 + $0x8] sm:$0xff] %vm22, 0.0
    %25 = vst.msk [vmem:[#allocation2 + $0x10] sm:$0xff] %vm22, 0.0
    %26 = vst.msk [vmem:[#allocation2 + $0x18] sm:$0xff] %vm22, 0.0
  $region21: #{_lambda_.17} parent=0 // pred_fallthru
    _
  %v27 = vld [vmem:[#allocation2] sm:$0xff]
  %v28 = vld [vmem:[#allocation2 + $0x8] sm:$0xff]
  %v29 = vld [vmem:[#allocation2 + $0x10] sm:$0xff]
  %v30 = vld [vmem:[#allocation2 + $0x18] sm:$0xff]
  %v31 = vld [vmem:[%s0] sm:$0xff]
  %v32 = vld [vmem:[%s0 + $0x8] sm:$0xff]
  %v33 = vld [vmem:[%s0 + $0x10] sm:$0xff]
  %v34 = vld [vmem:[%s0 + $0x18] sm:$0xff]
  %v35 = vld [vmem:[%s1] sm:$0xf]
  %v36 = vld [vmem:[%s1 + $0x4] sm:$0xf]
  %v37 = vld [vmem:[%s1 + $0x8] sm:$0xf]
  %v38 = vld [vmem:[%s1 + $0xc] sm:$0xf]
  %v39 = vld [vmem:[%s1 + $0x10] sm:$0xf]
  %v40 = vld [vmem:[%s1 + $0x14] sm:$0xf]
  %v41 = vld [vmem:[%s1 + $0x18] sm:$0xf]
  %v42 = vld [vmem:[%s1 + $0x1c] sm:$0xf]
  %v43 = vld [vmem:[%s1 + $0x20] sm:$0xf]
  %v44 = vld [vmem:[%s1 + $0x24] sm:$0xf]
  %v45 = vld [vmem:[%s1 + $0x28] sm:$0xf]
  %v46 = vld [vmem:[%s1 + $0x2c] sm:$0xf]
  %v47 = vld [vmem:[%s1 + $0x30] sm:$0xf]
  %v48 = vld [vmem:[%s1 + $0x34] sm:$0xf]
  %v49 = vld [vmem:[%s1 + $0x38] sm:$0xf]
  %v50 = vld [vmem:[%s1 + $0x3c] sm:$0xf]
  %v51 = vld [vmem:[%s1 + $0x40] sm:$0xf]
  %v52 = vld [vmem:[%s1 + $0x44] sm:$0xf]
  %v53 = vld [vmem:[%s1 + $0x48] sm:$0xf]
  %v54 = vld [vmem:[%s1 + $0x4c] sm:$0xf]
  %v55 = vld [vmem:[%s1 + $0x50] sm:$0xf]
  %v56 = vld [vmem:[%s1 + $0x54] sm:$0xf]
  %v57 = vld [vmem:[%s1 + $0x58] sm:$0xf]
  %v58 = vld [vmem:[%s1 + $0x5c] sm:$0xf]
  %v59 = vld [vmem:[%s1 + $0x60] sm:$0xf]
  %v60 = vld [vmem:[%s1 + $0x64] sm:$0xf]
  %v61 = vld [vmem:[%s1 + $0x68] sm:$0xf]
  %v62 = vld [vmem:[%s1 + $0x6c] sm:$0xf]
  %v63 = vld [vmem:[%s1 + $0x70] sm:$0xf]
  %v64 = vld [vmem:[%s1 + $0x74] sm:$0xf]
  %v65 = vld [vmem:[%s1 + $0x78] sm:$0xf]
  %v66 = vld [vmem:[%s1 + $0x7c] sm:$0xf]
  %v71 = vunpack.c.l.b16 %v31
  %v72 = vunpack.c.h.b16 %v31
  %v73 = vunpack.c.l.b16 %v32
  %v74 = vunpack.c.h.b16 %v32
  %v75 = vunpack.c.l.b16 %v33
  %v76 = vunpack.c.h.b16 %v33
  %v77 = vunpack.c.l.b16 %v34
  %v78 = vunpack.c.h.b16 %v34
  %v79 = vpack.c.b16 %v73, %v71
  %v80 = vpack.c.b16 %v74, %v72
  %v81 = vpack.c.b16 %v77, %v75
  %v82 = vpack.c.b16 %v78, %v76
  %v119 = vunpack.c.l.b16 %v35
  %v120 = vunpack.c.l.b16 %v36
  %v121 = vunpack.c.l.b16 %v37
  %v122 = vunpack.c.l.b16 %v38
  %v123 = vunpack.c.l.b16 %v39
  %v124 = vunpack.c.l.b16 %v40
  %v125 = vunpack.c.l.b16 %v41
  %v126 = vunpack.c.l.b16 %v42
  %v127 = vunpack.c.l.b16 %v43
  %v128 = vunpack.c.l.b16 %v44
  %v129 = vunpack.c.l.b16 %v45
  %v130 = vunpack.c.l.b16 %v46
  %v131 = vunpack.c.l.b16 %v47
  %v132 = vunpack.c.l.b16 %v48
  %v133 = vunpack.c.l.b16 %v49
  %v134 = vunpack.c.l.b16 %v50
  %v135 = vunpack.c.l.b16 %v51
  %v136 = vunpack.c.l.b16 %v52
  %v137 = vunpack.c.l.b16 %v53
  %v138 = vunpack.c.l.b16 %v54
  %v139 = vunpack.c.l.b16 %v55
  %v140 = vunpack.c.l.b16 %v56
  %v141 = vunpack.c.l.b16 %v57
  %v142 = vunpack.c.l.b16 %v58
  %v143 = vunpack.c.l.b16 %v59
  %v144 = vunpack.c.l.b16 %v60
  %v145 = vunpack.c.l.b16 %v61
  %v146 = vunpack.c.l.b16 %v62
  %v147 = vunpack.c.l.b16 %v63
  %v148 = vunpack.c.l.b16 %v64
  %v149 = vunpack.c.l.b16 %v65
  %v150 = vunpack.c.l.b16 %v66
  %v151 = vpack.c.b16 %v120, %v119
  %v152 = vpack.c.b16 %v122, %v121
  %v153 = vpack.c.b16 %v124, %v123
  %v154 = vpack.c.b16 %v126, %v125
  %v155 = vpack.c.b16 %v128, %v127
  %v156 = vpack.c.b16 %v130, %v129
  %v157 = vpack.c.b16 %v132, %v131
  %v158 = vpack.c.b16 %v134, %v133
  %v159 = vpack.c.b16 %v136, %v135
  %v160 = vpack.c.b16 %v138, %v137
  %v161 = vpack.c.b16 %v140, %v139
  %v162 = vpack.c.b16 %v142, %v141
  %v163 = vpack.c.b16 %v144, %v143
  %v164 = vpack.c.b16 %v146, %v145
  %v165 = vpack.c.b16 %v148, %v147
  %v166 = vpack.c.b16 %v150, %v149
  %183 = vmatprep.subr.bf16.mxu0 0
  %184 = vmatpush1.bf16.msra.mxu0 %v151
  %185 = vmatprep.subr.bf16.mxu0 0
  %186 = vmatpush1.bf16.msra.mxu0 %v152
  %187 = vmatprep.subr.bf16.mxu0 0
  %188 = vmatpush1.bf16.msra.mxu0 %v153
  %189 = vmatprep.subr.bf16.mxu0 0
  %190 = vmatpush1.bf16.msra.mxu0 %v154
  %191 = vmatprep.subr.bf16.mxu0 0
  %192 = vmatpush1.bf16.msra.mxu0 %v155
  %193 = vmatprep.subr.bf16.mxu0 0
  %194 = vmatpush1.bf16.msra.mxu0 %v156
  %195 = vmatprep.subr.bf16.mxu0 0
  %196 = vmatpush1.bf16.msra.mxu0 %v157
  %197 = vmatprep.subr.bf16.mxu0 0
  %198 = vmatpush1.bf16.msra.mxu0 %v158
  %199 = vmatprep.subr.bf16.mxu0 0
  %200 = vmatpush1.bf16.msra.mxu0 %v159
  %201 = vmatprep.subr.bf16.mxu0 0
  %202 = vmatpush1.bf16.msra.mxu0 %v160
  %203 = vmatprep.subr.bf16.mxu0 0
  %204 = vmatpush1.bf16.msra.mxu0 %v161
  %205 = vmatprep.subr.bf16.mxu0 0
  %206 = vmatpush1.bf16.msra.mxu0 %v162
  %207 = vmatprep.subr.bf16.mxu0 0
  %208 = vmatpush1.bf16.msra.mxu0 %v163
  %209 = vmatprep.subr.bf16.mxu0 0
  %210 = vmatpush1.bf16.msra.mxu0 %v164
  %211 = vmatprep.subr.bf16.mxu0 0
  %212 = vmatpush1.bf16.msra.mxu0 %v165
  %213 = vmatprep.subr.bf16.mxu0 0
  %214 = vmatpush1.bf16.msra.mxu0 %v166
  %215 = vmatprep.mubr.bf16.mxu0 %v80
  %216 = vmatmul.mubr.bf16.gmra.mrb[0].mxu0 %v79
  %v217 = vpop.f32.mrb[0].mxu0
  %v218 = vadd.f32 0.0, %v217
  %v219 = vpop.f32.mrb[0].mxu0
  %v220 = vpop.f32.mrb[0].mxu0
  %v221 = vadd.f32 0.0, %v220
  %v222 = vpop.f32.mrb[0].mxu0
  %223 = vmatprep.mubr.bf16.mxu0 %v82
  %224 = vmatmul.mubr.bf16.gmra.mrb[0].mxu0 %v81
  %v225 = vpop.f32.mrb[0].mxu0
  %v226 = vadd.f32 0.0, %v225
  %v227 = vpop.f32.mrb[0].mxu0
  %v228 = vpop.f32.mrb[0].mxu0
  %v229 = vadd.f32 0.0, %v228
  %v230 = vpop.f32.mrb[0].mxu0
  %231 = vdwg.mxu0
  %v232 = vadd.f32 %v27, %v218
  %v233 = vadd.f32 %v28, %v221
  %v234 = vadd.f32 %v29, %v226
  %v235 = vadd.f32 %v30, %v229
  %vm236 = vcmask 523264
  %237 = vst.msk [vmem:[#allocation2] sm:$0xff] %vm236, %v232
  %238 = vst.msk [vmem:[#allocation2 + $0x8] sm:$0xff] %vm236, %v233
  %239 = vst.msk [vmem:[#allocation2 + $0x10] sm:$0xff] %vm236, %v234
  %240 = vst.msk [vmem:[#allocation2 + $0x18] sm:$0xff] %vm236, %v235
  // Predicated region
  $region22: #{_lambda_.17} parent=0 // pred_check
    %p241 = pneg %p18
  $region23: #{_lambda_.17} parent=0 // pred_check_branch
    %243 = sbr.rel (%p241) target = $region25
  $region24: #{_lambda_.17} parent=0 // pred_region
    %v244 = vld [vmem:[#allocation2] sm:$0xff]
    %v245 = vld [vmem:[#allocation2 + $0x8] sm:$0xff]
    %v246 = vld [vmem:[#allocation2 + $0x10] sm:$0xff]
    %v247 = vld [vmem:[#allocation2 + $0x18] sm:$0xff]
    %v248 = vld [vmem:[%s2] sm:$0x1]
    %v250 = vlaneseq
    %v251 = vshrl.u32 %v250, 7
    %v252 = vsub.s32 0, %v251
    %v253 = vrot.slane %v248, %v252
    %v255 = vadd.f32 %v244, %v253
    %v256 = vadd.f32 %v245, %v253
    %v257 = vadd.f32 %v246, %v253
    %v258 = vadd.f32 %v247, %v253
    %v259 = vld [vmem:[%s3] sm:$0xf]
    %v260 = vld [vmem:[%s3 + $0x4] sm:$0xf]
    %v261 = vld [vmem:[%s3 + $0x8] sm:$0xf]
    %v262 = vld [vmem:[%s3 + $0xc] sm:$0xf]
    %v263 = vunpack.c.l.bf16 %v259
    %v264 = vunpack.c.l.bf16 %v260
    %v265 = vunpack.c.l.bf16 %v261
    %v266 = vunpack.c.l.bf16 %v262
    %v267 = vadd.f32 %v255, %v263
    %v268 = vadd.f32 %v256, %v264
    %v269 = vadd.f32 %v257, %v265
    %v270 = vadd.f32 %v258, %v266
    %v271 = vpack.c.bf16 %v268, %v267
    %v272 = vpack.c.bf16 %v270, %v269
    %v275 = vunpack.c.l.b16 %v271
    %v276 = vunpack.c.h.b16 %v271
    %v277 = vunpack.c.l.b16 %v272
    %v278 = vunpack.c.h.b16 %v272
    %v279 = vpack.c.b16 %v275, %v275
    %v280 = vpack.c.b16 %v276, %v276
    %v281 = vpack.c.b16 %v277, %v277
    %v282 = vpack.c.b16 %v278, %v278
    %vm287 = vcmask 519168
    %288 = vst.msk [vmem:[%s4] sm:$0xf] %vm287, %v279
    %289 = vst.msk [vmem:[%s4 + $0x4] sm:$0xf] %vm287, %v280
    %290 = vst.msk [vmem:[%s4 + $0x8] sm:$0xf] %vm287, %v281
    %291 = vst.msk [vmem:[%s4 + $0xc] sm:$0xf] %vm287, %v282
  $region25: #{_lambda_.17} parent=0 // pred_fallthru
    _
  // Predicated region
  $region26: #{_lambda_.17} parent=0 // pred_check
    _
  $region27: #{_lambda_.17} parent=0 // pred_check_branch
    %293 = sbr.rel (0) target = $region29
  $region28: #{_lambda_.17} parent=0 // pred_region
    _
  $region29: #{_lambda_.17} parent=0 // pred_fallthru
    _
  // Predicated region
  $region30: #{_lambda_.17} parent=0 // pred_check
    _
  $region31: #{_lambda_.17} parent=0 // pred_check_branch
    %295 = sbr.rel (0) target = $region33
  $region32: #{_lambda_.17} parent=0 // pred_region
    _
  $region33: #{_lambda_.17} parent=0 // pred_fallthru
    _

// kernel: _lambda_.16
$region0: #{_lambda_.16}
  #allocation0 [shape = 'u32[]', space=smem, size = 0x4, offset = 0x4, fixed_abs, tag = 'smem constant byte address 0x4 - core index']
  #allocation1 [shape = 'u32[144,128]{1,0:T(1,128)}', space=vmem, size = 0x12000, scoped, tag = 'internal scratch']
  #allocation2 [shape = 'bf16[32,64]{1,0:T(16,128)(2,1)}', space=vmem, size = 0x2000, scoped, tag = 'scratch operand']
  %s0 = inlined_call_operand.vmem [shape: bf16[32,64], index: 0, kind: input, shape index: {}]
  %s1 = inlined_call_operand.vmem [shape: f32[1,64], index: 1, kind: input, shape index: {}]
  %s2 = inlined_call_operand.vmem [shape: f32[1,64], index: 2, kind: input, shape index: {}]
  %s3 = inlined_call_operand.vmem [shape: bf16[64,256], index: 3, kind: input, shape index: {}]
  %s4 = inlined_call_operand.vmem [shape: f32[1,256], index: 4, kind: input, shape index: {}]
  %s5 = inlined_call_operand.vmem [shape: bf16[32,256], index: 5, kind: output, shape index: {}]
  %s6 = sld [smem:[#allocation0]]
  $region34: #{_lambda_.16} parent=0
    _
  %s8 = ssub.s32 1, %s6
  %s9 = scalar_select 0, %s8, %s6
  // Predicated region
  $region2: #{_lambda_.16} parent=0 // pred_check
    _
  $region3: #{_lambda_.16} parent=0 // pred_check_branch
    %11 = sbr.rel (0) target = $region5
  $region4: #{_lambda_.16} parent=0 // pred_region
    _
  $region5: #{_lambda_.16} parent=0 // pred_fallthru
    _
  // Predicated region
  $region6: #{_lambda_.16} parent=0 // pred_check
    _
  $region7: #{_lambda_.16} parent=0 // pred_check_branch
    %13 = sbr.rel (0) target = $region9
  $region8: #{_lambda_.16} parent=0 // pred_region
    _
  $region9: #{_lambda_.16} parent=0 // pred_fallthru
    _
  // Predicated region
  $region10: #{_lambda_.16} parent=0 // pred_check
    _
  $region11: #{_lambda_.16} parent=0 // pred_check_branch
    %15 = sbr.rel (0) target = $region13
  $region12: #{_lambda_.16} parent=0 // pred_region
    _
  $region13: #{_lambda_.16} parent=0 // pred_fallthru
    _
  // Predicated region
  $region14: #{_lambda_.16} parent=0 // pred_check
    _
  $region15: #{_lambda_.16} parent=0 // pred_check_branch
    %17 = sbr.rel (0) target = $region17
  $region16: #{_lambda_.16} parent=0 // pred_region
    _
  $region17: #{_lambda_.16} parent=0 // pred_fallthru
    _
  // Predicated region
  $region18: #{_lambda_.16} parent=0 // pred_check
    _
  $region19: #{_lambda_.16} parent=0 // pred_check_branch
    %19 = sbr.rel (0) target = $region21
  $region20: #{_lambda_.16} parent=0 // pred_region
    _
  $region21: #{_lambda_.16} parent=0 // pred_fallthru
    _
  %p21 = scmp.eq.s32.totalorder 0, 0
  // Predicated region
  $region22: #{_lambda_.16} parent=0 // pred_check
    %p22 = pneg %p21
  $region23: #{_lambda_.16} parent=0 // pred_check_branch
    %24 = sbr.rel (%p22) target = $region25
  $region24: #{_lambda_.16} parent=0 // pred_region
    %v25 = vld [vmem:[%s0] sm:$0xf]
    %v26 = vld [vmem:[%s0 + $0x4] sm:$0xf]
    %v27 = vld [vmem:[%s0 + $0x8] sm:$0xf]
    %v28 = vld [vmem:[%s0 + $0xc] sm:$0xf]
    %v29 = vunpack.c.l.bf16 %v25
    %v30 = vunpack.c.l.bf16 %v26
    %v31 = vunpack.c.l.bf16 %v27
    %v32 = vunpack.c.l.bf16 %v28
    %vm33 = vcmask 523264
    %v34 = vsel %vm33, %v29, 0.0
    %35 = vadd.xlane.f32.xlu0 %v34
    %v36 = vpop.xlane.xlu0 %35
    %v37 = vsel %vm33, %v30, 0.0
    %38 = vadd.xlane.f32.xlu0 %v37
    %v39 = vpop.xlane.xlu0 %38
    %v40 = vsel %vm33, %v31, 0.0
    %41 = vadd.xlane.f32.xlu0 %v40
    %v42 = vpop.xlane.xlu0 %41
    %v43 = vsel %vm33, %v32, 0.0
    %44 = vadd.xlane.f32.xlu0 %v43
    %v45 = vpop.xlane.xlu0 %44
    %v46 = vrcp.pop 64.0
    %v47 = vmul.f32 %v36, %v46
    %v48 = vmul.f32 %v39, %v46
    %v49 = vmul.f32 %v42, %v46
    %v50 = vmul.f32 %v45, %v46
    %v51 = vsub.f32 %v29, %v47
    %v52 = vsub.f32 %v30, %v48
    %v53 = vsub.f32 %v31, %v49
    %v54 = vsub.f32 %v32, %v50
    %v55 = vmul.f32 %v51, %v51
    %v56 = vmul.f32 %v52, %v52
    %v57 = vmul.f32 %v53, %v53
    %v58 = vmul.f32 %v54, %v54
    %v59 = vsel %vm33, %v55, 0.0
    %60 = vadd.xlane.f32.xlu0 %v59
    %v61 = vpop.xlane.xlu0 %60
    %v62 = vsel %vm33, %v56, 0.0
    %63 = vadd.xlane.f32.xlu0 %v62
    %v64 = vpop.xlane.xlu0 %63
    %v65 = vsel %vm33, %v57, 0.0
    %66 = vadd.xlane.f32.xlu0 %v65
    %v67 = vpop.xlane.xlu0 %66
    %v68 = vsel %vm33, %v58, 0.0
    %69 = vadd.xlane.f32.xlu0 %v68
    %v70 = vpop.xlane.xlu0 %69
    %v71 = vmul.f32 %v61, %v46
    %v72 = vmul.f32 %v64, %v46
    %v73 = vmul.f32 %v67, %v46
    %v74 = vmul.f32 %v70, %v46
    %v75 = vadd.f32 %v71, 1e-05
    %v76 = vadd.f32 %v72, 1e-05
    %v77 = vadd.f32 %v73, 1e-05
    %v78 = vadd.f32 %v74, 1e-05
    %v79 = vrsqrt.pop %v75
    %v80 = vrsqrt.pop %v76
    %v81 = vrsqrt.pop %v77
    %v82 = vrsqrt.pop %v78
    %v83 = vmul.f32 %v51, %v79
    %v84 = vmul.f32 %v52, %v80
    %v85 = vmul.f32 %v53, %v81
    %v86 = vmul.f32 %v54, %v82
    %v87 = vld [vmem:[%s1] sm:$0x1]
    %v89 = vlaneseq
    %v90 = vshrl.u32 %v89, 7
    %v91 = vsub.s32 0, %v90
    %v92 = vrot.slane %v87, %v91
    %v94 = vmul.f32 %v83, %v92
    %v95 = vmul.f32 %v84, %v92
    %v96 = vmul.f32 %v85, %v92
    %v97 = vmul.f32 %v86, %v92
    %v98 = vld [vmem:[%s2] sm:$0x1]
    %v100 = vlaneseq
    %v101 = vshrl.u32 %v100, 7
    %v102 = vsub.s32 0, %v101
    %v103 = vrot.slane %v98, %v102
    %v105 = vadd.f32 %v94, %v103
    %v106 = vadd.f32 %v95, %v103
    %v107 = vadd.f32 %v96, %v103
    %v108 = vadd.f32 %v97, %v103
    %v109 = vpack.c.bf16 %v106, %v105
    %v110 = vpack.c.bf16 %v108, %v107
    %111 = vst.msk [vmem:[#allocation2] sm:$0xff] %vm33, %v109
    %112 = vst.msk [vmem:[#allocation2 + $0x8] sm:$0xff] %vm33, %v110
  $region25: #{_lambda_.16} parent=0 // pred_fallthru
    _
  %v113 = vld [vmem:[#allocation2] sm:$0xff]
  %v114 = vld [vmem:[#allocation2 + $0x8] sm:$0xff]
  %v115 = vld [vmem:[%s3] sm:$0xff]
  %v116 = vld [vmem:[%s3 + $0x8] sm:$0xff]
  %v117 = vld [vmem:[%s3 + $0x10] sm:$0xff]
  %v118 = vld [vmem:[%s3 + $0x18] sm:$0xff]
  %v119 = vld [vmem:[%s3 + $0x20] sm:$0xff]
  %v120 = vld [vmem:[%s3 + $0x28] sm:$0xff]
  %v121 = vld [vmem:[%s3 + $0x30] sm:$0xff]
  %v122 = vld [vmem:[%s3 + $0x38] sm:$0xff]
  %v123 = vld [vmem:[%s4] sm:$0x3]
  %v125 = vlaneseq
  %v126 = vshrl.u32 %v125, 7
  %v127 = vsub.s32 0, %v126
  %v128 = vrot.slane %v123, %v127
  %v129 = vlaneseq
  %v130 = vshrl.u32 %v129, 7
  %v131 = vsub.s32 1, %v130
  %v132 = vrot.slane %v123, %v131
  %v143 = vunpack.c.l.b16 %v115
  %v144 = vunpack.c.h.b16 %v115
  %v145 = vunpack.c.l.b16 %v116
  %v146 = vunpack.c.h.b16 %v116
  %v147 = vunpack.c.l.b16 %v117
  %v148 = vunpack.c.h.b16 %v117
  %v149 = vunpack.c.l.b16 %v118
  %v150 = vunpack.c.h.b16 %v118
  %v151 = vunpack.c.l.b16 %v119
  %v152 = vunpack.c.h.b16 %v119
  %v153 = vunpack.c.l.b16 %v120
  %v154 = vunpack.c.h.b16 %v120
  %v155 = vunpack.c.l.b16 %v121
  %v156 = vunpack.c.h.b16 %v121
  %v157 = vunpack.c.l.b16 %v122
  %v158 = vunpack.c.h.b16 %v122
  %v159 = vpack.c.b16 %v145, %v143
  %v160 = vpack.c.b16 %v146, %v144
  %v161 = vpack.c.b16 %v149, %v147
  %v162 = vpack.c.b16 %v150, %v148
  %v163 = vpack.c.b16 %v153, %v151
  %v164 = vpack.c.b16 %v154, %v152
  %v165 = vpack.c.b16 %v157, %v155
  %v166 = vpack.c.b16 %v158, %v156
  %vm175 = vcmask 523264
  %v177 = vsel %vm175, %v113, 0
  %v180 = vsel %vm175, %v114, 0
  %182 = vmatprep.subr.bf16.mxu0 %v160
  %183 = vmatpush1.bf16.msra.mxu0 %v159
  %184 = vmatprep.subr.bf16.mxu0 %v162
  %185 = vmatpush1.bf16.msra.mxu0 %v161
  %186 = vmatprep.subr.bf16.mxu0 %v164
  %187 = vmatpush1.bf16.msra.mxu0 %v163
  %188 = vmatprep.subr.bf16.mxu0 %v166
  %189 = vmatpush1.bf16.msra.mxu0 %v165
  %190 = vmatprep.subr.bf16.mxu0 0
  %191 = vmatpush1.bf16.msra.mxu0 0
  %192 = vmatprep.subr.bf16.mxu0 0
  %193 = vmatpush1.bf16.msra.mxu0 0
  %194 = vmatprep.subr.bf16.mxu0 0
  %195 = vmatpush1.bf16.msra.mxu0 0
  %196 = vmatprep.subr.bf16.mxu0 0
  %197 = vmatpush1.bf16.msra.mxu0 0
  %198 = vmatprep.subr.bf16.mxu0 0
  %199 = vmatpush1.bf16.msra.mxu0 0
  %200 = vmatprep.subr.bf16.mxu0 0
  %201 = vmatpush1.bf16.msra.mxu0 0
  %202 = vmatprep.subr.bf16.mxu0 0
  %203 = vmatpush1.bf16.msra.mxu0 0
  %204 = vmatprep.subr.bf16.mxu0 0
  %205 = vmatpush1.bf16.msra.mxu0 0
  %206 = vmatprep.subr.bf16.mxu0 0
  %207 = vmatpush1.bf16.msra.mxu0 0
  %208 = vmatprep.subr.bf16.mxu0 0
  %209 = vmatpush1.bf16.msra.mxu0 0
  %210 = vmatprep.subr.bf16.mxu0 0
  %211 = vmatpush1.bf16.msra.mxu0 0
  %212 = vmatprep.subr.bf16.mxu0 0
  %213 = vmatpush1.bf16.msra.mxu0 0
  %214 = vmatprep.mubr.bf16.mxu0 0
  %215 = vmatmul.mubr.bf16.gmra.mrb[0].mxu0 %v177
  %v216 = vpop.f32.mrb[0].mxu0
  %v217 = vadd.f32 %v128, %v216
  %v218 = vpop.f32.mrb[0].mxu0
  %v219 = vadd.f32 %v132, %v218
  %v220 = vpop.f32.mrb[0].mxu0
  %v221 = vadd.f32 %v128, %v220
  %v222 = vpop.f32.mrb[0].mxu0
  %v223 = vadd.f32 %v132, %v222
  %224 = vmatprep.mubr.bf16.mxu0 0
  %225 = vmatmul.mubr.bf16.gmra.mrb[0].mxu0 %v180
  %v226 = vpop.f32.mrb[0].mxu0
  %v227 = vadd.f32 %v128, %v226
  %v228 = vpop.f32.mrb[0].mxu0
  %v229 = vadd.f32 %v132, %v228
  %v230 = vpop.f32.mrb[0].mxu0
  %v231 = vadd.f32 %v128, %v230
  %v232 = vpop.f32.mrb[0].mxu0
  %v233 = vadd.f32 %v132, %v232
  %234 = vdwg.mxu0
  %v235 = vmul.f32 %v217, 0.5
  %v236 = vmul.f32 %v219, 0.5
  %v237 = vmul.f32 %v221, 0.5
  %v238 = vmul.f32 %v223, 0.5
  %v239 = vmul.f32 %v227, 0.5
  %v240 = vmul.f32 %v229, 0.5
  %v241 = vmul.f32 %v231, 0.5
  %v242 = vmul.f32 %v233, 0.5
  %v243 = vmul.f32 %v217, %v217
  %v244 = vmul.f32 %v219, %v219
  %v245 = vmul.f32 %v221, %v221
  %v246 = vmul.f32 %v223, %v223
  %v247 = vmul.f32 %v227, %v227
  %v248 = vmul.f32 %v229, %v229
  %v249 = vmul.f32 %v231, %v231
  %v250 = vmul.f32 %v233, %v233
  %v251 = vmul.f32 %v243, %v217
  %v252 = vmul.f32 %v244, %v219
  %v253 = vmul.f32 %v245, %v221
  %v254 = vmul.f32 %v246, %v223
  %v255 = vmul.f32 %v247, %v227
  %v256 = vmul.f32 %v248, %v229
  %v257 = vmul.f32 %v249, %v231
  %v258 = vmul.f32 %v250, %v233
  %v259 = vmul.f32 %v251, 0.044715
  %v260 = vmul.f32 %v252, 0.044715
  %v261 = vmul.f32 %v253, 0.044715
  %v262 = vmul.f32 %v254, 0.044715
  %v263 = vmul.f32 %v255, 0.044715
  %v264 = vmul.f32 %v256, 0.044715
  %v265 = vmul.f32 %v257, 0.044715
  %v266 = vmul.f32 %v258, 0.044715
  %v267 = vadd.f32 %v217, %v259
  %v268 = vadd.f32 %v219, %v260
  %v269 = vadd.f32 %v221, %v261
  %v270 = vadd.f32 %v223, %v262
  %v271 = vadd.f32 %v227, %v263
  %v272 = vadd.f32 %v229, %v264
  %v273 = vadd.f32 %v231, %v265
  %v274 = vadd.f32 %v233, %v266
  %v275 = vmul.f32 %v267, 0.7978846
  %v276 = vmul.f32 %v268, 0.7978846
  %v277 = vmul.f32 %v269, 0.7978846
  %v278 = vmul.f32 %v270, 0.7978846
  %v279 = vmul.f32 %v271, 0.7978846
  %v280 = vmul.f32 %v272, 0.7978846
  %v281 = vmul.f32 %v273, 0.7978846
  %v282 = vmul.f32 %v274, 0.7978846
  %v283 = vtanh.pop %v275
  %v284 = vtanh.pop %v276
  %v285 = vtanh.pop %v277
  %v286 = vtanh.pop %v278
  %v287 = vtanh.pop %v279
  %v288 = vtanh.pop %v280
  %v289 = vtanh.pop %v281
  %v290 = vtanh.pop %v282
  %v291 = vadd.f32 %v283, 1.0
  %v292 = vadd.f32 %v284, 1.0
  %v293 = vadd.f32 %v285, 1.0
  %v294 = vadd.f32 %v286, 1.0
  %v295 = vadd.f32 %v287, 1.0
  %v296 = vadd.f32 %v288, 1.0
  %v297 = vadd.f32 %v289, 1.0
  %v298 = vadd.f32 %v290, 1.0
  %v299 = vmul.f32 %v235, %v291
  %v300 = vmul.f32 %v236, %v292
  %v301 = vmul.f32 %v237, %v293
  %v302 = vmul.f32 %v238, %v294
  %v303 = vmul.f32 %v239, %v295
  %v304 = vmul.f32 %v240, %v296
  %v305 = vmul.f32 %v241, %v297
  %v306 = vmul.f32 %v242, %v298
  %v307 = vpack.c.bf16 %v301, %v299
  %v308 = vpack.c.bf16 %v302, %v300
  %v309 = vpack.c.bf16 %v305, %v303
  %v310 = vpack.c.bf16 %v306, %v304
  %v315 = vunpack.c.l.b16 %v307
  %v316 = vunpack.c.l.b16 %v308
  %v317 = vunpack.c.h.b16 %v307
  %v318 = vunpack.c.h.b16 %v308
  %v319 = vunpack.c.l.b16 %v309
  %v320 = vunpack.c.l.b16 %v310
  %v321 = vunpack.c.h.b16 %v309
  %v322 = vunpack.c.h.b16 %v310
  %v323 = vpack.c.b16 %v316, %v315
  %v324 = vpack.c.b16 %v318, %v317
  %v325 = vpack.c.b16 %v320, %v319
  %v326 = vpack.c.b16 %v322, %v321
  %331 = vst [vmem:[%s5] sm:$0xff] %v323
  %332 = vst [vmem:[%s5 + $0x8] sm:$0xff] %v324
  %333 = vst [vmem:[%s5 + $0x10] sm:$0xff] %v325
  %334 = vst [vmem:[%s5 + $0x18] sm:$0xff] %v326
  // Predicated region
  $region26: #{_lambda_.16} parent=0 // pred_check
    _
  $region27: #{_lambda_.16} parent=0 // pred_check_branch
    %336 = sbr.rel (0) target = $region29
  $region28: #{_lambda_.16} parent=0 // pred_region
    _
  $region29: #{_lambda_.16} parent=0 // pred_fallthru
    _
  // Predicated region
  $region30: #{_lambda_.16} parent=0 // pred_check
    _
  $region31: #{_lambda_.16} parent=0 // pred_check_branch
    %338 = sbr.rel (0) target = $region33
  $region32: #{_lambda_.16} parent=0 // pred_region
    _
  $region33: #{_lambda_.16} parent=0 // pred_fallthru
    _

// kernel: _lambda_.23
$region0: #{_lambda_.23}
  #allocation0 [shape = 'u32[]', space=smem, size = 0x4, offset = 0x4, fixed_abs, tag = 'smem constant byte address 0x4 - core index']
  #allocation1 [shape = 'u32[144,128]{1,0:T(1,128)}', space=vmem, size = 0x12000, scoped, tag = 'internal scratch']
  #allocation2 [shape = 'bf16[8,64]{1,0:T(8,128)(2,1)}', space=vmem, size = 0x800, scoped, tag = 'scratch operand']
  %s0 = inlined_call_operand.vmem [shape: bf16[8,64], index: 0, kind: input, shape index: {}]
  %s1 = inlined_call_operand.vmem [shape: f32[1,64], index: 1, kind: input, shape index: {}]
  %s2 = inlined_call_operand.vmem [shape: f32[1,64], index: 2, kind: input, shape index: {}]
  %s3 = inlined_call_operand.vmem [shape: bf16[64,128], index: 3, kind: input, shape index: {}]
  %s4 = inlined_call_operand.vmem [shape: f32[1,128], index: 4, kind: input, shape index: {}]
  %s5 = inlined_call_operand.vmem [shape: f32[8,128], index: 5, kind: output, shape index: {}]
  %s6 = sld [smem:[#allocation0]]
  $region34: #{_lambda_.23} parent=0
    _
  %s8 = ssub.s32 1, %s6
  %s9 = scalar_select 0, %s8, %s6
  // Predicated region
  $region2: #{_lambda_.23} parent=0 // pred_check
    _
  $region3: #{_lambda_.23} parent=0 // pred_check_branch
    %11 = sbr.rel (0) target = $region5
  $region4: #{_lambda_.23} parent=0 // pred_region
    _
  $region5: #{_lambda_.23} parent=0 // pred_fallthru
    _
  // Predicated region
  $region6: #{_lambda_.23} parent=0 // pred_check
    _
  $region7: #{_lambda_.23} parent=0 // pred_check_branch
    %13 = sbr.rel (0) target = $region9
  $region8: #{_lambda_.23} parent=0 // pred_region
    _
  $region9: #{_lambda_.23} parent=0 // pred_fallthru
    _
  // Predicated region
  $region10: #{_lambda_.23} parent=0 // pred_check
    _
  $region11: #{_lambda_.23} parent=0 // pred_check_branch
    %15 = sbr.rel (0) target = $region13
  $region12: #{_lambda_.23} parent=0 // pred_region
    _
  $region13: #{_lambda_.23} parent=0 // pred_fallthru
    _
  // Predicated region
  $region14: #{_lambda_.23} parent=0 // pred_check
    _
  $region15: #{_lambda_.23} parent=0 // pred_check_branch
    %17 = sbr.rel (0) target = $region17
  $region16: #{_lambda_.23} parent=0 // pred_region
    _
  $region17: #{_lambda_.23} parent=0 // pred_fallthru
    _
  // Predicated region
  $region18: #{_lambda_.23} parent=0 // pred_check
    _
  $region19: #{_lambda_.23} parent=0 // pred_check_branch
    %19 = sbr.rel (0) target = $region21
  $region20: #{_lambda_.23} parent=0 // pred_region
    _
  $region21: #{_lambda_.23} parent=0 // pred_fallthru
    _
  %p21 = scmp.eq.s32.totalorder 0, 0
  // Predicated region
  $region22: #{_lambda_.23} parent=0 // pred_check
    %p22 = pneg %p21
  $region23: #{_lambda_.23} parent=0 // pred_check_branch
    %24 = sbr.rel (%p22) target = $region25
  $region24: #{_lambda_.23} parent=0 // pred_region
    %v25 = vld [vmem:[%s0] sm:$0xf]
    %v26 = vunpack.c.l.bf16 %v25
    %vm27 = vcmask 523264
    %v28 = vsel %vm27, %v26, 0.0
    %29 = vadd.xlane.f32.xlu0 %v28
    %v30 = vpop.xlane.xlu0 %29
    %v31 = vrcp.pop 64.0
    %v32 = vmul.f32 %v30, %v31
    %v33 = vsub.f32 %v26, %v32
    %v34 = vmul.f32 %v33, %v33
    %v35 = vsel %vm27, %v34, 0.0
    %36 = vadd.xlane.f32.xlu0 %v35
    %v37 = vpop.xlane.xlu0 %36
    %v38 = vmul.f32 %v37, %v31
    %v39 = vadd.f32 %v38, 1e-05
    %v40 = vrsqrt.pop %v39
    %v41 = vmul.f32 %v33, %v40
    %v42 = vld [vmem:[%s1] sm:$0x1]
    %v44 = vlaneseq
    %v45 = vshrl.u32 %v44, 7
    %v46 = vsub.s32 0, %v45
    %v47 = vrot.slane %v42, %v46
    %v49 = vmul.f32 %v41, %v47
    %v50 = vld [vmem:[%s2] sm:$0x1]
    %v52 = vlaneseq
    %v53 = vshrl.u32 %v52, 7
    %v54 = vsub.s32 0, %v53
    %v55 = vrot.slane %v50, %v54
    %v57 = vadd.f32 %v49, %v55
    %v58 = vpack.c.bf16 %v57, %v57
    %vm59 = vcmask 519168
    %60 = vst.msk [vmem:[#allocation2] sm:$0xf] %vm59, %v58
  $region25: #{_lambda_.23} parent=0 // pred_fallthru
    _
  %v61 = vld [vmem:[#allocation2] sm:$0xf]
  %v62 = vld [vmem:[%s3] sm:$0xf]
  %v63 = vld [vmem:[%s3 + $0x4] sm:$0xf]
  %v64 = vld [vmem:[%s3 + $0x8] sm:$0xf]
  %v65 = vld [vmem:[%s3 + $0xc] sm:$0xf]
  %v66 = vld [vmem:[%s3 + $0x10] sm:$0xf]
  %v67 = vld [vmem:[%s3 + $0x14] sm:$0xf]
  %v68 = vld [vmem:[%s3 + $0x18] sm:$0xf]
  %v69 = vld [vmem:[%s3 + $0x1c] sm:$0xf]
  %v70 = vld [vmem:[%s4] sm:$0x1]
  %v72 = vlaneseq
  %v73 = vshrl.u32 %v72, 7
  %v74 = vsub.s32 0, %v73
  %v75 = vrot.slane %v70, %v74
  %v85 = vunpack.c.l.b16 %v62
  %v86 = vunpack.c.l.b16 %v63
  %v87 = vunpack.c.l.b16 %v64
  %v88 = vunpack.c.l.b16 %v65
  %v89 = vunpack.c.l.b16 %v66
  %v90 = vunpack.c.l.b16 %v67
  %v91 = vunpack.c.l.b16 %v68
  %v92 = vunpack.c.l.b16 %v69
  %v93 = vpack.c.b16 %v86, %v85
  %v94 = vpack.c.b16 %v88, %v87
  %v95 = vpack.c.b16 %v90, %v89
  %v96 = vpack.c.b16 %v92, %v91
  %vm101 = vcmask 523264
  %v103 = vsel %vm101, %v61, 0
  %105 = vmatprep.subr.bf16.mxu0 0
  %106 = vmatpush1.bf16.msra.mxu0 %v93
  %107 = vmatprep.subr.bf16.mxu0 0
  %108 = vmatpush1.bf16.msra.mxu0 %v94
  %109 = vmatprep.subr.bf16.mxu0 0
  %110 = vmatpush1.bf16.msra.mxu0 %v95
  %111 = vmatprep.subr.bf16.mxu0 0
  %112 = vmatpush1.bf16.msra.mxu0 %v96
  %113 = vmatprep.subr.bf16.mxu0 0
  %114 = vmatpush1.bf16.msra.mxu0 0
  %115 = vmatprep.subr.bf16.mxu0 0
  %116 = vmatpush1.bf16.msra.mxu0 0
  %117 = vmatprep.subr.bf16.mxu0 0
  %118 = vmatpush1.bf16.msra.mxu0 0
  %119 = vmatprep.subr.bf16.mxu0 0
  %120 = vmatpush1.bf16.msra.mxu0 0
  %121 = vmatprep.subr.bf16.mxu0 0
  %122 = vmatpush1.bf16.msra.mxu0 0
  %123 = vmatprep.subr.bf16.mxu0 0
  %124 = vmatpush1.bf16.msra.mxu0 0
  %125 = vmatprep.subr.bf16.mxu0 0
  %126 = vmatpush1.bf16.msra.mxu0 0
  %127 = vmatprep.subr.bf16.mxu0 0
  %128 = vmatpush1.bf16.msra.mxu0 0
  %129 = vmatprep.subr.bf16.mxu0 0
  %130 = vmatpush1.bf16.msra.mxu0 0
  %131 = vmatprep.subr.bf16.mxu0 0
  %132 = vmatpush1.bf16.msra.mxu0 0
  %133 = vmatprep.subr.bf16.mxu0 0
  %134 = vmatpush1.bf16.msra.mxu0 0
  %135 = vmatprep.subr.bf16.mxu0 0
  %136 = vmatpush1.bf16.msra.mxu0 0
  %137 = vmatprep.mubr.bf16.mxu0 0
  %138 = vmatmul.mubr.bf16.gmra.mrb[0].mxu0 %v103
  %v139 = vpop.f32.mrb[0].mxu0
  %v140 = vadd.f32 %v75, %v139
  %v141 = vpop.f32.mrb[0].mxu0
  %v142 = vpop.f32.mrb[0].mxu0
  %v143 = vpop.f32.mrb[0].mxu0
  %144 = vdwg.mxu0
  %145 = vst [vmem:[%s5] sm:$0xff] %v140
  // Predicated region
  $region26: #{_lambda_.23} parent=0 // pred_check
    _
  $region27: #{_lambda_.23} parent=0 // pred_check_branch
    %147 = sbr.rel (0) target = $region29
  $region28: #{_lambda_.23} parent=0 // pred_region
    _
  $region29: #{_lambda_.23} parent=0 // pred_fallthru
    _
  // Predicated region
  $region30: #{_lambda_.23} parent=0 // pred_check
    _
  $region31: #{_lambda_.23} parent=0 // pred_check_branch
    %149 = sbr.rel (0) target = $region33
  $region32: #{_lambda_.23} parent=0 // pred_region
    _
  $region33: #{_lambda_.23} parent=0 // pred_fallthru
    _

</llo_original>
